<compile_context>
chip_gen: v7x
topology: tpu7x:2x2x1
jax: 0.10.0
libtpu: 0.0.40
codegen_flags: <defaults>
</compile_context>

<pallas_src>
import jax
import jax.numpy as jnp
from jax.experimental import pallas as pl
from jax.experimental.pallas import tpu as pltpu

B = 2            # batch
L = 1000         # flattened input length per sample
C = 64           # conv out channels
K = 3            # conv kernel size
T = 499          # pooled time length (998 conv positions / pool 2)
NF = 2 * T - 1   # full-resolution positions needed in-kernel (i = 0..996)
NCLS = 3         # fc output features
CC = 8           # channel chunk size (per-chunk tiles stay ~16 vregs)

assert C % CC == 0


def cnn_kernel(x_ref, wconv_ref, bconv_ref, wfc_ref, bfc_ref, out_ref):
    # x:     (B, L)        f32   raw input, no wrapper prep
    # wconv: (C, K)        f32
    # bconv: (1, C, 1)     f32
    # wfc:   (NCLS, C, NF) bf16  wfc_il[j,c,2t] = wfc[j,c,t], odd positions = 0
    # bfc:   (1, NCLS)     f32
    x = x_ref[...]                                           # (B, L)
    wc = wconv_ref[...]                                      # (C, K)
    ball = bconv_ref[...]                                    # (1, C, 1)

    # Shifted views of x: s[k][b, 0, i] = x[b, i + k] for i in [0, NF).
    # conv at position i   = w0*s0 + w1*s1 + w2*s2
    # conv at position i+1 = w0*s1 + w1*s2 + w2*s3
    s = [x[:, k:k + NF][:, None, :] for k in range(K + 1)]   # each (B, 1, NF)

    acc = [jnp.zeros((B, 1), jnp.float32) for _ in range(NCLS)]

    for c0 in range(0, C, CC):                               # unrolled, 8 chunks
        wck = wc[c0:c0 + CC, :]                              # (CC, K)
        w = [wck[:, k:k + 1][None, :, :] for k in range(K)]  # each (1, CC, 1)
        bias = ball[:, c0:c0 + CC, :]                        # (1, CC, 1)

        # Conv taps start from the k=0 product (no zeros-init pass).
        conv_a = w[0] * s[0] + w[1] * s[1] + w[2] * s[2]     # (B, CC, NF)  conv @ i
        conv_b = w[0] * s[1] + w[1] * s[2] + w[2] * s[3]     # (B, CC, NF)  conv @ i+1

        # MaxPool(2) + bias + ReLU collapsed (max/relu/+bias commute suitably).
        pooled = jnp.maximum(jnp.maximum(conv_a, conv_b) + bias, 0.0)  # (B, CC, NF)

        # FC: per-class multiply + reduce on this chunk only; odd positions of
        # wfc are zero, so only the true pooled outputs (even i = 2t) contribute.
        for j in range(NCLS):
            wj = wfc_ref[j, c0:c0 + CC, :].astype(jnp.float32)          # (CC, NF)
            part = jnp.sum(pooled * wj[None, :, :], axis=-1)            # (B, CC)
            acc[j] = acc[j] + jnp.sum(part, axis=-1, keepdims=True)     # (B, 1)

    out_ref[...] = jnp.concatenate(acc, axis=1) + bfc_ref[...]          # (B, NCLS)


def prepare_params(wconv, bconv, wfc, bfc):
    """One-time weight preprocessing (reshape, zero-interleave FC weights, bf16)."""
    wconv2 = wconv.reshape(C, K)                             # (64, 1, 3) -> (64, 3)
    bconv3 = bconv.reshape(1, C, 1)
    wfc_r = wfc.reshape(NCLS, C, T)                          # (3, 64*499) -> (3, 64, 499)
    # Interleave zeros: wfc_il[j, c, 2t] = wfc[j, c, t]; odd positions 0.
    wfc_il = jnp.zeros((NCLS, C, T, 2), jnp.float32).at[..., 0].set(wfc_r)
    wfc_il = wfc_il.reshape(NCLS, C, 2 * T)[:, :, :NF]       # (3, 64, 997)
    wfc_il = wfc_il.astype(jnp.bfloat16)                     # halve HBM bytes
    bfc2 = bfc.reshape(1, NCLS)
    return wconv2, bconv3, wfc_il, bfc2


def simple_cnn_forward(x, wconv2, bconv3, wfc_il, bfc2):
    """x: (B, L) float32. Returns (B, NCLS) float32."""
    xf = x.reshape(B, L)                                     # torch .view; no data movement

    return pl.pallas_call(
        cnn_kernel,
        out_shape=jax.ShapeDtypeStruct((B, NCLS), jnp.float32),
        grid=(1,),
        in_specs=[
            pl.BlockSpec((B, L), lambda i: (0, 0)),
            pl.BlockSpec((C, K), lambda i: (0, 0)),
            pl.BlockSpec((1, C, 1), lambda i: (0, 0, 0)),
            pl.BlockSpec((NCLS, C, NF), lambda i: (0, 0, 0)),
            pl.BlockSpec((1, NCLS), lambda i: (0, 0)),
        ],
        out_specs=pl.BlockSpec((B, NCLS), lambda i: (0, 0)),
        compiler_params=pltpu.CompilerParams(
            dimension_semantics=("arbitrary",)),
    )(xf, wconv2, bconv3, wfc_il, bfc2)


def reference_forward(x, wconv, bconv, wfc, bfc):
    """Pure-JAX reference matching PyTorch semantics exactly (f32 weights)."""
    xf = x.reshape(B, 1, -1)[:, 0, :]                        # (B, L)
    Lc = L - K + 1                                           # 998
    wc = wconv.reshape(C, K)
    conv = jnp.zeros((B, C, Lc), jnp.float32)
    for k in range(K):
        conv = conv + wc[:, k][None, :, None] * xf[:, None, k:k + Lc]
    conv = conv + bconv[None, :, None]
    conv = jnp.maximum(conv, 0.0)                            # ReLU
    pooled = jnp.maximum(conv[:, :, 0::2], conv[:, :, 1::2])  # MaxPool1d(2) -> (B,C,T)
    flat = pooled.reshape(B, C * T)                          # torch .view(B, -1)
    return flat @ wfc.T + bfc[None, :]


if __name__ == "__main__":
    key = jax.random.PRNGKey(0)
    k1, k2, k3, k4, k5 = jax.random.split(key, 5)

    # Deterministic PyTorch-style uniform init (bound = 1/sqrt(fan_in)).
    bc = 1.0 / jnp.sqrt(1.0 * K)
    wconv = jax.random.uniform(k1, (C, 1, K), jnp.float32, -bc, bc)
    bconv = jax.random.uniform(k2, (C,), jnp.float32, -bc, bc)
    bf = 1.0 / jnp.sqrt(float(C * T))
    wfc = jax.random.uniform(k3, (NCLS, C * T), jnp.float32, -bf, bf)
    bfc = jax.random.uniform(k4, (NCLS,), jnp.float32, -bf, bf)

    x = jax.random.normal(k5, (B, L), jnp.float32)

    params = prepare_params(wconv, bconv, wfc, bfc)
    fwd = jax.jit(simple_cnn_forward)
    out = jax.block_until_ready(fwd(x, *params))

    ref = reference_forward(x, wconv, bconv, wfc, bfc)
    # Slightly relaxed rtol to cover bf16 FC weights (f32 accumulation).
    if not jnp.allclose(out, ref, rtol=2e-3, atol=2e-3):
        raise AssertionError(f"mismatch: pallas={out} ref={ref}")

    print("KERNEL_OK")
</pallas_src>

<mosaic_0001>
module attributes {stable_mosaic.version = 11 : i64} {
  func.func @cnn_kernel(%arg0: i32, %arg1: memref<2x1000xf32, #tpu.memory_space<vmem>>, %arg2: memref<64x3xf32, #tpu.memory_space<vmem>>, %arg3: memref<1x64x1xf32, #tpu.memory_space<vmem>>, %arg4: memref<3x64x997xbf16, #tpu.memory_space<vmem>>, %arg5: memref<1x3xf32, #tpu.memory_space<vmem>>, %arg6: memref<2x3xf32, #tpu.memory_space<vmem>>) attributes {dimension_semantics = [#tpu.dimension_semantics<arbitrary>], iteration_bounds = array<i64: 1>, scalar_prefetch = 0 : i64, scratch_operands = 0 : i64, tpu.core_type = #tpu.core_type<tc>, window_params = [{pipeline_mode = #tpu.pipeline_mode<synchronous>, transform_indices = @transform_0, window_bounds = array<i64: 2, 1000>}, {pipeline_mode = #tpu.pipeline_mode<synchronous>, transform_indices = @transform_1, window_bounds = array<i64: 64, 3>}, {pipeline_mode = #tpu.pipeline_mode<synchronous>, transform_indices = @transform_2, window_bounds = array<i64: 1, 64, 1>}, {pipeline_mode = #tpu.pipeline_mode<synchronous>, transform_indices = @transform_3, window_bounds = array<i64: 3, 64, 997>}, {pipeline_mode = #tpu.pipeline_mode<synchronous>, transform_indices = @transform_4, window_bounds = array<i64: 1, 3>}, {pipeline_mode = #tpu.pipeline_mode<synchronous>, transform_indices = @transform_5, window_bounds = array<i64: 2, 3>}]} {
    %c0 = arith.constant 0 : index
    %c0_0 = arith.constant 0 : index
    %0 = vector.load %arg1[%c0, %c0_0] : memref<2x1000xf32, #tpu.memory_space<vmem>>, vector<2x1000xf32>
    %c0_1 = arith.constant 0 : index
    %c0_2 = arith.constant 0 : index
    %1 = vector.load %arg2[%c0_1, %c0_2] : memref<64x3xf32, #tpu.memory_space<vmem>>, vector<64x3xf32>
    %c0_3 = arith.constant 0 : index
    %c0_4 = arith.constant 0 : index
    %c0_5 = arith.constant 0 : index
    %2 = vector.load %arg3[%c0_3, %c0_4, %c0_5] : memref<1x64x1xf32, #tpu.memory_space<vmem>>, vector<1x64x1xf32>
    %3 = vector.extract_strided_slice %0 {offsets = [0, 0], sizes = [2, 997], strides = [1, 1]} : vector<2x1000xf32> to vector<2x997xf32>
    %4 = vector.shape_cast %3 : vector<2x997xf32> to vector<2x1x997xf32>
    %5 = vector.extract_strided_slice %0 {offsets = [0, 1], sizes = [2, 997], strides = [1, 1]} : vector<2x1000xf32> to vector<2x997xf32>
    %6 = vector.shape_cast %5 : vector<2x997xf32> to vector<2x1x997xf32>
    %7 = vector.extract_strided_slice %0 {offsets = [0, 2], sizes = [2, 997], strides = [1, 1]} : vector<2x1000xf32> to vector<2x997xf32>
    %8 = vector.shape_cast %7 : vector<2x997xf32> to vector<2x1x997xf32>
    %9 = vector.extract_strided_slice %0 {offsets = [0, 3], sizes = [2, 997], strides = [1, 1]} : vector<2x1000xf32> to vector<2x997xf32>
    %10 = vector.shape_cast %9 : vector<2x997xf32> to vector<2x1x997xf32>
    %cst = arith.constant 0.000000e+00 : f32
    %11 = vector.broadcast %cst : f32 to vector<2x1xf32>
    %cst_6 = arith.constant 0.000000e+00 : f32
    %12 = vector.broadcast %cst_6 : f32 to vector<2x1xf32>
    %cst_7 = arith.constant 0.000000e+00 : f32
    %13 = vector.broadcast %cst_7 : f32 to vector<2x1xf32>
    %14 = vector.extract_strided_slice %1 {offsets = [0, 0], sizes = [8, 3], strides = [1, 1]} : vector<64x3xf32> to vector<8x3xf32>
    %15 = vector.extract_strided_slice %14 {offsets = [0, 0], sizes = [8, 1], strides = [1, 1]} : vector<8x3xf32> to vector<8x1xf32>
    %16 = vector.shape_cast %15 : vector<8x1xf32> to vector<1x8x1xf32>
    %17 = vector.extract_strided_slice %14 {offsets = [0, 1], sizes = [8, 1], strides = [1, 1]} : vector<8x3xf32> to vector<8x1xf32>
    %18 = vector.shape_cast %17 : vector<8x1xf32> to vector<1x8x1xf32>
    %19 = vector.extract_strided_slice %14 {offsets = [0, 2], sizes = [8, 1], strides = [1, 1]} : vector<8x3xf32> to vector<8x1xf32>
    %20 = vector.shape_cast %19 : vector<8x1xf32> to vector<1x8x1xf32>
    %21 = vector.extract_strided_slice %2 {offsets = [0, 0, 0], sizes = [1, 8, 1], strides = [1, 1, 1]} : vector<1x64x1xf32> to vector<1x8x1xf32>
    %22 = vector.broadcast %16 : vector<1x8x1xf32> to vector<2x8x997xf32>
    %23 = vector.broadcast %4 : vector<2x1x997xf32> to vector<2x8x997xf32>
    %24 = arith.mulf %22, %23 : vector<2x8x997xf32>
    %25 = vector.broadcast %18 : vector<1x8x1xf32> to vector<2x8x997xf32>
    %26 = vector.broadcast %6 : vector<2x1x997xf32> to vector<2x8x997xf32>
    %27 = arith.mulf %25, %26 : vector<2x8x997xf32>
    %28 = arith.addf %24, %27 : vector<2x8x997xf32>
    %29 = vector.broadcast %20 : vector<1x8x1xf32> to vector<2x8x997xf32>
    %30 = vector.broadcast %8 : vector<2x1x997xf32> to vector<2x8x997xf32>
    %31 = arith.mulf %29, %30 : vector<2x8x997xf32>
    %32 = arith.addf %28, %31 : vector<2x8x997xf32>
    %33 = vector.broadcast %16 : vector<1x8x1xf32> to vector<2x8x997xf32>
    %34 = vector.broadcast %6 : vector<2x1x997xf32> to vector<2x8x997xf32>
    %35 = arith.mulf %33, %34 : vector<2x8x997xf32>
    %36 = vector.broadcast %18 : vector<1x8x1xf32> to vector<2x8x997xf32>
    %37 = vector.broadcast %8 : vector<2x1x997xf32> to vector<2x8x997xf32>
    %38 = arith.mulf %36, %37 : vector<2x8x997xf32>
    %39 = arith.addf %35, %38 : vector<2x8x997xf32>
    %40 = vector.broadcast %20 : vector<1x8x1xf32> to vector<2x8x997xf32>
    %41 = vector.broadcast %10 : vector<2x1x997xf32> to vector<2x8x997xf32>
    %42 = arith.mulf %40, %41 : vector<2x8x997xf32>
    %43 = arith.addf %39, %42 : vector<2x8x997xf32>
    %44 = arith.maximumf %32, %43 : vector<2x8x997xf32>
    %45 = vector.broadcast %21 : vector<1x8x1xf32> to vector<2x8x997xf32>
    %46 = arith.addf %44, %45 : vector<2x8x997xf32>
    %cst_8 = arith.constant 0.000000e+00 : f32
    %47 = vector.broadcast %cst_8 : f32 to vector<2x8x997xf32>
    %48 = arith.maximumf %46, %47 : vector<2x8x997xf32>
    %c0_9 = arith.constant 0 : index
    %c0_10 = arith.constant 0 : index
    %c0_11 = arith.constant 0 : index
    %49 = vector.load %arg4[%c0_9, %c0_10, %c0_11] : memref<3x64x997xbf16, #tpu.memory_space<vmem>>, vector<1x8x997xbf16>
    %50 = vector.shape_cast %49 : vector<1x8x997xbf16> to vector<8x997xbf16>
    %51 = arith.extf %50 : vector<8x997xbf16> to vector<8x997xf32>
    %52 = vector.shape_cast %51 : vector<8x997xf32> to vector<1x8x997xf32>
    %53 = vector.broadcast %52 : vector<1x8x997xf32> to vector<2x8x997xf32>
    %54 = arith.mulf %48, %53 : vector<2x8x997xf32>
    %cst_12 = arith.constant dense<0.000000e+00> : vector<2x8xf32>
    %55 = vector.multi_reduction <add>, %54, %cst_12 [2] : vector<2x8x997xf32> to vector<2x8xf32>
    %cst_13 = arith.constant dense<0.000000e+00> : vector<2xf32>
    %56 = vector.multi_reduction <add>, %55, %cst_13 [1] : vector<2x8xf32> to vector<2xf32>
    %57 = vector.shape_cast %56 : vector<2xf32> to vector<2x1xf32>
    %58 = arith.addf %11, %57 : vector<2x1xf32>
    %c1 = arith.constant 1 : index
    %c0_14 = arith.constant 0 : index
    %c0_15 = arith.constant 0 : index
    %59 = vector.load %arg4[%c1, %c0_14, %c0_15] : memref<3x64x997xbf16, #tpu.memory_space<vmem>>, vector<1x8x997xbf16>
    %60 = vector.shape_cast %59 : vector<1x8x997xbf16> to vector<8x997xbf16>
    %61 = arith.extf %60 : vector<8x997xbf16> to vector<8x997xf32>
    %62 = vector.shape_cast %61 : vector<8x997xf32> to vector<1x8x997xf32>
    %63 = vector.broadcast %62 : vector<1x8x997xf32> to vector<2x8x997xf32>
    %64 = arith.mulf %48, %63 : vector<2x8x997xf32>
    %cst_16 = arith.constant dense<0.000000e+00> : vector<2x8xf32>
    %65 = vector.multi_reduction <add>, %64, %cst_16 [2] : vector<2x8x997xf32> to vector<2x8xf32>
    %cst_17 = arith.constant dense<0.000000e+00> : vector<2xf32>
    %66 = vector.multi_reduction <add>, %65, %cst_17 [1] : vector<2x8xf32> to vector<2xf32>
    %67 = vector.shape_cast %66 : vector<2xf32> to vector<2x1xf32>
    %68 = arith.addf %12, %67 : vector<2x1xf32>
    %c2 = arith.constant 2 : index
    %c0_18 = arith.constant 0 : index
    %c0_19 = arith.constant 0 : index
    %69 = vector.load %arg4[%c2, %c0_18, %c0_19] : memref<3x64x997xbf16, #tpu.memory_space<vmem>>, vector<1x8x997xbf16>
    %70 = vector.shape_cast %69 : vector<1x8x997xbf16> to vector<8x997xbf16>
    %71 = arith.extf %70 : vector<8x997xbf16> to vector<8x997xf32>
    %72 = vector.shape_cast %71 : vector<8x997xf32> to vector<1x8x997xf32>
    %73 = vector.broadcast %72 : vector<1x8x997xf32> to vector<2x8x997xf32>
    %74 = arith.mulf %48, %73 : vector<2x8x997xf32>
    %cst_20 = arith.constant dense<0.000000e+00> : vector<2x8xf32>
    %75 = vector.multi_reduction <add>, %74, %cst_20 [2] : vector<2x8x997xf32> to vector<2x8xf32>
    %cst_21 = arith.constant dense<0.000000e+00> : vector<2xf32>
    %76 = vector.multi_reduction <add>, %75, %cst_21 [1] : vector<2x8xf32> to vector<2xf32>
    %77 = vector.shape_cast %76 : vector<2xf32> to vector<2x1xf32>
    %78 = arith.addf %13, %77 : vector<2x1xf32>
    %79 = vector.extract_strided_slice %1 {offsets = [8, 0], sizes = [8, 3], strides = [1, 1]} : vector<64x3xf32> to vector<8x3xf32>
    %80 = vector.extract_strided_slice %79 {offsets = [0, 0], sizes = [8, 1], strides = [1, 1]} : vector<8x3xf32> to vector<8x1xf32>
    %81 = vector.shape_cast %80 : vector<8x1xf32> to vector<1x8x1xf32>
    %82 = vector.extract_strided_slice %79 {offsets = [0, 1], sizes = [8, 1], strides = [1, 1]} : vector<8x3xf32> to vector<8x1xf32>
    %83 = vector.shape_cast %82 : vector<8x1xf32> to vector<1x8x1xf32>
    %84 = vector.extract_strided_slice %79 {offsets = [0, 2], sizes = [8, 1], strides = [1, 1]} : vector<8x3xf32> to vector<8x1xf32>
    %85 = vector.shape_cast %84 : vector<8x1xf32> to vector<1x8x1xf32>
    %86 = vector.extract_strided_slice %2 {offsets = [0, 8, 0], sizes = [1, 8, 1], strides = [1, 1, 1]} : vector<1x64x1xf32> to vector<1x8x1xf32>
    %87 = vector.broadcast %81 : vector<1x8x1xf32> to vector<2x8x997xf32>
    %88 = vector.broadcast %4 : vector<2x1x997xf32> to vector<2x8x997xf32>
    %89 = arith.mulf %87, %88 : vector<2x8x997xf32>
    %90 = vector.broadcast %83 : vector<1x8x1xf32> to vector<2x8x997xf32>
    %91 = vector.broadcast %6 : vector<2x1x997xf32> to vector<2x8x997xf32>
    %92 = arith.mulf %90, %91 : vector<2x8x997xf32>
    %93 = arith.addf %89, %92 : vector<2x8x997xf32>
    %94 = vector.broadcast %85 : vector<1x8x1xf32> to vector<2x8x997xf32>
    %95 = vector.broadcast %8 : vector<2x1x997xf32> to vector<2x8x997xf32>
    %96 = arith.mulf %94, %95 : vector<2x8x997xf32>
    %97 = arith.addf %93, %96 : vector<2x8x997xf32>
    %98 = vector.broadcast %81 : vector<1x8x1xf32> to vector<2x8x997xf32>
    %99 = vector.broadcast %6 : vector<2x1x997xf32> to vector<2x8x997xf32>
    %100 = arith.mulf %98, %99 : vector<2x8x997xf32>
    %101 = vector.broadcast %83 : vector<1x8x1xf32> to vector<2x8x997xf32>
    %102 = vector.broadcast %8 : vector<2x1x997xf32> to vector<2x8x997xf32>
    %103 = arith.mulf %101, %102 : vector<2x8x997xf32>
    %104 = arith.addf %100, %103 : vector<2x8x997xf32>
    %105 = vector.broadcast %85 : vector<1x8x1xf32> to vector<2x8x997xf32>
    %106 = vector.broadcast %10 : vector<2x1x997xf32> to vector<2x8x997xf32>
    %107 = arith.mulf %105, %106 : vector<2x8x997xf32>
    %108 = arith.addf %104, %107 : vector<2x8x997xf32>
    %109 = arith.maximumf %97, %108 : vector<2x8x997xf32>
    %110 = vector.broadcast %86 : vector<1x8x1xf32> to vector<2x8x997xf32>
    %111 = arith.addf %109, %110 : vector<2x8x997xf32>
    %cst_22 = arith.constant 0.000000e+00 : f32
    %112 = vector.broadcast %cst_22 : f32 to vector<2x8x997xf32>
    %113 = arith.maximumf %111, %112 : vector<2x8x997xf32>
    %c0_23 = arith.constant 0 : index
    %c8 = arith.constant 8 : index
    %c0_24 = arith.constant 0 : index
    %114 = vector.load %arg4[%c0_23, %c8, %c0_24] : memref<3x64x997xbf16, #tpu.memory_space<vmem>>, vector<1x8x997xbf16>
    %115 = vector.shape_cast %114 : vector<1x8x997xbf16> to vector<8x997xbf16>
    %116 = arith.extf %115 : vector<8x997xbf16> to vector<8x997xf32>
    %117 = vector.shape_cast %116 : vector<8x997xf32> to vector<1x8x997xf32>
    %118 = vector.broadcast %117 : vector<1x8x997xf32> to vector<2x8x997xf32>
    %119 = arith.mulf %113, %118 : vector<2x8x997xf32>
    %cst_25 = arith.constant dense<0.000000e+00> : vector<2x8xf32>
    %120 = vector.multi_reduction <add>, %119, %cst_25 [2] : vector<2x8x997xf32> to vector<2x8xf32>
    %cst_26 = arith.constant dense<0.000000e+00> : vector<2xf32>
    %121 = vector.multi_reduction <add>, %120, %cst_26 [1] : vector<2x8xf32> to vector<2xf32>
    %122 = vector.shape_cast %121 : vector<2xf32> to vector<2x1xf32>
    %123 = arith.addf %58, %122 : vector<2x1xf32>
    %c1_27 = arith.constant 1 : index
    %c8_28 = arith.constant 8 : index
    %c0_29 = arith.constant 0 : index
    %124 = vector.load %arg4[%c1_27, %c8_28, %c0_29] : memref<3x64x997xbf16, #tpu.memory_space<vmem>>, vector<1x8x997xbf16>
    %125 = vector.shape_cast %124 : vector<1x8x997xbf16> to vector<8x997xbf16>
    %126 = arith.extf %125 : vector<8x997xbf16> to vector<8x997xf32>
    %127 = vector.shape_cast %126 : vector<8x997xf32> to vector<1x8x997xf32>
    %128 = vector.broadcast %127 : vector<1x8x997xf32> to vector<2x8x997xf32>
    %129 = arith.mulf %113, %128 : vector<2x8x997xf32>
    %cst_30 = arith.constant dense<0.000000e+00> : vector<2x8xf32>
    %130 = vector.multi_reduction <add>, %129, %cst_30 [2] : vector<2x8x997xf32> to vector<2x8xf32>
    %cst_31 = arith.constant dense<0.000000e+00> : vector<2xf32>
    %131 = vector.multi_reduction <add>, %130, %cst_31 [1] : vector<2x8xf32> to vector<2xf32>
    %132 = vector.shape_cast %131 : vector<2xf32> to vector<2x1xf32>
    %133 = arith.addf %68, %132 : vector<2x1xf32>
    %c2_32 = arith.constant 2 : index
    %c8_33 = arith.constant 8 : index
    %c0_34 = arith.constant 0 : index
    %134 = vector.load %arg4[%c2_32, %c8_33, %c0_34] : memref<3x64x997xbf16, #tpu.memory_space<vmem>>, vector<1x8x997xbf16>
    %135 = vector.shape_cast %134 : vector<1x8x997xbf16> to vector<8x997xbf16>
    %136 = arith.extf %135 : vector<8x997xbf16> to vector<8x997xf32>
    %137 = vector.shape_cast %136 : vector<8x997xf32> to vector<1x8x997xf32>
    %138 = vector.broadcast %137 : vector<1x8x997xf32> to vector<2x8x997xf32>
    %139 = arith.mulf %113, %138 : vector<2x8x997xf32>
    %cst_35 = arith.constant dense<0.000000e+00> : vector<2x8xf32>
    %140 = vector.multi_reduction <add>, %139, %cst_35 [2] : vector<2x8x997xf32> to vector<2x8xf32>
    %cst_36 = arith.constant dense<0.000000e+00> : vector<2xf32>
    %141 = vector.multi_reduction <add>, %140, %cst_36 [1] : vector<2x8xf32> to vector<2xf32>
    %142 = vector.shape_cast %141 : vector<2xf32> to vector<2x1xf32>
    %143 = arith.addf %78, %142 : vector<2x1xf32>
    %144 = vector.extract_strided_slice %1 {offsets = [16, 0], sizes = [8, 3], strides = [1, 1]} : vector<64x3xf32> to vector<8x3xf32>
    %145 = vector.extract_strided_slice %144 {offsets = [0, 0], sizes = [8, 1], strides = [1, 1]} : vector<8x3xf32> to vector<8x1xf32>
    %146 = vector.shape_cast %145 : vector<8x1xf32> to vector<1x8x1xf32>
    %147 = vector.extract_strided_slice %144 {offsets = [0, 1], sizes = [8, 1], strides = [1, 1]} : vector<8x3xf32> to vector<8x1xf32>
    %148 = vector.shape_cast %147 : vector<8x1xf32> to vector<1x8x1xf32>
    %149 = vector.extract_strided_slice %144 {offsets = [0, 2], sizes = [8, 1], strides = [1, 1]} : vector<8x3xf32> to vector<8x1xf32>
    %150 = vector.shape_cast %149 : vector<8x1xf32> to vector<1x8x1xf32>
    %151 = vector.extract_strided_slice %2 {offsets = [0, 16, 0], sizes = [1, 8, 1], strides = [1, 1, 1]} : vector<1x64x1xf32> to vector<1x8x1xf32>
    %152 = vector.broadcast %146 : vector<1x8x1xf32> to vector<2x8x997xf32>
    %153 = vector.broadcast %4 : vector<2x1x997xf32> to vector<2x8x997xf32>
    %154 = arith.mulf %152, %153 : vector<2x8x997xf32>
    %155 = vector.broadcast %148 : vector<1x8x1xf32> to vector<2x8x997xf32>
    %156 = vector.broadcast %6 : vector<2x1x997xf32> to vector<2x8x997xf32>
    %157 = arith.mulf %155, %156 : vector<2x8x997xf32>
    %158 = arith.addf %154, %157 : vector<2x8x997xf32>
    %159 = vector.broadcast %150 : vector<1x8x1xf32> to vector<2x8x997xf32>
    %160 = vector.broadcast %8 : vector<2x1x997xf32> to vector<2x8x997xf32>
    %161 = arith.mulf %159, %160 : vector<2x8x997xf32>
    %162 = arith.addf %158, %161 : vector<2x8x997xf32>
    %163 = vector.broadcast %146 : vector<1x8x1xf32> to vector<2x8x997xf32>
    %164 = vector.broadcast %6 : vector<2x1x997xf32> to vector<2x8x997xf32>
    %165 = arith.mulf %163, %164 : vector<2x8x997xf32>
    %166 = vector.broadcast %148 : vector<1x8x1xf32> to vector<2x8x997xf32>
    %167 = vector.broadcast %8 : vector<2x1x997xf32> to vector<2x8x997xf32>
    %168 = arith.mulf %166, %167 : vector<2x8x997xf32>
    %169 = arith.addf %165, %168 : vector<2x8x997xf32>
    %170 = vector.broadcast %150 : vector<1x8x1xf32> to vector<2x8x997xf32>
    %171 = vector.broadcast %10 : vector<2x1x997xf32> to vector<2x8x997xf32>
    %172 = arith.mulf %170, %171 : vector<2x8x997xf32>
    %173 = arith.addf %169, %172 : vector<2x8x997xf32>
    %174 = arith.maximumf %162, %173 : vector<2x8x997xf32>
    %175 = vector.broadcast %151 : vector<1x8x1xf32> to vector<2x8x997xf32>
    %176 = arith.addf %174, %175 : vector<2x8x997xf32>
    %cst_37 = arith.constant 0.000000e+00 : f32
    %177 = vector.broadcast %cst_37 : f32 to vector<2x8x997xf32>
    %178 = arith.maximumf %176, %177 : vector<2x8x997xf32>
    %c0_38 = arith.constant 0 : index
    %c16 = arith.constant 16 : index
    %c0_39 = arith.constant 0 : index
    %179 = vector.load %arg4[%c0_38, %c16, %c0_39] : memref<3x64x997xbf16, #tpu.memory_space<vmem>>, vector<1x8x997xbf16>
    %180 = vector.shape_cast %179 : vector<1x8x997xbf16> to vector<8x997xbf16>
    %181 = arith.extf %180 : vector<8x997xbf16> to vector<8x997xf32>
    %182 = vector.shape_cast %181 : vector<8x997xf32> to vector<1x8x997xf32>
    %183 = vector.broadcast %182 : vector<1x8x997xf32> to vector<2x8x997xf32>
    %184 = arith.mulf %178, %183 : vector<2x8x997xf32>
    %cst_40 = arith.constant dense<0.000000e+00> : vector<2x8xf32>
    %185 = vector.multi_reduction <add>, %184, %cst_40 [2] : vector<2x8x997xf32> to vector<2x8xf32>
    %cst_41 = arith.constant dense<0.000000e+00> : vector<2xf32>
    %186 = vector.multi_reduction <add>, %185, %cst_41 [1] : vector<2x8xf32> to vector<2xf32>
    %187 = vector.shape_cast %186 : vector<2xf32> to vector<2x1xf32>
    %188 = arith.addf %123, %187 : vector<2x1xf32>
    %c1_42 = arith.constant 1 : index
    %c16_43 = arith.constant 16 : index
    %c0_44 = arith.constant 0 : index
    %189 = vector.load %arg4[%c1_42, %c16_43, %c0_44] : memref<3x64x997xbf16, #tpu.memory_space<vmem>>, vector<1x8x997xbf16>
    %190 = vector.shape_cast %189 : vector<1x8x997xbf16> to vector<8x997xbf16>
    %191 = arith.extf %190 : vector<8x997xbf16> to vector<8x997xf32>
    %192 = vector.shape_cast %191 : vector<8x997xf32> to vector<1x8x997xf32>
    %193 = vector.broadcast %192 : vector<1x8x997xf32> to vector<2x8x997xf32>
    %194 = arith.mulf %178, %193 : vector<2x8x997xf32>
    %cst_45 = arith.constant dense<0.000000e+00> : vector<2x8xf32>
    %195 = vector.multi_reduction <add>, %194, %cst_45 [2] : vector<2x8x997xf32> to vector<2x8xf32>
    %cst_46 = arith.constant dense<0.000000e+00> : vector<2xf32>
    %196 = vector.multi_reduction <add>, %195, %cst_46 [1] : vector<2x8xf32> to vector<2xf32>
    %197 = vector.shape_cast %196 : vector<2xf32> to vector<2x1xf32>
    %198 = arith.addf %133, %197 : vector<2x1xf32>
    %c2_47 = arith.constant 2 : index
    %c16_48 = arith.constant 16 : index
    %c0_49 = arith.constant 0 : index
    %199 = vector.load %arg4[%c2_47, %c16_48, %c0_49] : memref<3x64x997xbf16, #tpu.memory_space<vmem>>, vector<1x8x997xbf16>
    %200 = vector.shape_cast %199 : vector<1x8x997xbf16> to vector<8x997xbf16>
    %201 = arith.extf %200 : vector<8x997xbf16> to vector<8x997xf32>
    %202 = vector.shape_cast %201 : vector<8x997xf32> to vector<1x8x997xf32>
    %203 = vector.broadcast %202 : vector<1x8x997xf32> to vector<2x8x997xf32>
    %204 = arith.mulf %178, %203 : vector<2x8x997xf32>
    %cst_50 = arith.constant dense<0.000000e+00> : vector<2x8xf32>
    %205 = vector.multi_reduction <add>, %204, %cst_50 [2] : vector<2x8x997xf32> to vector<2x8xf32>
    %cst_51 = arith.constant dense<0.000000e+00> : vector<2xf32>
    %206 = vector.multi_reduction <add>, %205, %cst_51 [1] : vector<2x8xf32> to vector<2xf32>
    %207 = vector.shape_cast %206 : vector<2xf32> to vector<2x1xf32>
    %208 = arith.addf %143, %207 : vector<2x1xf32>
    %209 = vector.extract_strided_slice %1 {offsets = [24, 0], sizes = [8, 3], strides = [1, 1]} : vector<64x3xf32> to vector<8x3xf32>
    %210 = vector.extract_strided_slice %209 {offsets = [0, 0], sizes = [8, 1], strides = [1, 1]} : vector<8x3xf32> to vector<8x1xf32>
    %211 = vector.shape_cast %210 : vector<8x1xf32> to vector<1x8x1xf32>
    %212 = vector.extract_strided_slice %209 {offsets = [0, 1], sizes = [8, 1], strides = [1, 1]} : vector<8x3xf32> to vector<8x1xf32>
    %213 = vector.shape_cast %212 : vector<8x1xf32> to vector<1x8x1xf32>
    %214 = vector.extract_strided_slice %209 {offsets = [0, 2], sizes = [8, 1], strides = [1, 1]} : vector<8x3xf32> to vector<8x1xf32>
    %215 = vector.shape_cast %214 : vector<8x1xf32> to vector<1x8x1xf32>
    %216 = vector.extract_strided_slice %2 {offsets = [0, 24, 0], sizes = [1, 8, 1], strides = [1, 1, 1]} : vector<1x64x1xf32> to vector<1x8x1xf32>
    %217 = vector.broadcast %211 : vector<1x8x1xf32> to vector<2x8x997xf32>
    %218 = vector.broadcast %4 : vector<2x1x997xf32> to vector<2x8x997xf32>
    %219 = arith.mulf %217, %218 : vector<2x8x997xf32>
    %220 = vector.broadcast %213 : vector<1x8x1xf32> to vector<2x8x997xf32>
    %221 = vector.broadcast %6 : vector<2x1x997xf32> to vector<2x8x997xf32>
    %222 = arith.mulf %220, %221 : vector<2x8x997xf32>
    %223 = arith.addf %219, %222 : vector<2x8x997xf32>
    %224 = vector.broadcast %215 : vector<1x8x1xf32> to vector<2x8x997xf32>
    %225 = vector.broadcast %8 : vector<2x1x997xf32> to vector<2x8x997xf32>
    %226 = arith.mulf %224, %225 : vector<2x8x997xf32>
    %227 = arith.addf %223, %226 : vector<2x8x997xf32>
    %228 = vector.broadcast %211 : vector<1x8x1xf32> to vector<2x8x997xf32>
    %229 = vector.broadcast %6 : vector<2x1x997xf32> to vector<2x8x997xf32>
    %230 = arith.mulf %228, %229 : vector<2x8x997xf32>
    %231 = vector.broadcast %213 : vector<1x8x1xf32> to vector<2x8x997xf32>
    %232 = vector.broadcast %8 : vector<2x1x997xf32> to vector<2x8x997xf32>
    %233 = arith.mulf %231, %232 : vector<2x8x997xf32>
    %234 = arith.addf %230, %233 : vector<2x8x997xf32>
    %235 = vector.broadcast %215 : vector<1x8x1xf32> to vector<2x8x997xf32>
    %236 = vector.broadcast %10 : vector<2x1x997xf32> to vector<2x8x997xf32>
    %237 = arith.mulf %235, %236 : vector<2x8x997xf32>
    %238 = arith.addf %234, %237 : vector<2x8x997xf32>
    %239 = arith.maximumf %227, %238 : vector<2x8x997xf32>
    %240 = vector.broadcast %216 : vector<1x8x1xf32> to vector<2x8x997xf32>
    %241 = arith.addf %239, %240 : vector<2x8x997xf32>
    %cst_52 = arith.constant 0.000000e+00 : f32
    %242 = vector.broadcast %cst_52 : f32 to vector<2x8x997xf32>
    %243 = arith.maximumf %241, %242 : vector<2x8x997xf32>
    %c0_53 = arith.constant 0 : index
    %c24 = arith.constant 24 : index
    %c0_54 = arith.constant 0 : index
    %244 = vector.load %arg4[%c0_53, %c24, %c0_54] : memref<3x64x997xbf16, #tpu.memory_space<vmem>>, vector<1x8x997xbf16>
    %245 = vector.shape_cast %244 : vector<1x8x997xbf16> to vector<8x997xbf16>
    %246 = arith.extf %245 : vector<8x997xbf16> to vector<8x997xf32>
    %247 = vector.shape_cast %246 : vector<8x997xf32> to vector<1x8x997xf32>
    %248 = vector.broadcast %247 : vector<1x8x997xf32> to vector<2x8x997xf32>
    %249 = arith.mulf %243, %248 : vector<2x8x997xf32>
    %cst_55 = arith.constant dense<0.000000e+00> : vector<2x8xf32>
    %250 = vector.multi_reduction <add>, %249, %cst_55 [2] : vector<2x8x997xf32> to vector<2x8xf32>
    %cst_56 = arith.constant dense<0.000000e+00> : vector<2xf32>
    %251 = vector.multi_reduction <add>, %250, %cst_56 [1] : vector<2x8xf32> to vector<2xf32>
    %252 = vector.shape_cast %251 : vector<2xf32> to vector<2x1xf32>
    %253 = arith.addf %188, %252 : vector<2x1xf32>
    %c1_57 = arith.constant 1 : index
    %c24_58 = arith.constant 24 : index
    %c0_59 = arith.constant 0 : index
    %254 = vector.load %arg4[%c1_57, %c24_58, %c0_59] : memref<3x64x997xbf16, #tpu.memory_space<vmem>>, vector<1x8x997xbf16>
    %255 = vector.shape_cast %254 : vector<1x8x997xbf16> to vector<8x997xbf16>
    %256 = arith.extf %255 : vector<8x997xbf16> to vector<8x997xf32>
    %257 = vector.shape_cast %256 : vector<8x997xf32> to vector<1x8x997xf32>
    %258 = vector.broadcast %257 : vector<1x8x997xf32> to vector<2x8x997xf32>
    %259 = arith.mulf %243, %258 : vector<2x8x997xf32>
    %cst_60 = arith.constant dense<0.000000e+00> : vector<2x8xf32>
    %260 = vector.multi_reduction <add>, %259, %cst_60 [2] : vector<2x8x997xf32> to vector<2x8xf32>
    %cst_61 = arith.constant dense<0.000000e+00> : vector<2xf32>
    %261 = vector.multi_reduction <add>, %260, %cst_61 [1] : vector<2x8xf32> to vector<2xf32>
    %262 = vector.shape_cast %261 : vector<2xf32> to vector<2x1xf32>
    %263 = arith.addf %198, %262 : vector<2x1xf32>
    %c2_62 = arith.constant 2 : index
    %c24_63 = arith.constant 24 : index
    %c0_64 = arith.constant 0 : index
    %264 = vector.load %arg4[%c2_62, %c24_63, %c0_64] : memref<3x64x997xbf16, #tpu.memory_space<vmem>>, vector<1x8x997xbf16>
    %265 = vector.shape_cast %264 : vector<1x8x997xbf16> to vector<8x997xbf16>
    %266 = arith.extf %265 : vector<8x997xbf16> to vector<8x997xf32>
    %267 = vector.shape_cast %266 : vector<8x997xf32> to vector<1x8x997xf32>
    %268 = vector.broadcast %267 : vector<1x8x997xf32> to vector<2x8x997xf32>
    %269 = arith.mulf %243, %268 : vector<2x8x997xf32>
    %cst_65 = arith.constant dense<0.000000e+00> : vector<2x8xf32>
    %270 = vector.multi_reduction <add>, %269, %cst_65 [2] : vector<2x8x997xf32> to vector<2x8xf32>
    %cst_66 = arith.constant dense<0.000000e+00> : vector<2xf32>
    %271 = vector.multi_reduction <add>, %270, %cst_66 [1] : vector<2x8xf32> to vector<2xf32>
    %272 = vector.shape_cast %271 : vector<2xf32> to vector<2x1xf32>
    %273 = arith.addf %208, %272 : vector<2x1xf32>
    %274 = vector.extract_strided_slice %1 {offsets = [32, 0], sizes = [8, 3], strides = [1, 1]} : vector<64x3xf32> to vector<8x3xf32>
    %275 = vector.extract_strided_slice %274 {offsets = [0, 0], sizes = [8, 1], strides = [1, 1]} : vector<8x3xf32> to vector<8x1xf32>
    %276 = vector.shape_cast %275 : vector<8x1xf32> to vector<1x8x1xf32>
    %277 = vector.extract_strided_slice %274 {offsets = [0, 1], sizes = [8, 1], strides = [1, 1]} : vector<8x3xf32> to vector<8x1xf32>
    %278 = vector.shape_cast %277 : vector<8x1xf32> to vector<1x8x1xf32>
    %279 = vector.extract_strided_slice %274 {offsets = [0, 2], sizes = [8, 1], strides = [1, 1]} : vector<8x3xf32> to vector<8x1xf32>
    %280 = vector.shape_cast %279 : vector<8x1xf32> to vector<1x8x1xf32>
    %281 = vector.extract_strided_slice %2 {offsets = [0, 32, 0], sizes = [1, 8, 1], strides = [1, 1, 1]} : vector<1x64x1xf32> to vector<1x8x1xf32>
    %282 = vector.broadcast %276 : vector<1x8x1xf32> to vector<2x8x997xf32>
    %283 = vector.broadcast %4 : vector<2x1x997xf32> to vector<2x8x997xf32>
    %284 = arith.mulf %282, %283 : vector<2x8x997xf32>
    %285 = vector.broadcast %278 : vector<1x8x1xf32> to vector<2x8x997xf32>
    %286 = vector.broadcast %6 : vector<2x1x997xf32> to vector<2x8x997xf32>
    %287 = arith.mulf %285, %286 : vector<2x8x997xf32>
    %288 = arith.addf %284, %287 : vector<2x8x997xf32>
    %289 = vector.broadcast %280 : vector<1x8x1xf32> to vector<2x8x997xf32>
    %290 = vector.broadcast %8 : vector<2x1x997xf32> to vector<2x8x997xf32>
    %291 = arith.mulf %289, %290 : vector<2x8x997xf32>
    %292 = arith.addf %288, %291 : vector<2x8x997xf32>
    %293 = vector.broadcast %276 : vector<1x8x1xf32> to vector<2x8x997xf32>
    %294 = vector.broadcast %6 : vector<2x1x997xf32> to vector<2x8x997xf32>
    %295 = arith.mulf %293, %294 : vector<2x8x997xf32>
    %296 = vector.broadcast %278 : vector<1x8x1xf32> to vector<2x8x997xf32>
    %297 = vector.broadcast %8 : vector<2x1x997xf32> to vector<2x8x997xf32>
    %298 = arith.mulf %296, %297 : vector<2x8x997xf32>
    %299 = arith.addf %295, %298 : vector<2x8x997xf32>
    %300 = vector.broadcast %280 : vector<1x8x1xf32> to vector<2x8x997xf32>
    %301 = vector.broadcast %10 : vector<2x1x997xf32> to vector<2x8x997xf32>
    %302 = arith.mulf %300, %301 : vector<2x8x997xf32>
    %303 = arith.addf %299, %302 : vector<2x8x997xf32>
    %304 = arith.maximumf %292, %303 : vector<2x8x997xf32>
    %305 = vector.broadcast %281 : vector<1x8x1xf32> to vector<2x8x997xf32>
    %306 = arith.addf %304, %305 : vector<2x8x997xf32>
    %cst_67 = arith.constant 0.000000e+00 : f32
    %307 = vector.broadcast %cst_67 : f32 to vector<2x8x997xf32>
    %308 = arith.maximumf %306, %307 : vector<2x8x997xf32>
    %c0_68 = arith.constant 0 : index
    %c32 = arith.constant 32 : index
    %c0_69 = arith.constant 0 : index
    %309 = vector.load %arg4[%c0_68, %c32, %c0_69] : memref<3x64x997xbf16, #tpu.memory_space<vmem>>, vector<1x8x997xbf16>
    %310 = vector.shape_cast %309 : vector<1x8x997xbf16> to vector<8x997xbf16>
    %311 = arith.extf %310 : vector<8x997xbf16> to vector<8x997xf32>
    %312 = vector.shape_cast %311 : vector<8x997xf32> to vector<1x8x997xf32>
    %313 = vector.broadcast %312 : vector<1x8x997xf32> to vector<2x8x997xf32>
    %314 = arith.mulf %308, %313 : vector<2x8x997xf32>
    %cst_70 = arith.constant dense<0.000000e+00> : vector<2x8xf32>
    %315 = vector.multi_reduction <add>, %314, %cst_70 [2] : vector<2x8x997xf32> to vector<2x8xf32>
    %cst_71 = arith.constant dense<0.000000e+00> : vector<2xf32>
    %316 = vector.multi_reduction <add>, %315, %cst_71 [1] : vector<2x8xf32> to vector<2xf32>
    %317 = vector.shape_cast %316 : vector<2xf32> to vector<2x1xf32>
    %318 = arith.addf %253, %317 : vector<2x1xf32>
    %c1_72 = arith.constant 1 : index
    %c32_73 = arith.constant 32 : index
    %c0_74 = arith.constant 0 : index
    %319 = vector.load %arg4[%c1_72, %c32_73, %c0_74] : memref<3x64x997xbf16, #tpu.memory_space<vmem>>, vector<1x8x997xbf16>
    %320 = vector.shape_cast %319 : vector<1x8x997xbf16> to vector<8x997xbf16>
    %321 = arith.extf %320 : vector<8x997xbf16> to vector<8x997xf32>
    %322 = vector.shape_cast %321 : vector<8x997xf32> to vector<1x8x997xf32>
    %323 = vector.broadcast %322 : vector<1x8x997xf32> to vector<2x8x997xf32>
    %324 = arith.mulf %308, %323 : vector<2x8x997xf32>
    %cst_75 = arith.constant dense<0.000000e+00> : vector<2x8xf32>
    %325 = vector.multi_reduction <add>, %324, %cst_75 [2] : vector<2x8x997xf32> to vector<2x8xf32>
    %cst_76 = arith.constant dense<0.000000e+00> : vector<2xf32>
    %326 = vector.multi_reduction <add>, %325, %cst_76 [1] : vector<2x8xf32> to vector<2xf32>
    %327 = vector.shape_cast %326 : vector<2xf32> to vector<2x1xf32>
    %328 = arith.addf %263, %327 : vector<2x1xf32>
    %c2_77 = arith.constant 2 : index
    %c32_78 = arith.constant 32 : index
    %c0_79 = arith.constant 0 : index
    %329 = vector.load %arg4[%c2_77, %c32_78, %c0_79] : memref<3x64x997xbf16, #tpu.memory_space<vmem>>, vector<1x8x997xbf16>
    %330 = vector.shape_cast %329 : vector<1x8x997xbf16> to vector<8x997xbf16>
    %331 = arith.extf %330 : vector<8x997xbf16> to vector<8x997xf32>
    %332 = vector.shape_cast %331 : vector<8x997xf32> to vector<1x8x997xf32>
    %333 = vector.broadcast %332 : vector<1x8x997xf32> to vector<2x8x997xf32>
    %334 = arith.mulf %308, %333 : vector<2x8x997xf32>
    %cst_80 = arith.constant dense<0.000000e+00> : vector<2x8xf32>
    %335 = vector.multi_reduction <add>, %334, %cst_80 [2] : vector<2x8x997xf32> to vector<2x8xf32>
    %cst_81 = arith.constant dense<0.000000e+00> : vector<2xf32>
    %336 = vector.multi_reduction <add>, %335, %cst_81 [1] : vector<2x8xf32> to vector<2xf32>
    %337 = vector.shape_cast %336 : vector<2xf32> to vector<2x1xf32>
    %338 = arith.addf %273, %337 : vector<2x1xf32>
    %339 = vector.extract_strided_slice %1 {offsets = [40, 0], sizes = [8, 3], strides = [1, 1]} : vector<64x3xf32> to vector<8x3xf32>
    %340 = vector.extract_strided_slice %339 {offsets = [0, 0], sizes = [8, 1], strides = [1, 1]} : vector<8x3xf32> to vector<8x1xf32>
    %341 = vector.shape_cast %340 : vector<8x1xf32> to vector<1x8x1xf32>
    %342 = vector.extract_strided_slice %339 {offsets = [0, 1], sizes = [8, 1], strides = [1, 1]} : vector<8x3xf32> to vector<8x1xf32>
    %343 = vector.shape_cast %342 : vector<8x1xf32> to vector<1x8x1xf32>
    %344 = vector.extract_strided_slice %339 {offsets = [0, 2], sizes = [8, 1], strides = [1, 1]} : vector<8x3xf32> to vector<8x1xf32>
    %345 = vector.shape_cast %344 : vector<8x1xf32> to vector<1x8x1xf32>
    %346 = vector.extract_strided_slice %2 {offsets = [0, 40, 0], sizes = [1, 8, 1], strides = [1, 1, 1]} : vector<1x64x1xf32> to vector<1x8x1xf32>
    %347 = vector.broadcast %341 : vector<1x8x1xf32> to vector<2x8x997xf32>
    %348 = vector.broadcast %4 : vector<2x1x997xf32> to vector<2x8x997xf32>
    %349 = arith.mulf %347, %348 : vector<2x8x997xf32>
    %350 = vector.broadcast %343 : vector<1x8x1xf32> to vector<2x8x997xf32>
    %351 = vector.broadcast %6 : vector<2x1x997xf32> to vector<2x8x997xf32>
    %352 = arith.mulf %350, %351 : vector<2x8x997xf32>
    %353 = arith.addf %349, %352 : vector<2x8x997xf32>
    %354 = vector.broadcast %345 : vector<1x8x1xf32> to vector<2x8x997xf32>
    %355 = vector.broadcast %8 : vector<2x1x997xf32> to vector<2x8x997xf32>
    %356 = arith.mulf %354, %355 : vector<2x8x997xf32>
    %357 = arith.addf %353, %356 : vector<2x8x997xf32>
    %358 = vector.broadcast %341 : vector<1x8x1xf32> to vector<2x8x997xf32>
    %359 = vector.broadcast %6 : vector<2x1x997xf32> to vector<2x8x997xf32>
    %360 = arith.mulf %358, %359 : vector<2x8x997xf32>
    %361 = vector.broadcast %343 : vector<1x8x1xf32> to vector<2x8x997xf32>
    %362 = vector.broadcast %8 : vector<2x1x997xf32> to vector<2x8x997xf32>
    %363 = arith.mulf %361, %362 : vector<2x8x997xf32>
    %364 = arith.addf %360, %363 : vector<2x8x997xf32>
    %365 = vector.broadcast %345 : vector<1x8x1xf32> to vector<2x8x997xf32>
    %366 = vector.broadcast %10 : vector<2x1x997xf32> to vector<2x8x997xf32>
    %367 = arith.mulf %365, %366 : vector<2x8x997xf32>
    %368 = arith.addf %364, %367 : vector<2x8x997xf32>
    %369 = arith.maximumf %357, %368 : vector<2x8x997xf32>
    %370 = vector.broadcast %346 : vector<1x8x1xf32> to vector<2x8x997xf32>
    %371 = arith.addf %369, %370 : vector<2x8x997xf32>
    %cst_82 = arith.constant 0.000000e+00 : f32
    %372 = vector.broadcast %cst_82 : f32 to vector<2x8x997xf32>
    %373 = arith.maximumf %371, %372 : vector<2x8x997xf32>
    %c0_83 = arith.constant 0 : index
    %c40 = arith.constant 40 : index
    %c0_84 = arith.constant 0 : index
    %374 = vector.load %arg4[%c0_83, %c40, %c0_84] : memref<3x64x997xbf16, #tpu.memory_space<vmem>>, vector<1x8x997xbf16>
    %375 = vector.shape_cast %374 : vector<1x8x997xbf16> to vector<8x997xbf16>
    %376 = arith.extf %375 : vector<8x997xbf16> to vector<8x997xf32>
    %377 = vector.shape_cast %376 : vector<8x997xf32> to vector<1x8x997xf32>
    %378 = vector.broadcast %377 : vector<1x8x997xf32> to vector<2x8x997xf32>
    %379 = arith.mulf %373, %378 : vector<2x8x997xf32>
    %cst_85 = arith.constant dense<0.000000e+00> : vector<2x8xf32>
    %380 = vector.multi_reduction <add>, %379, %cst_85 [2] : vector<2x8x997xf32> to vector<2x8xf32>
    %cst_86 = arith.constant dense<0.000000e+00> : vector<2xf32>
    %381 = vector.multi_reduction <add>, %380, %cst_86 [1] : vector<2x8xf32> to vector<2xf32>
    %382 = vector.shape_cast %381 : vector<2xf32> to vector<2x1xf32>
    %383 = arith.addf %318, %382 : vector<2x1xf32>
    %c1_87 = arith.constant 1 : index
    %c40_88 = arith.constant 40 : index
    %c0_89 = arith.constant 0 : index
    %384 = vector.load %arg4[%c1_87, %c40_88, %c0_89] : memref<3x64x997xbf16, #tpu.memory_space<vmem>>, vector<1x8x997xbf16>
    %385 = vector.shape_cast %384 : vector<1x8x997xbf16> to vector<8x997xbf16>
    %386 = arith.extf %385 : vector<8x997xbf16> to vector<8x997xf32>
    %387 = vector.shape_cast %386 : vector<8x997xf32> to vector<1x8x997xf32>
    %388 = vector.broadcast %387 : vector<1x8x997xf32> to vector<2x8x997xf32>
    %389 = arith.mulf %373, %388 : vector<2x8x997xf32>
    %cst_90 = arith.constant dense<0.000000e+00> : vector<2x8xf32>
    %390 = vector.multi_reduction <add>, %389, %cst_90 [2] : vector<2x8x997xf32> to vector<2x8xf32>
    %cst_91 = arith.constant dense<0.000000e+00> : vector<2xf32>
    %391 = vector.multi_reduction <add>, %390, %cst_91 [1] : vector<2x8xf32> to vector<2xf32>
    %392 = vector.shape_cast %391 : vector<2xf32> to vector<2x1xf32>
    %393 = arith.addf %328, %392 : vector<2x1xf32>
    %c2_92 = arith.constant 2 : index
    %c40_93 = arith.constant 40 : index
    %c0_94 = arith.constant 0 : index
    %394 = vector.load %arg4[%c2_92, %c40_93, %c0_94] : memref<3x64x997xbf16, #tpu.memory_space<vmem>>, vector<1x8x997xbf16>
    %395 = vector.shape_cast %394 : vector<1x8x997xbf16> to vector<8x997xbf16>
    %396 = arith.extf %395 : vector<8x997xbf16> to vector<8x997xf32>
    %397 = vector.shape_cast %396 : vector<8x997xf32> to vector<1x8x997xf32>
    %398 = vector.broadcast %397 : vector<1x8x997xf32> to vector<2x8x997xf32>
    %399 = arith.mulf %373, %398 : vector<2x8x997xf32>
    %cst_95 = arith.constant dense<0.000000e+00> : vector<2x8xf32>
    %400 = vector.multi_reduction <add>, %399, %cst_95 [2] : vector<2x8x997xf32> to vector<2x8xf32>
    %cst_96 = arith.constant dense<0.000000e+00> : vector<2xf32>
    %401 = vector.multi_reduction <add>, %400, %cst_96 [1] : vector<2x8xf32> to vector<2xf32>
    %402 = vector.shape_cast %401 : vector<2xf32> to vector<2x1xf32>
    %403 = arith.addf %338, %402 : vector<2x1xf32>
    %404 = vector.extract_strided_slice %1 {offsets = [48, 0], sizes = [8, 3], strides = [1, 1]} : vector<64x3xf32> to vector<8x3xf32>
    %405 = vector.extract_strided_slice %404 {offsets = [0, 0], sizes = [8, 1], strides = [1, 1]} : vector<8x3xf32> to vector<8x1xf32>
    %406 = vector.shape_cast %405 : vector<8x1xf32> to vector<1x8x1xf32>
    %407 = vector.extract_strided_slice %404 {offsets = [0, 1], sizes = [8, 1], strides = [1, 1]} : vector<8x3xf32> to vector<8x1xf32>
    %408 = vector.shape_cast %407 : vector<8x1xf32> to vector<1x8x1xf32>
    %409 = vector.extract_strided_slice %404 {offsets = [0, 2], sizes = [8, 1], strides = [1, 1]} : vector<8x3xf32> to vector<8x1xf32>
    %410 = vector.shape_cast %409 : vector<8x1xf32> to vector<1x8x1xf32>
    %411 = vector.extract_strided_slice %2 {offsets = [0, 48, 0], sizes = [1, 8, 1], strides = [1, 1, 1]} : vector<1x64x1xf32> to vector<1x8x1xf32>
    %412 = vector.broadcast %406 : vector<1x8x1xf32> to vector<2x8x997xf32>
    %413 = vector.broadcast %4 : vector<2x1x997xf32> to vector<2x8x997xf32>
    %414 = arith.mulf %412, %413 : vector<2x8x997xf32>
    %415 = vector.broadcast %408 : vector<1x8x1xf32> to vector<2x8x997xf32>
    %416 = vector.broadcast %6 : vector<2x1x997xf32> to vector<2x8x997xf32>
    %417 = arith.mulf %415, %416 : vector<2x8x997xf32>
    %418 = arith.addf %414, %417 : vector<2x8x997xf32>
    %419 = vector.broadcast %410 : vector<1x8x1xf32> to vector<2x8x997xf32>
    %420 = vector.broadcast %8 : vector<2x1x997xf32> to vector<2x8x997xf32>
    %421 = arith.mulf %419, %420 : vector<2x8x997xf32>
    %422 = arith.addf %418, %421 : vector<2x8x997xf32>
    %423 = vector.broadcast %406 : vector<1x8x1xf32> to vector<2x8x997xf32>
    %424 = vector.broadcast %6 : vector<2x1x997xf32> to vector<2x8x997xf32>
    %425 = arith.mulf %423, %424 : vector<2x8x997xf32>
    %426 = vector.broadcast %408 : vector<1x8x1xf32> to vector<2x8x997xf32>
    %427 = vector.broadcast %8 : vector<2x1x997xf32> to vector<2x8x997xf32>
    %428 = arith.mulf %426, %427 : vector<2x8x997xf32>
    %429 = arith.addf %425, %428 : vector<2x8x997xf32>
    %430 = vector.broadcast %410 : vector<1x8x1xf32> to vector<2x8x997xf32>
    %431 = vector.broadcast %10 : vector<2x1x997xf32> to vector<2x8x997xf32>
    %432 = arith.mulf %430, %431 : vector<2x8x997xf32>
    %433 = arith.addf %429, %432 : vector<2x8x997xf32>
    %434 = arith.maximumf %422, %433 : vector<2x8x997xf32>
    %435 = vector.broadcast %411 : vector<1x8x1xf32> to vector<2x8x997xf32>
    %436 = arith.addf %434, %435 : vector<2x8x997xf32>
    %cst_97 = arith.constant 0.000000e+00 : f32
    %437 = vector.broadcast %cst_97 : f32 to vector<2x8x997xf32>
    %438 = arith.maximumf %436, %437 : vector<2x8x997xf32>
    %c0_98 = arith.constant 0 : index
    %c48 = arith.constant 48 : index
    %c0_99 = arith.constant 0 : index
    %439 = vector.load %arg4[%c0_98, %c48, %c0_99] : memref<3x64x997xbf16, #tpu.memory_space<vmem>>, vector<1x8x997xbf16>
    %440 = vector.shape_cast %439 : vector<1x8x997xbf16> to vector<8x997xbf16>
    %441 = arith.extf %440 : vector<8x997xbf16> to vector<8x997xf32>
    %442 = vector.shape_cast %441 : vector<8x997xf32> to vector<1x8x997xf32>
    %443 = vector.broadcast %442 : vector<1x8x997xf32> to vector<2x8x997xf32>
    %444 = arith.mulf %438, %443 : vector<2x8x997xf32>
    %cst_100 = arith.constant dense<0.000000e+00> : vector<2x8xf32>
    %445 = vector.multi_reduction <add>, %444, %cst_100 [2] : vector<2x8x997xf32> to vector<2x8xf32>
    %cst_101 = arith.constant dense<0.000000e+00> : vector<2xf32>
    %446 = vector.multi_reduction <add>, %445, %cst_101 [1] : vector<2x8xf32> to vector<2xf32>
    %447 = vector.shape_cast %446 : vector<2xf32> to vector<2x1xf32>
    %448 = arith.addf %383, %447 : vector<2x1xf32>
    %c1_102 = arith.constant 1 : index
    %c48_103 = arith.constant 48 : index
    %c0_104 = arith.constant 0 : index
    %449 = vector.load %arg4[%c1_102, %c48_103, %c0_104] : memref<3x64x997xbf16, #tpu.memory_space<vmem>>, vector<1x8x997xbf16>
    %450 = vector.shape_cast %449 : vector<1x8x997xbf16> to vector<8x997xbf16>
    %451 = arith.extf %450 : vector<8x997xbf16> to vector<8x997xf32>
    %452 = vector.shape_cast %451 : vector<8x997xf32> to vector<1x8x997xf32>
    %453 = vector.broadcast %452 : vector<1x8x997xf32> to vector<2x8x997xf32>
    %454 = arith.mulf %438, %453 : vector<2x8x997xf32>
    %cst_105 = arith.constant dense<0.000000e+00> : vector<2x8xf32>
    %455 = vector.multi_reduction <add>, %454, %cst_105 [2] : vector<2x8x997xf32> to vector<2x8xf32>
    %cst_106 = arith.constant dense<0.000000e+00> : vector<2xf32>
    %456 = vector.multi_reduction <add>, %455, %cst_106 [1] : vector<2x8xf32> to vector<2xf32>
    %457 = vector.shape_cast %456 : vector<2xf32> to vector<2x1xf32>
    %458 = arith.addf %393, %457 : vector<2x1xf32>
    %c2_107 = arith.constant 2 : index
    %c48_108 = arith.constant 48 : index
    %c0_109 = arith.constant 0 : index
    %459 = vector.load %arg4[%c2_107, %c48_108, %c0_109] : memref<3x64x997xbf16, #tpu.memory_space<vmem>>, vector<1x8x997xbf16>
    %460 = vector.shape_cast %459 : vector<1x8x997xbf16> to vector<8x997xbf16>
    %461 = arith.extf %460 : vector<8x997xbf16> to vector<8x997xf32>
    %462 = vector.shape_cast %461 : vector<8x997xf32> to vector<1x8x997xf32>
    %463 = vector.broadcast %462 : vector<1x8x997xf32> to vector<2x8x997xf32>
    %464 = arith.mulf %438, %463 : vector<2x8x997xf32>
    %cst_110 = arith.constant dense<0.000000e+00> : vector<2x8xf32>
    %465 = vector.multi_reduction <add>, %464, %cst_110 [2] : vector<2x8x997xf32> to vector<2x8xf32>
    %cst_111 = arith.constant dense<0.000000e+00> : vector<2xf32>
    %466 = vector.multi_reduction <add>, %465, %cst_111 [1] : vector<2x8xf32> to vector<2xf32>
    %467 = vector.shape_cast %466 : vector<2xf32> to vector<2x1xf32>
    %468 = arith.addf %403, %467 : vector<2x1xf32>
    %469 = vector.extract_strided_slice %1 {offsets = [56, 0], sizes = [8, 3], strides = [1, 1]} : vector<64x3xf32> to vector<8x3xf32>
    %470 = vector.extract_strided_slice %469 {offsets = [0, 0], sizes = [8, 1], strides = [1, 1]} : vector<8x3xf32> to vector<8x1xf32>
    %471 = vector.shape_cast %470 : vector<8x1xf32> to vector<1x8x1xf32>
    %472 = vector.extract_strided_slice %469 {offsets = [0, 1], sizes = [8, 1], strides = [1, 1]} : vector<8x3xf32> to vector<8x1xf32>
    %473 = vector.shape_cast %472 : vector<8x1xf32> to vector<1x8x1xf32>
    %474 = vector.extract_strided_slice %469 {offsets = [0, 2], sizes = [8, 1], strides = [1, 1]} : vector<8x3xf32> to vector<8x1xf32>
    %475 = vector.shape_cast %474 : vector<8x1xf32> to vector<1x8x1xf32>
    %476 = vector.extract_strided_slice %2 {offsets = [0, 56, 0], sizes = [1, 8, 1], strides = [1, 1, 1]} : vector<1x64x1xf32> to vector<1x8x1xf32>
    %477 = vector.broadcast %471 : vector<1x8x1xf32> to vector<2x8x997xf32>
    %478 = vector.broadcast %4 : vector<2x1x997xf32> to vector<2x8x997xf32>
    %479 = arith.mulf %477, %478 : vector<2x8x997xf32>
    %480 = vector.broadcast %473 : vector<1x8x1xf32> to vector<2x8x997xf32>
    %481 = vector.broadcast %6 : vector<2x1x997xf32> to vector<2x8x997xf32>
    %482 = arith.mulf %480, %481 : vector<2x8x997xf32>
    %483 = arith.addf %479, %482 : vector<2x8x997xf32>
    %484 = vector.broadcast %475 : vector<1x8x1xf32> to vector<2x8x997xf32>
    %485 = vector.broadcast %8 : vector<2x1x997xf32> to vector<2x8x997xf32>
    %486 = arith.mulf %484, %485 : vector<2x8x997xf32>
    %487 = arith.addf %483, %486 : vector<2x8x997xf32>
    %488 = vector.broadcast %471 : vector<1x8x1xf32> to vector<2x8x997xf32>
    %489 = vector.broadcast %6 : vector<2x1x997xf32> to vector<2x8x997xf32>
    %490 = arith.mulf %488, %489 : vector<2x8x997xf32>
    %491 = vector.broadcast %473 : vector<1x8x1xf32> to vector<2x8x997xf32>
    %492 = vector.broadcast %8 : vector<2x1x997xf32> to vector<2x8x997xf32>
    %493 = arith.mulf %491, %492 : vector<2x8x997xf32>
    %494 = arith.addf %490, %493 : vector<2x8x997xf32>
    %495 = vector.broadcast %475 : vector<1x8x1xf32> to vector<2x8x997xf32>
    %496 = vector.broadcast %10 : vector<2x1x997xf32> to vector<2x8x997xf32>
    %497 = arith.mulf %495, %496 : vector<2x8x997xf32>
    %498 = arith.addf %494, %497 : vector<2x8x997xf32>
    %499 = arith.maximumf %487, %498 : vector<2x8x997xf32>
    %500 = vector.broadcast %476 : vector<1x8x1xf32> to vector<2x8x997xf32>
    %501 = arith.addf %499, %500 : vector<2x8x997xf32>
    %cst_112 = arith.constant 0.000000e+00 : f32
    %502 = vector.broadcast %cst_112 : f32 to vector<2x8x997xf32>
    %503 = arith.maximumf %501, %502 : vector<2x8x997xf32>
    %c0_113 = arith.constant 0 : index
    %c56 = arith.constant 56 : index
    %c0_114 = arith.constant 0 : index
    %504 = vector.load %arg4[%c0_113, %c56, %c0_114] : memref<3x64x997xbf16, #tpu.memory_space<vmem>>, vector<1x8x997xbf16>
    %505 = vector.shape_cast %504 : vector<1x8x997xbf16> to vector<8x997xbf16>
    %506 = arith.extf %505 : vector<8x997xbf16> to vector<8x997xf32>
    %507 = vector.shape_cast %506 : vector<8x997xf32> to vector<1x8x997xf32>
    %508 = vector.broadcast %507 : vector<1x8x997xf32> to vector<2x8x997xf32>
    %509 = arith.mulf %503, %508 : vector<2x8x997xf32>
    %cst_115 = arith.constant dense<0.000000e+00> : vector<2x8xf32>
    %510 = vector.multi_reduction <add>, %509, %cst_115 [2] : vector<2x8x997xf32> to vector<2x8xf32>
    %cst_116 = arith.constant dense<0.000000e+00> : vector<2xf32>
    %511 = vector.multi_reduction <add>, %510, %cst_116 [1] : vector<2x8xf32> to vector<2xf32>
    %512 = vector.shape_cast %511 : vector<2xf32> to vector<2x1xf32>
    %513 = arith.addf %448, %512 : vector<2x1xf32>
    %c1_117 = arith.constant 1 : index
    %c56_118 = arith.constant 56 : index
    %c0_119 = arith.constant 0 : index
    %514 = vector.load %arg4[%c1_117, %c56_118, %c0_119] : memref<3x64x997xbf16, #tpu.memory_space<vmem>>, vector<1x8x997xbf16>
    %515 = vector.shape_cast %514 : vector<1x8x997xbf16> to vector<8x997xbf16>
    %516 = arith.extf %515 : vector<8x997xbf16> to vector<8x997xf32>
    %517 = vector.shape_cast %516 : vector<8x997xf32> to vector<1x8x997xf32>
    %518 = vector.broadcast %517 : vector<1x8x997xf32> to vector<2x8x997xf32>
    %519 = arith.mulf %503, %518 : vector<2x8x997xf32>
    %cst_120 = arith.constant dense<0.000000e+00> : vector<2x8xf32>
    %520 = vector.multi_reduction <add>, %519, %cst_120 [2] : vector<2x8x997xf32> to vector<2x8xf32>
    %cst_121 = arith.constant dense<0.000000e+00> : vector<2xf32>
    %521 = vector.multi_reduction <add>, %520, %cst_121 [1] : vector<2x8xf32> to vector<2xf32>
    %522 = vector.shape_cast %521 : vector<2xf32> to vector<2x1xf32>
    %523 = arith.addf %458, %522 : vector<2x1xf32>
    %c2_122 = arith.constant 2 : index
    %c56_123 = arith.constant 56 : index
    %c0_124 = arith.constant 0 : index
    %524 = vector.load %arg4[%c2_122, %c56_123, %c0_124] : memref<3x64x997xbf16, #tpu.memory_space<vmem>>, vector<1x8x997xbf16>
    %525 = vector.shape_cast %524 : vector<1x8x997xbf16> to vector<8x997xbf16>
    %526 = arith.extf %525 : vector<8x997xbf16> to vector<8x997xf32>
    %527 = vector.shape_cast %526 : vector<8x997xf32> to vector<1x8x997xf32>
    %528 = vector.broadcast %527 : vector<1x8x997xf32> to vector<2x8x997xf32>
    %529 = arith.mulf %503, %528 : vector<2x8x997xf32>
    %cst_125 = arith.constant dense<0.000000e+00> : vector<2x8xf32>
    %530 = vector.multi_reduction <add>, %529, %cst_125 [2] : vector<2x8x997xf32> to vector<2x8xf32>
    %cst_126 = arith.constant dense<0.000000e+00> : vector<2xf32>
    %531 = vector.multi_reduction <add>, %530, %cst_126 [1] : vector<2x8xf32> to vector<2xf32>
    %532 = vector.shape_cast %531 : vector<2xf32> to vector<2x1xf32>
    %533 = arith.addf %468, %532 : vector<2x1xf32>
    %534 = tpu.concatenate %513, %523, %533 in 1 : vector<2x1xf32>, vector<2x1xf32>, vector<2x1xf32> -> vector<2x3xf32>
    %c0_127 = arith.constant 0 : index
    %c0_128 = arith.constant 0 : index
    %535 = vector.load %arg5[%c0_127, %c0_128] : memref<1x3xf32, #tpu.memory_space<vmem>>, vector<1x3xf32>
    %536 = vector.broadcast %535 : vector<1x3xf32> to vector<2x3xf32>
    %537 = arith.addf %534, %536 : vector<2x3xf32>
    %c0_129 = arith.constant 0 : index
    %c0_130 = arith.constant 0 : index
    %538 = vector.load %arg6[%c0_129, %c0_130] : memref<2x3xf32, #tpu.memory_space<vmem>>, vector<2x3xf32>
    tpu.vector_store %arg6[%c0_129, %c0_130], %537 {strides = array<i32>} : memref<2x3xf32, #tpu.memory_space<vmem>>, vector<2x3xf32>,
    return
  }
  func.func @transform_0(%arg0: i32) -> (i32, i32) {
    %c0_i32 = arith.constant 0 : i32
    %c0_i32_0 = arith.constant 0 : i32
    %c0_i32_1 = arith.constant 0 : i32
    return %c0_i32, %c0_i32_0 : i32, i32
  }
  func.func @transform_1(%arg0: i32) -> (i32, i32) {
    %c0_i32 = arith.constant 0 : i32
    %c0_i32_0 = arith.constant 0 : i32
    %c0_i32_1 = arith.constant 0 : i32
    return %c0_i32, %c0_i32_0 : i32, i32
  }
  func.func @transform_2(%arg0: i32) -> (i32, i32, i32) {
    %c0_i32 = arith.constant 0 : i32
    %c0_i32_0 = arith.constant 0 : i32
    %c0_i32_1 = arith.constant 0 : i32
    %c0_i32_2 = arith.constant 0 : i32
    return %c0_i32, %c0_i32_0, %c0_i32_1 : i32, i32, i32
  }
  func.func @transform_3(%arg0: i32) -> (i32, i32, i32) {
    %c0_i32 = arith.constant 0 : i32
    %c0_i32_0 = arith.constant 0 : i32
    %c0_i32_1 = arith.constant 0 : i32
    %c0_i32_2 = arith.constant 0 : i32
    return %c0_i32, %c0_i32_0, %c0_i32_1 : i32, i32, i32
  }
  func.func @transform_4(%arg0: i32) -> (i32, i32) {
    %c0_i32 = arith.constant 0 : i32
    %c0_i32_0 = arith.constant 0 : i32
    %c0_i32_1 = arith.constant 0 : i32
    return %c0_i32, %c0_i32_0 : i32, i32
  }
  func.func @transform_5(%arg0: i32) -> (i32, i32) {
    %c0_i32 = arith.constant 0 : i32
    %c0_i32_0 = arith.constant 0 : i32
    %c0_i32_1 = arith.constant 0 : i32
    return %c0_i32, %c0_i32_0 : i32, i32
  }
}

</mosaic_0001>

<llo_original>
// kernel: simple_cnn_forward.1
$region0: #{simple_cnn_forward.1}
  #allocation0 [shape = 'u32[]', space=smem, size = 0x4, offset = 0x4, fixed_abs, tag = 'smem constant byte address 0x4 - core index']
  #allocation1 [shape = 'u32[144,128]{1,0:T(1,128)}', space=vmem, size = 0x12000, scoped, tag = 'internal scratch']
  %s0 = inlined_call_operand.vmem [shape: f32[2,1000], index: 0, kind: input, shape index: {}]
  %s1 = inlined_call_operand.vmem [shape: f32[64,3], index: 1, kind: input, shape index: {}]
  %s2 = inlined_call_operand.vmem [shape: f32[1,64,1], index: 2, kind: input, shape index: {}]
  %s3 = inlined_call_operand.hbm [shape: bf16[3,64,997], index: 3, kind: input, shape index: {}]
  %s4 = inlined_call_operand.vmem [shape: f32[1,3], index: 4, kind: input, shape index: {}]
  %s5 = inlined_call_operand.hbm [shape: f32[2,3], index: 5, kind: output, shape index: {}]
  %s6 = sld [smem:[#allocation0]]
  $region34: #{simple_cnn_forward.1} parent=0
    _
  %s8 = ssub.s32 1, %s6
  %s9 = scalar_select 0, %s8, %s6
  $region1: #{simple_cnn_forward.1} parent=0
    #allocation2 [shape = 'u8[393216]{0}', space=vmem, size = 0x60000, scoped, tag = 'input window, operand 3, single buffered']
    #allocation3 [shape = 's32[1]{0}', space=sflag, size = 0x4, scoped, tag = 'scoped memory for simple_cnn_forward.1']
    #allocation4 [shape = 's32[1]{0}', space=sflag, size = 0x4, scoped, tag = 'scoped memory for simple_cnn_forward.1']
    #allocation5 [shape = 'u8[1024]{0}', space=vmem, size = 0x400, scoped, tag = 'output window, operand 0, single buffered']
    %10 = vsyncpa [#allocation3], 0
    %11 = vsyncpa [#allocation4], 0
    // Predicated region
    $region2: #{simple_cnn_forward.1} parent=1 // pred_check
      _
    $region3: #{simple_cnn_forward.1} parent=1 // pred_check_branch
      %13 = sbr.rel (0) target = $region5
    $region4: #{simple_cnn_forward.1} parent=1 // pred_region
      _
    $region5: #{simple_cnn_forward.1} parent=1 // pred_fallthru
      _
    // Predicated region
    $region6: #{simple_cnn_forward.1} parent=1 // pred_check
      _
    $region7: #{simple_cnn_forward.1} parent=1 // pred_check_branch
      %15 = sbr.rel (0) target = $region9
    $region8: #{simple_cnn_forward.1} parent=1 // pred_region
      _
    $region9: #{simple_cnn_forward.1} parent=1 // pred_fallthru
      _
    // Predicated region
    $region10: #{simple_cnn_forward.1} parent=1 // pred_check
      _
    $region11: #{simple_cnn_forward.1} parent=1 // pred_check_branch
      %17 = sbr.rel (0) target = $region13
    $region12: #{simple_cnn_forward.1} parent=1 // pred_region
      _
    $region13: #{simple_cnn_forward.1} parent=1 // pred_fallthru
      _
    // Predicated region
    $region14: #{simple_cnn_forward.1} parent=1 // pred_check
      _
    $region15: #{simple_cnn_forward.1} parent=1 // pred_check_branch
      %19 = sbr.rel (0) target = $region17
    $region16: #{simple_cnn_forward.1} parent=1 // pred_region
      %s21 = ssub.s32 12288, 12288
      %22 = vsyncadd [#allocation3], %s21
      %s23 = sshll.u32 [#allocation2], 4
      %s24 = int_to_ptr.vmem [resolvable:$true] %s23
      %29 = dma.hbm_to_vmem [thread:$0]  %s3, 12288, %s24, [#allocation3], 512, 512, 32
    $region17: #{simple_cnn_forward.1} parent=1 // pred_fallthru
      _
    // Predicated region
    $region18: #{simple_cnn_forward.1} parent=1 // pred_check
      _
    $region19: #{simple_cnn_forward.1} parent=1 // pred_check_branch
      %31 = sbr.rel (0) target = $region21
    $region20: #{simple_cnn_forward.1} parent=1 // pred_region
      _
    $region21: #{simple_cnn_forward.1} parent=1 // pred_fallthru
      _
    // Predicated region
    $region22: #{simple_cnn_forward.1} parent=1 // pred_check
      _
    $region23: #{simple_cnn_forward.1} parent=1 // pred_check_branch
      %33 = sbr.rel (0) target = $region25
    $region24: #{simple_cnn_forward.1} parent=1 // pred_region
      %34 = dma.done [#allocation3], 12288
    $region25: #{simple_cnn_forward.1} parent=1 // pred_fallthru
      _
    %v35 = vld [vmem:[%s0] sm:$0xff]
    %v36 = vld [vmem:[%s0 + $0x8] sm:$0xff]
    %v37 = vld [vmem:[%s1] sm:$0xff]
    %v38 = vld [vmem:[%s1 + $0x8] sm:$0xff]
    %v39 = vld [vmem:[%s1 + $0x10] sm:$0xff]
    %v40 = vld [vmem:[%s1 + $0x18] sm:$0xff]
    %v41 = vld [vmem:[%s1 + $0x20] sm:$0xff]
    %v42 = vld [vmem:[%s1 + $0x28] sm:$0xff]
    %v43 = vld [vmem:[%s1 + $0x30] sm:$0xff]
    %v44 = vld [vmem:[%s1 + $0x38] sm:$0xff]
    %v45 = vld [vmem:[%s2] sm:$0xff]
    %v46 = vld [vmem:[%s2 + $0x8] sm:$0xff]
    %v47 = vld [vmem:[%s2 + $0x10] sm:$0xff]
    %v48 = vld [vmem:[%s2 + $0x18] sm:$0xff]
    %v49 = vld [vmem:[%s2 + $0x20] sm:$0xff]
    %v50 = vld [vmem:[%s2 + $0x28] sm:$0xff]
    %v51 = vld [vmem:[%s2 + $0x30] sm:$0xff]
    %v52 = vld [vmem:[%s2 + $0x38] sm:$0xff]
    %v56 = vunpack.c.l.s4 1966171168
    %v57 = vunpack.c.0.s8 %v56
    %v58 = vlaneseq
    %v59 = vshrl.u32 %v58, 7
    %v60 = vsub.s32 %v57, %v59
    %v61 = vrot.slane %v35, %v60
    %v63 = vunpack.c.l.s4 1966171168
    %v64 = vunpack.c.0.s8 %v63
    %v65 = vlaneseq
    %v66 = vshrl.u32 %v65, 7
    %v67 = vsub.s32 %v64, %v66
    %v68 = vrot.slane %v36, %v67
    %v69 = vcombine.low %v61, %v68
    %v70 = vcombine.high %v61, %v68
    %72 = vset.pattern.permute.xlu0 0
    %73 = vperm.xlu0 %72, %v37
    %v74 = vpop.permute.xlu0 %73
    %v76 = vlaneseq
    %v77 = vshrl.u32 %v76, 7
    %v78 = vsub.s32 0, %v77
    %v79 = vrot.slane %v69, %v78
    %v80 = vlaneseq
    %v81 = vshrl.u32 %v80, 7
    %v82 = vsub.s32 1, %v81
    %v83 = vrot.slane %v69, %v82
    %v84 = vlaneseq
    %v85 = vshrl.u32 %v84, 7
    %v86 = vsub.s32 2, %v85
    %v87 = vrot.slane %v69, %v86
    %v88 = vlaneseq
    %v89 = vshrl.u32 %v88, 7
    %v90 = vsub.s32 3, %v89
    %v91 = vrot.slane %v69, %v90
    %v92 = vlaneseq
    %v93 = vshrl.u32 %v92, 7
    %v94 = vsub.s32 4, %v93
    %v95 = vrot.slane %v69, %v94
    %v96 = vlaneseq
    %v97 = vshrl.u32 %v96, 7
    %v98 = vsub.s32 5, %v97
    %v99 = vrot.slane %v69, %v98
    %v100 = vlaneseq
    %v101 = vshrl.u32 %v100, 7
    %v102 = vsub.s32 6, %v101
    %v103 = vrot.slane %v69, %v102
    %v104 = vlaneseq
    %v105 = vshrl.u32 %v104, 7
    %v106 = vsub.s32 7, %v105
    %v107 = vrot.slane %v69, %v106
    %v108 = vlaneseq
    %v109 = vshrl.u32 %v108, 7
    %v110 = vsub.s32 0, %v109
    %v111 = vrot.slane %v70, %v110
    %v112 = vlaneseq
    %v113 = vshrl.u32 %v112, 7
    %v114 = vsub.s32 1, %v113
    %v115 = vrot.slane %v70, %v114
    %v116 = vlaneseq
    %v117 = vshrl.u32 %v116, 7
    %v118 = vsub.s32 2, %v117
    %v119 = vrot.slane %v70, %v118
    %v120 = vlaneseq
    %v121 = vshrl.u32 %v120, 7
    %v122 = vsub.s32 3, %v121
    %v123 = vrot.slane %v70, %v122
    %v124 = vlaneseq
    %v125 = vshrl.u32 %v124, 7
    %v126 = vsub.s32 4, %v125
    %v127 = vrot.slane %v70, %v126
    %v128 = vlaneseq
    %v129 = vshrl.u32 %v128, 7
    %v130 = vsub.s32 5, %v129
    %v131 = vrot.slane %v70, %v130
    %v132 = vlaneseq
    %v133 = vshrl.u32 %v132, 7
    %v134 = vsub.s32 6, %v133
    %v135 = vrot.slane %v70, %v134
    %v136 = vlaneseq
    %v137 = vshrl.u32 %v136, 7
    %v138 = vsub.s32 7, %v137
    %v139 = vrot.slane %v70, %v138
    %v156 = vmul.f32 %v74, %v79
    %v157 = vmul.f32 %v74, %v83
    %v158 = vmul.f32 %v74, %v87
    %v159 = vmul.f32 %v74, %v91
    %v160 = vmul.f32 %v74, %v95
    %v161 = vmul.f32 %v74, %v99
    %v162 = vmul.f32 %v74, %v103
    %v163 = vmul.f32 %v74, %v107
    %v164 = vmul.f32 %v74, %v111
    %v165 = vmul.f32 %v74, %v115
    %v166 = vmul.f32 %v74, %v119
    %v167 = vmul.f32 %v74, %v123
    %v168 = vmul.f32 %v74, %v127
    %v169 = vmul.f32 %v74, %v131
    %v170 = vmul.f32 %v74, %v135
    %v171 = vmul.f32 %v74, %v139
    %172 = vset.pattern.permute.xlu0 1
    %173 = vperm.xlu0 %172, %v37
    %v174 = vpop.permute.xlu0 %173
    %v176 = vmul.f32 %v174, %v79
    %v177 = vmul.f32 %v174, %v83
    %v178 = vmul.f32 %v174, %v87
    %v179 = vmul.f32 %v174, %v91
    %v180 = vmul.f32 %v174, %v95
    %v181 = vmul.f32 %v174, %v99
    %v182 = vmul.f32 %v174, %v103
    %v183 = vmul.f32 %v174, %v107
    %v184 = vmul.f32 %v174, %v111
    %v185 = vmul.f32 %v174, %v115
    %v186 = vmul.f32 %v174, %v119
    %v187 = vmul.f32 %v174, %v123
    %v188 = vmul.f32 %v174, %v127
    %v189 = vmul.f32 %v174, %v131
    %v190 = vmul.f32 %v174, %v135
    %v191 = vmul.f32 %v174, %v139
    %208 = vrot.lane.b32.xlu0 %v176, 127
    %v209 = vpop.permute.xlu0 %208
    %210 = vrot.lane.b32.xlu0 %v177, 127
    %v211 = vpop.permute.xlu0 %210
    %212 = vrot.lane.b32.xlu0 %v178, 127
    %v213 = vpop.permute.xlu0 %212
    %214 = vrot.lane.b32.xlu0 %v179, 127
    %v215 = vpop.permute.xlu0 %214
    %216 = vrot.lane.b32.xlu0 %v180, 127
    %v217 = vpop.permute.xlu0 %216
    %218 = vrot.lane.b32.xlu0 %v181, 127
    %v219 = vpop.permute.xlu0 %218
    %220 = vrot.lane.b32.xlu0 %v182, 127
    %v221 = vpop.permute.xlu0 %220
    %222 = vrot.lane.b32.xlu0 %v183, 127
    %v223 = vpop.permute.xlu0 %222
    %224 = vrot.lane.b32.xlu0 %v184, 127
    %v225 = vpop.permute.xlu0 %224
    %226 = vrot.lane.b32.xlu0 %v185, 127
    %v227 = vpop.permute.xlu0 %226
    %228 = vrot.lane.b32.xlu0 %v186, 127
    %v229 = vpop.permute.xlu0 %228
    %230 = vrot.lane.b32.xlu0 %v187, 127
    %v231 = vpop.permute.xlu0 %230
    %232 = vrot.lane.b32.xlu0 %v188, 127
    %v233 = vpop.permute.xlu0 %232
    %234 = vrot.lane.b32.xlu0 %v189, 127
    %v235 = vpop.permute.xlu0 %234
    %236 = vrot.lane.b32.xlu0 %v190, 127
    %v237 = vpop.permute.xlu0 %236
    %238 = vrot.lane.b32.xlu0 %v191, 127
    %v239 = vpop.permute.xlu0 %238
    %vm240 = vcmask 1039360
    %v241 = vsel %vm240, %v209, %v211
    %v242 = vsel %vm240, %v211, %v213
    %v243 = vsel %vm240, %v213, %v215
    %v244 = vsel %vm240, %v215, %v217
    %v245 = vsel %vm240, %v217, %v219
    %v246 = vsel %vm240, %v219, %v221
    %v247 = vsel %vm240, %v221, %v223
    %v248 = vsel %vm240, %v225, %v227
    %v249 = vsel %vm240, %v227, %v229
    %v250 = vsel %vm240, %v229, %v231
    %v251 = vsel %vm240, %v231, %v233
    %v252 = vsel %vm240, %v233, %v235
    %v253 = vsel %vm240, %v235, %v237
    %v254 = vsel %vm240, %v237, %v239
    %v271 = vadd.f32 %v156, %v241
    %v272 = vadd.f32 %v157, %v242
    %v273 = vadd.f32 %v158, %v243
    %v274 = vadd.f32 %v159, %v244
    %v275 = vadd.f32 %v160, %v245
    %v276 = vadd.f32 %v161, %v246
    %v277 = vadd.f32 %v162, %v247
    %v278 = vadd.f32 %v163, %v223
    %v279 = vadd.f32 %v164, %v248
    %v280 = vadd.f32 %v165, %v249
    %v281 = vadd.f32 %v166, %v250
    %v282 = vadd.f32 %v167, %v251
    %v283 = vadd.f32 %v168, %v252
    %v284 = vadd.f32 %v169, %v253
    %v285 = vadd.f32 %v170, %v254
    %v286 = vadd.f32 %v171, %v239
    %287 = vset.pattern.permute.xlu0 2
    %288 = vperm.xlu0 %287, %v37
    %v289 = vpop.permute.xlu0 %288
    %v291 = vmul.f32 %v289, %v79
    %v292 = vmul.f32 %v289, %v83
    %v293 = vmul.f32 %v289, %v87
    %v294 = vmul.f32 %v289, %v91
    %v295 = vmul.f32 %v289, %v95
    %v296 = vmul.f32 %v289, %v99
    %v297 = vmul.f32 %v289, %v103
    %v298 = vmul.f32 %v289, %v107
    %v299 = vmul.f32 %v289, %v111
    %v300 = vmul.f32 %v289, %v115
    %v301 = vmul.f32 %v289, %v119
    %v302 = vmul.f32 %v289, %v123
    %v303 = vmul.f32 %v289, %v127
    %v304 = vmul.f32 %v289, %v131
    %v305 = vmul.f32 %v289, %v135
    %v306 = vmul.f32 %v289, %v139
    %323 = vrot.lane.b32.xlu0 %v291, 126
    %v324 = vpop.permute.xlu0 %323
    %325 = vrot.lane.b32.xlu0 %v292, 126
    %v326 = vpop.permute.xlu0 %325
    %327 = vrot.lane.b32.xlu0 %v293, 126
    %v328 = vpop.permute.xlu0 %327
    %329 = vrot.lane.b32.xlu0 %v294, 126
    %v330 = vpop.permute.xlu0 %329
    %331 = vrot.lane.b32.xlu0 %v295, 126
    %v332 = vpop.permute.xlu0 %331
    %333 = vrot.lane.b32.xlu0 %v296, 126
    %v334 = vpop.permute.xlu0 %333
    %335 = vrot.lane.b32.xlu0 %v297, 126
    %v336 = vpop.permute.xlu0 %335
    %337 = vrot.lane.b32.xlu0 %v298, 126
    %v338 = vpop.permute.xlu0 %337
    %339 = vrot.lane.b32.xlu0 %v299, 126
    %v340 = vpop.permute.xlu0 %339
    %341 = vrot.lane.b32.xlu0 %v300, 126
    %v342 = vpop.permute.xlu0 %341
    %343 = vrot.lane.b32.xlu0 %v301, 126
    %v344 = vpop.permute.xlu0 %343
    %345 = vrot.lane.b32.xlu0 %v302, 126
    %v346 = vpop.permute.xlu0 %345
    %347 = vrot.lane.b32.xlu0 %v303, 126
    %v348 = vpop.permute.xlu0 %347
    %349 = vrot.lane.b32.xlu0 %v304, 126
    %v350 = vpop.permute.xlu0 %349
    %351 = vrot.lane.b32.xlu0 %v305, 126
    %v352 = vpop.permute.xlu0 %351
    %353 = vrot.lane.b32.xlu0 %v306, 126
    %v354 = vpop.permute.xlu0 %353
    %vm355 = vcmask 1031168
    %v356 = vsel %vm355, %v324, %v326
    %v357 = vsel %vm355, %v326, %v328
    %v358 = vsel %vm355, %v328, %v330
    %v359 = vsel %vm355, %v330, %v332
    %v360 = vsel %vm355, %v332, %v334
    %v361 = vsel %vm355, %v334, %v336
    %v362 = vsel %vm355, %v336, %v338
    %v363 = vsel %vm355, %v340, %v342
    %v364 = vsel %vm355, %v342, %v344
    %v365 = vsel %vm355, %v344, %v346
    %v366 = vsel %vm355, %v346, %v348
    %v367 = vsel %vm355, %v348, %v350
    %v368 = vsel %vm355, %v350, %v352
    %v369 = vsel %vm355, %v352, %v354
    %v386 = vadd.f32 %v271, %v356
    %v387 = vadd.f32 %v272, %v357
    %v388 = vadd.f32 %v273, %v358
    %v389 = vadd.f32 %v274, %v359
    %v390 = vadd.f32 %v275, %v360
    %v391 = vadd.f32 %v276, %v361
    %v392 = vadd.f32 %v277, %v362
    %v393 = vadd.f32 %v278, %v338
    %v394 = vadd.f32 %v279, %v363
    %v395 = vadd.f32 %v280, %v364
    %v396 = vadd.f32 %v281, %v365
    %v397 = vadd.f32 %v282, %v366
    %v398 = vadd.f32 %v283, %v367
    %v399 = vadd.f32 %v284, %v368
    %v400 = vadd.f32 %v285, %v369
    %v401 = vadd.f32 %v286, %v354
    %418 = vrot.lane.b32.xlu0 %v386, 127
    %v419 = vpop.permute.xlu0 %418
    %420 = vrot.lane.b32.xlu0 %v387, 127
    %v421 = vpop.permute.xlu0 %420
    %422 = vrot.lane.b32.xlu0 %v388, 127
    %v423 = vpop.permute.xlu0 %422
    %424 = vrot.lane.b32.xlu0 %v389, 127
    %v425 = vpop.permute.xlu0 %424
    %426 = vrot.lane.b32.xlu0 %v390, 127
    %v427 = vpop.permute.xlu0 %426
    %428 = vrot.lane.b32.xlu0 %v391, 127
    %v429 = vpop.permute.xlu0 %428
    %430 = vrot.lane.b32.xlu0 %v392, 127
    %v431 = vpop.permute.xlu0 %430
    %432 = vrot.lane.b32.xlu0 %v393, 127
    %v433 = vpop.permute.xlu0 %432
    %434 = vrot.lane.b32.xlu0 %v394, 127
    %v435 = vpop.permute.xlu0 %434
    %436 = vrot.lane.b32.xlu0 %v395, 127
    %v437 = vpop.permute.xlu0 %436
    %438 = vrot.lane.b32.xlu0 %v396, 127
    %v439 = vpop.permute.xlu0 %438
    %440 = vrot.lane.b32.xlu0 %v397, 127
    %v441 = vpop.permute.xlu0 %440
    %442 = vrot.lane.b32.xlu0 %v398, 127
    %v443 = vpop.permute.xlu0 %442
    %444 = vrot.lane.b32.xlu0 %v399, 127
    %v445 = vpop.permute.xlu0 %444
    %446 = vrot.lane.b32.xlu0 %v400, 127
    %v447 = vpop.permute.xlu0 %446
    %448 = vrot.lane.b32.xlu0 %v401, 127
    %v449 = vpop.permute.xlu0 %448
    %v450 = vsel %vm240, %v419, %v421
    %v451 = vsel %vm240, %v421, %v423
    %v452 = vsel %vm240, %v423, %v425
    %v453 = vsel %vm240, %v425, %v427
    %v454 = vsel %vm240, %v427, %v429
    %v455 = vsel %vm240, %v429, %v431
    %v456 = vsel %vm240, %v431, %v433
    %v457 = vsel %vm240, %v435, %v437
    %v458 = vsel %vm240, %v437, %v439
    %v459 = vsel %vm240, %v439, %v441
    %v460 = vsel %vm240, %v441, %v443
    %v461 = vsel %vm240, %v443, %v445
    %v462 = vsel %vm240, %v445, %v447
    %v463 = vsel %vm240, %v447, %v449
    %v480 = vmax.f32 %v386, %v450
    %v481 = vmax.f32 %v387, %v451
    %v482 = vmax.f32 %v388, %v452
    %v483 = vmax.f32 %v389, %v453
    %v484 = vmax.f32 %v390, %v454
    %v485 = vmax.f32 %v391, %v455
    %v486 = vmax.f32 %v392, %v456
    %v487 = vmax.f32 %v393, %v433
    %v488 = vmax.f32 %v394, %v457
    %v489 = vmax.f32 %v395, %v458
    %v490 = vmax.f32 %v396, %v459
    %v491 = vmax.f32 %v397, %v460
    %v492 = vmax.f32 %v398, %v461
    %v493 = vmax.f32 %v399, %v462
    %v494 = vmax.f32 %v400, %v463
    %v495 = vmax.f32 %v401, %v449
    %497 = vset.pattern.permute.xlu0 0
    %498 = vperm.xlu0 %497, %v45
    %v499 = vpop.permute.xlu0 %498
    %v501 = vadd.f32 %v480, %v499
    %v502 = vadd.f32 %v481, %v499
    %v503 = vadd.f32 %v482, %v499
    %v504 = vadd.f32 %v483, %v499
    %v505 = vadd.f32 %v484, %v499
    %v506 = vadd.f32 %v485, %v499
    %v507 = vadd.f32 %v486, %v499
    %v508 = vadd.f32 %v487, %v499
    %v509 = vadd.f32 %v488, %v499
    %v510 = vadd.f32 %v489, %v499
    %v511 = vadd.f32 %v490, %v499
    %v512 = vadd.f32 %v491, %v499
    %v513 = vadd.f32 %v492, %v499
    %v514 = vadd.f32 %v493, %v499
    %v515 = vadd.f32 %v494, %v499
    %v516 = vadd.f32 %v495, %v499
    %v517 = vmax.f32 %v501, 0.0
    %v518 = vmax.f32 %v502, 0.0
    %v519 = vmax.f32 %v503, 0.0
    %v520 = vmax.f32 %v504, 0.0
    %v521 = vmax.f32 %v505, 0.0
    %v522 = vmax.f32 %v506, 0.0
    %v523 = vmax.f32 %v507, 0.0
    %v524 = vmax.f32 %v508, 0.0
    %v525 = vmax.f32 %v509, 0.0
    %v526 = vmax.f32 %v510, 0.0
    %v527 = vmax.f32 %v511, 0.0
    %v528 = vmax.f32 %v512, 0.0
    %v529 = vmax.f32 %v513, 0.0
    %v530 = vmax.f32 %v514, 0.0
    %v531 = vmax.f32 %v515, 0.0
    %v532 = vmax.f32 %v516, 0.0
    %v533 = vld [vmem:[#allocation2] sm:$0xff]
    %v534 = vld [vmem:[#allocation2 + $0x8] sm:$0xff]
    %v535 = vld [vmem:[#allocation2 + $0x10] sm:$0xff]
    %v536 = vld [vmem:[#allocation2 + $0x18] sm:$0xff]
    %v537 = vunpack.c.l.bf16 %v533
    %v538 = vunpack.c.h.bf16 %v533
    %v539 = vunpack.c.l.bf16 %v534
    %v540 = vunpack.c.h.bf16 %v534
    %v541 = vunpack.c.l.bf16 %v535
    %v542 = vunpack.c.h.bf16 %v535
    %v543 = vunpack.c.l.bf16 %v536
    %v544 = vunpack.c.h.bf16 %v536
    %v545 = vmul.f32 %v517, %v537
    %v546 = vmul.f32 %v518, %v538
    %v547 = vmul.f32 %v519, %v539
    %v548 = vmul.f32 %v520, %v540
    %v549 = vmul.f32 %v521, %v541
    %v550 = vmul.f32 %v522, %v542
    %v551 = vmul.f32 %v523, %v543
    %v552 = vmul.f32 %v524, %v544
    %v553 = vmul.f32 %v525, %v537
    %v554 = vmul.f32 %v526, %v538
    %v555 = vmul.f32 %v527, %v539
    %v556 = vmul.f32 %v528, %v540
    %v557 = vmul.f32 %v529, %v541
    %v558 = vmul.f32 %v530, %v542
    %v559 = vmul.f32 %v531, %v543
    %v560 = vmul.f32 %v532, %v544
    %v561 = vadd.f32 %v545, %v546
    %v562 = vadd.f32 %v561, %v547
    %v563 = vadd.f32 %v562, %v548
    %v564 = vadd.f32 %v563, %v549
    %v565 = vadd.f32 %v564, %v550
    %v566 = vadd.f32 %v565, %v551
    %vm567 = vcmask 826368
    %v568 = vsel %vm567, %v552, 0.0
    %v569 = vadd.f32 %v566, %v568
    %570 = vadd.xlane.f32.xlu0 %v569
    %v571 = vpop.xlane.xlu0 %570
    %v572 = vadd.f32 %v553, %v554
    %v573 = vadd.f32 %v572, %v555
    %v574 = vadd.f32 %v573, %v556
    %v575 = vadd.f32 %v574, %v557
    %v576 = vadd.f32 %v575, %v558
    %v577 = vadd.f32 %v576, %v559
    %v578 = vsel %vm567, %v560, 0.0
    %v579 = vadd.f32 %v577, %v578
    %580 = vadd.xlane.f32.xlu0 %v579
    %v581 = vpop.xlane.xlu0 %580
    %v584 = vlaneseq
    %v585 = vand.u32 %v584, 127
    %v586 = vlaneseq
    %v587 = vshrl.u32 %v586, 7
    %v588 = vsub.s32 %v585, %v587
    %v589 = vrot.slane %v571, %v588
    %v590 = vlaneseq
    %v591 = vshrl.u32 %v590, 7
    %v592 = vsub.s32 %v585, %v591
    %v593 = vrot.slane %v581, %v592
    %vm594 = vcmask 1041409
    %v595 = vsel %vm594, %v593, %v589
    %vm597 = vcmask 58368
    %v598 = vsel %vm597, %v595, 0.0
    %599 = vadd.xlane.f32.xlu0 %v598
    %v600 = vpop.xlane.xlu0 %599
    %v601 = vadd.f32 %v600, 0.0
    %s602 = scalar_lea.vmem [#allocation2], 256
    %v603 = vld [vmem:[%s602] sm:$0xff]
    %v604 = vld [vmem:[%s602 + $0x8] sm:$0xff]
    %v605 = vld [vmem:[%s602 + $0x10] sm:$0xff]
    %v606 = vld [vmem:[%s602 + $0x18] sm:$0xff]
    %v607 = vunpack.c.l.bf16 %v603
    %v608 = vunpack.c.h.bf16 %v603
    %v609 = vunpack.c.l.bf16 %v604
    %v610 = vunpack.c.h.bf16 %v604
    %v611 = vunpack.c.l.bf16 %v605
    %v612 = vunpack.c.h.bf16 %v605
    %v613 = vunpack.c.l.bf16 %v606
    %v614 = vunpack.c.h.bf16 %v606
    %v615 = vmul.f32 %v517, %v607
    %v616 = vmul.f32 %v518, %v608
    %v617 = vmul.f32 %v519, %v609
    %v618 = vmul.f32 %v520, %v610
    %v619 = vmul.f32 %v521, %v611
    %v620 = vmul.f32 %v522, %v612
    %v621 = vmul.f32 %v523, %v613
    %v622 = vmul.f32 %v524, %v614
    %v623 = vmul.f32 %v525, %v607
    %v624 = vmul.f32 %v526, %v608
    %v625 = vmul.f32 %v527, %v609
    %v626 = vmul.f32 %v528, %v610
    %v627 = vmul.f32 %v529, %v611
    %v628 = vmul.f32 %v530, %v612
    %v629 = vmul.f32 %v531, %v613
    %v630 = vmul.f32 %v532, %v614
    %v631 = vadd.f32 %v615, %v616
    %v632 = vadd.f32 %v631, %v617
    %v633 = vadd.f32 %v632, %v618
    %v634 = vadd.f32 %v633, %v619
    %v635 = vadd.f32 %v634, %v620
    %v636 = vadd.f32 %v635, %v621
    %v637 = vsel %vm567, %v622, 0.0
    %v638 = vadd.f32 %v636, %v637
    %639 = vadd.xlane.f32.xlu0 %v638
    %v640 = vpop.xlane.xlu0 %639
    %v641 = vadd.f32 %v623, %v624
    %v642 = vadd.f32 %v641, %v625
    %v643 = vadd.f32 %v642, %v626
    %v644 = vadd.f32 %v643, %v627
    %v645 = vadd.f32 %v644, %v628
    %v646 = vadd.f32 %v645, %v629
    %v647 = vsel %vm567, %v630, 0.0
    %v648 = vadd.f32 %v646, %v647
    %649 = vadd.xlane.f32.xlu0 %v648
    %v650 = vpop.xlane.xlu0 %649
    %v653 = vlaneseq
    %v654 = vshrl.u32 %v653, 7
    %v655 = vsub.s32 %v585, %v654
    %v656 = vrot.slane %v640, %v655
    %v657 = vlaneseq
    %v658 = vshrl.u32 %v657, 7
    %v659 = vsub.s32 %v585, %v658
    %v660 = vrot.slane %v650, %v659
    %v661 = vsel %vm594, %v660, %v656
    %v663 = vsel %vm597, %v661, 0.0
    %664 = vadd.xlane.f32.xlu0 %v663
    %v665 = vpop.xlane.xlu0 %664
    %v666 = vadd.f32 %v665, 0.0
    %s667 = scalar_lea.vmem [#allocation2], 512
    %v668 = vld [vmem:[%s667] sm:$0xff]
    %v669 = vld [vmem:[%s667 + $0x8] sm:$0xff]
    %v670 = vld [vmem:[%s667 + $0x10] sm:$0xff]
    %v671 = vld [vmem:[%s667 + $0x18] sm:$0xff]
    %v672 = vunpack.c.l.bf16 %v668
    %v673 = vunpack.c.h.bf16 %v668
    %v674 = vunpack.c.l.bf16 %v669
    %v675 = vunpack.c.h.bf16 %v669
    %v676 = vunpack.c.l.bf16 %v670
    %v677 = vunpack.c.h.bf16 %v670
    %v678 = vunpack.c.l.bf16 %v671
    %v679 = vunpack.c.h.bf16 %v671
    %v680 = vmul.f32 %v517, %v672
    %v681 = vmul.f32 %v518, %v673
    %v682 = vmul.f32 %v519, %v674
    %v683 = vmul.f32 %v520, %v675
    %v684 = vmul.f32 %v521, %v676
    %v685 = vmul.f32 %v522, %v677
    %v686 = vmul.f32 %v523, %v678
    %v687 = vmul.f32 %v524, %v679
    %v688 = vmul.f32 %v525, %v672
    %v689 = vmul.f32 %v526, %v673
    %v690 = vmul.f32 %v527, %v674
    %v691 = vmul.f32 %v528, %v675
    %v692 = vmul.f32 %v529, %v676
    %v693 = vmul.f32 %v530, %v677
    %v694 = vmul.f32 %v531, %v678
    %v695 = vmul.f32 %v532, %v679
    %v696 = vadd.f32 %v680, %v681
    %v697 = vadd.f32 %v696, %v682
    %v698 = vadd.f32 %v697, %v683
    %v699 = vadd.f32 %v698, %v684
    %v700 = vadd.f32 %v699, %v685
    %v701 = vadd.f32 %v700, %v686
    %v702 = vsel %vm567, %v687, 0.0
    %v703 = vadd.f32 %v701, %v702
    %704 = vadd.xlane.f32.xlu0 %v703
    %v705 = vpop.xlane.xlu0 %704
    %v706 = vadd.f32 %v688, %v689
    %v707 = vadd.f32 %v706, %v690
    %v708 = vadd.f32 %v707, %v691
    %v709 = vadd.f32 %v708, %v692
    %v710 = vadd.f32 %v709, %v693
    %v711 = vadd.f32 %v710, %v694
    %v712 = vsel %vm567, %v695, 0.0
    %v713 = vadd.f32 %v711, %v712
    %714 = vadd.xlane.f32.xlu0 %v713
    %v715 = vpop.xlane.xlu0 %714
    %v718 = vlaneseq
    %v719 = vshrl.u32 %v718, 7
    %v720 = vsub.s32 %v585, %v719
    %v721 = vrot.slane %v705, %v720
    %v722 = vlaneseq
    %v723 = vshrl.u32 %v722, 7
    %v724 = vsub.s32 %v585, %v723
    %v725 = vrot.slane %v715, %v724
    %v726 = vsel %vm594, %v725, %v721
    %v728 = vsel %vm597, %v726, 0.0
    %729 = vadd.xlane.f32.xlu0 %v728
    %v730 = vpop.xlane.xlu0 %729
    %v731 = vadd.f32 %v730, 0.0
    %733 = vset.pattern.permute.xlu0 0
    %734 = vperm.xlu0 %733, %v38
    %v735 = vpop.permute.xlu0 %734
    %v737 = vmul.f32 %v735, %v79
    %v738 = vmul.f32 %v735, %v83
    %v739 = vmul.f32 %v735, %v87
    %v740 = vmul.f32 %v735, %v91
    %v741 = vmul.f32 %v735, %v95
    %v742 = vmul.f32 %v735, %v99
    %v743 = vmul.f32 %v735, %v103
    %v744 = vmul.f32 %v735, %v107
    %v745 = vmul.f32 %v735, %v111
    %v746 = vmul.f32 %v735, %v115
    %v747 = vmul.f32 %v735, %v119
    %v748 = vmul.f32 %v735, %v123
    %v749 = vmul.f32 %v735, %v127
    %v750 = vmul.f32 %v735, %v131
    %v751 = vmul.f32 %v735, %v135
    %v752 = vmul.f32 %v735, %v139
    %753 = vset.pattern.permute.xlu0 1
    %754 = vperm.xlu0 %753, %v38
    %v755 = vpop.permute.xlu0 %754
    %v757 = vmul.f32 %v755, %v79
    %v758 = vmul.f32 %v755, %v83
    %v759 = vmul.f32 %v755, %v87
    %v760 = vmul.f32 %v755, %v91
    %v761 = vmul.f32 %v755, %v95
    %v762 = vmul.f32 %v755, %v99
    %v763 = vmul.f32 %v755, %v103
    %v764 = vmul.f32 %v755, %v107
    %v765 = vmul.f32 %v755, %v111
    %v766 = vmul.f32 %v755, %v115
    %v767 = vmul.f32 %v755, %v119
    %v768 = vmul.f32 %v755, %v123
    %v769 = vmul.f32 %v755, %v127
    %v770 = vmul.f32 %v755, %v131
    %v771 = vmul.f32 %v755, %v135
    %v772 = vmul.f32 %v755, %v139
    %789 = vrot.lane.b32.xlu0 %v757, 127
    %v790 = vpop.permute.xlu0 %789
    %791 = vrot.lane.b32.xlu0 %v758, 127
    %v792 = vpop.permute.xlu0 %791
    %793 = vrot.lane.b32.xlu0 %v759, 127
    %v794 = vpop.permute.xlu0 %793
    %795 = vrot.lane.b32.xlu0 %v760, 127
    %v796 = vpop.permute.xlu0 %795
    %797 = vrot.lane.b32.xlu0 %v761, 127
    %v798 = vpop.permute.xlu0 %797
    %799 = vrot.lane.b32.xlu0 %v762, 127
    %v800 = vpop.permute.xlu0 %799
    %801 = vrot.lane.b32.xlu0 %v763, 127
    %v802 = vpop.permute.xlu0 %801
    %803 = vrot.lane.b32.xlu0 %v764, 127
    %v804 = vpop.permute.xlu0 %803
    %805 = vrot.lane.b32.xlu0 %v765, 127
    %v806 = vpop.permute.xlu0 %805
    %807 = vrot.lane.b32.xlu0 %v766, 127
    %v808 = vpop.permute.xlu0 %807
    %809 = vrot.lane.b32.xlu0 %v767, 127
    %v810 = vpop.permute.xlu0 %809
    %811 = vrot.lane.b32.xlu0 %v768, 127
    %v812 = vpop.permute.xlu0 %811
    %813 = vrot.lane.b32.xlu0 %v769, 127
    %v814 = vpop.permute.xlu0 %813
    %815 = vrot.lane.b32.xlu0 %v770, 127
    %v816 = vpop.permute.xlu0 %815
    %817 = vrot.lane.b32.xlu0 %v771, 127
    %v818 = vpop.permute.xlu0 %817
    %819 = vrot.lane.b32.xlu0 %v772, 127
    %v820 = vpop.permute.xlu0 %819
    %v821 = vsel %vm240, %v790, %v792
    %v822 = vsel %vm240, %v792, %v794
    %v823 = vsel %vm240, %v794, %v796
    %v824 = vsel %vm240, %v796, %v798
    %v825 = vsel %vm240, %v798, %v800
    %v826 = vsel %vm240, %v800, %v802
    %v827 = vsel %vm240, %v802, %v804
    %v828 = vsel %vm240, %v806, %v808
    %v829 = vsel %vm240, %v808, %v810
    %v830 = vsel %vm240, %v810, %v812
    %v831 = vsel %vm240, %v812, %v814
    %v832 = vsel %vm240, %v814, %v816
    %v833 = vsel %vm240, %v816, %v818
    %v834 = vsel %vm240, %v818, %v820
    %v851 = vadd.f32 %v737, %v821
    %v852 = vadd.f32 %v738, %v822
    %v853 = vadd.f32 %v739, %v823
    %v854 = vadd.f32 %v740, %v824
    %v855 = vadd.f32 %v741, %v825
    %v856 = vadd.f32 %v742, %v826
    %v857 = vadd.f32 %v743, %v827
    %v858 = vadd.f32 %v744, %v804
    %v859 = vadd.f32 %v745, %v828
    %v860 = vadd.f32 %v746, %v829
    %v861 = vadd.f32 %v747, %v830
    %v862 = vadd.f32 %v748, %v831
    %v863 = vadd.f32 %v749, %v832
    %v864 = vadd.f32 %v750, %v833
    %v865 = vadd.f32 %v751, %v834
    %v866 = vadd.f32 %v752, %v820
    %867 = vset.pattern.permute.xlu0 2
    %868 = vperm.xlu0 %867, %v38
    %v869 = vpop.permute.xlu0 %868
    %v871 = vmul.f32 %v869, %v79
    %v872 = vmul.f32 %v869, %v83
    %v873 = vmul.f32 %v869, %v87
    %v874 = vmul.f32 %v869, %v91
    %v875 = vmul.f32 %v869, %v95
    %v876 = vmul.f32 %v869, %v99
    %v877 = vmul.f32 %v869, %v103
    %v878 = vmul.f32 %v869, %v107
    %v879 = vmul.f32 %v869, %v111
    %v880 = vmul.f32 %v869, %v115
    %v881 = vmul.f32 %v869, %v119
    %v882 = vmul.f32 %v869, %v123
    %v883 = vmul.f32 %v869, %v127
    %v884 = vmul.f32 %v869, %v131
    %v885 = vmul.f32 %v869, %v135
    %v886 = vmul.f32 %v869, %v139
    %903 = vrot.lane.b32.xlu0 %v871, 126
    %v904 = vpop.permute.xlu0 %903
    %905 = vrot.lane.b32.xlu0 %v872, 126
    %v906 = vpop.permute.xlu0 %905
    %907 = vrot.lane.b32.xlu0 %v873, 126
    %v908 = vpop.permute.xlu0 %907
    %909 = vrot.lane.b32.xlu0 %v874, 126
    %v910 = vpop.permute.xlu0 %909
    %911 = vrot.lane.b32.xlu0 %v875, 126
    %v912 = vpop.permute.xlu0 %911
    %913 = vrot.lane.b32.xlu0 %v876, 126
    %v914 = vpop.permute.xlu0 %913
    %915 = vrot.lane.b32.xlu0 %v877, 126
    %v916 = vpop.permute.xlu0 %915
    %917 = vrot.lane.b32.xlu0 %v878, 126
    %v918 = vpop.permute.xlu0 %917
    %919 = vrot.lane.b32.xlu0 %v879, 126
    %v920 = vpop.permute.xlu0 %919
    %921 = vrot.lane.b32.xlu0 %v880, 126
    %v922 = vpop.permute.xlu0 %921
    %923 = vrot.lane.b32.xlu0 %v881, 126
    %v924 = vpop.permute.xlu0 %923
    %925 = vrot.lane.b32.xlu0 %v882, 126
    %v926 = vpop.permute.xlu0 %925
    %927 = vrot.lane.b32.xlu0 %v883, 126
    %v928 = vpop.permute.xlu0 %927
    %929 = vrot.lane.b32.xlu0 %v884, 126
    %v930 = vpop.permute.xlu0 %929
    %931 = vrot.lane.b32.xlu0 %v885, 126
    %v932 = vpop.permute.xlu0 %931
    %933 = vrot.lane.b32.xlu0 %v886, 126
    %v934 = vpop.permute.xlu0 %933
    %v935 = vsel %vm355, %v904, %v906
    %v936 = vsel %vm355, %v906, %v908
    %v937 = vsel %vm355, %v908, %v910
    %v938 = vsel %vm355, %v910, %v912
    %v939 = vsel %vm355, %v912, %v914
    %v940 = vsel %vm355, %v914, %v916
    %v941 = vsel %vm355, %v916, %v918
    %v942 = vsel %vm355, %v920, %v922
    %v943 = vsel %vm355, %v922, %v924
    %v944 = vsel %vm355, %v924, %v926
    %v945 = vsel %vm355, %v926, %v928
    %v946 = vsel %vm355, %v928, %v930
    %v947 = vsel %vm355, %v930, %v932
    %v948 = vsel %vm355, %v932, %v934
    %v965 = vadd.f32 %v851, %v935
    %v966 = vadd.f32 %v852, %v936
    %v967 = vadd.f32 %v853, %v937
    %v968 = vadd.f32 %v854, %v938
    %v969 = vadd.f32 %v855, %v939
    %v970 = vadd.f32 %v856, %v940
    %v971 = vadd.f32 %v857, %v941
    %v972 = vadd.f32 %v858, %v918
    %v973 = vadd.f32 %v859, %v942
    %v974 = vadd.f32 %v860, %v943
    %v975 = vadd.f32 %v861, %v944
    %v976 = vadd.f32 %v862, %v945
    %v977 = vadd.f32 %v863, %v946
    %v978 = vadd.f32 %v864, %v947
    %v979 = vadd.f32 %v865, %v948
    %v980 = vadd.f32 %v866, %v934
    %997 = vrot.lane.b32.xlu0 %v965, 127
    %v998 = vpop.permute.xlu0 %997
    %999 = vrot.lane.b32.xlu0 %v966, 127
    %v1000 = vpop.permute.xlu0 %999
    %1001 = vrot.lane.b32.xlu0 %v967, 127
    %v1002 = vpop.permute.xlu0 %1001
    %1003 = vrot.lane.b32.xlu0 %v968, 127
    %v1004 = vpop.permute.xlu0 %1003
    %1005 = vrot.lane.b32.xlu0 %v969, 127
    %v1006 = vpop.permute.xlu0 %1005
    %1007 = vrot.lane.b32.xlu0 %v970, 127
    %v1008 = vpop.permute.xlu0 %1007
    %1009 = vrot.lane.b32.xlu0 %v971, 127
    %v1010 = vpop.permute.xlu0 %1009
    %1011 = vrot.lane.b32.xlu0 %v972, 127
    %v1012 = vpop.permute.xlu0 %1011
    %1013 = vrot.lane.b32.xlu0 %v973, 127
    %v1014 = vpop.permute.xlu0 %1013
    %1015 = vrot.lane.b32.xlu0 %v974, 127
    %v1016 = vpop.permute.xlu0 %1015
    %1017 = vrot.lane.b32.xlu0 %v975, 127
    %v1018 = vpop.permute.xlu0 %1017
    %1019 = vrot.lane.b32.xlu0 %v976, 127
    %v1020 = vpop.permute.xlu0 %1019
    %1021 = vrot.lane.b32.xlu0 %v977, 127
    %v1022 = vpop.permute.xlu0 %1021
    %1023 = vrot.lane.b32.xlu0 %v978, 127
    %v1024 = vpop.permute.xlu0 %1023
    %1025 = vrot.lane.b32.xlu0 %v979, 127
    %v1026 = vpop.permute.xlu0 %1025
    %1027 = vrot.lane.b32.xlu0 %v980, 127
    %v1028 = vpop.permute.xlu0 %1027
    %v1029 = vsel %vm240, %v998, %v1000
    %v1030 = vsel %vm240, %v1000, %v1002
    %v1031 = vsel %vm240, %v1002, %v1004
    %v1032 = vsel %vm240, %v1004, %v1006
    %v1033 = vsel %vm240, %v1006, %v1008
    %v1034 = vsel %vm240, %v1008, %v1010
    %v1035 = vsel %vm240, %v1010, %v1012
    %v1036 = vsel %vm240, %v1014, %v1016
    %v1037 = vsel %vm240, %v1016, %v1018
    %v1038 = vsel %vm240, %v1018, %v1020
    %v1039 = vsel %vm240, %v1020, %v1022
    %v1040 = vsel %vm240, %v1022, %v1024
    %v1041 = vsel %vm240, %v1024, %v1026
    %v1042 = vsel %vm240, %v1026, %v1028
    %v1059 = vmax.f32 %v965, %v1029
    %v1060 = vmax.f32 %v966, %v1030
    %v1061 = vmax.f32 %v967, %v1031
    %v1062 = vmax.f32 %v968, %v1032
    %v1063 = vmax.f32 %v969, %v1033
    %v1064 = vmax.f32 %v970, %v1034
    %v1065 = vmax.f32 %v971, %v1035
    %v1066 = vmax.f32 %v972, %v1012
    %v1067 = vmax.f32 %v973, %v1036
    %v1068 = vmax.f32 %v974, %v1037
    %v1069 = vmax.f32 %v975, %v1038
    %v1070 = vmax.f32 %v976, %v1039
    %v1071 = vmax.f32 %v977, %v1040
    %v1072 = vmax.f32 %v978, %v1041
    %v1073 = vmax.f32 %v979, %v1042
    %v1074 = vmax.f32 %v980, %v1028
    %1076 = vset.pattern.permute.xlu0 0
    %1077 = vperm.xlu0 %1076, %v46
    %v1078 = vpop.permute.xlu0 %1077
    %v1080 = vadd.f32 %v1059, %v1078
    %v1081 = vadd.f32 %v1060, %v1078
    %v1082 = vadd.f32 %v1061, %v1078
    %v1083 = vadd.f32 %v1062, %v1078
    %v1084 = vadd.f32 %v1063, %v1078
    %v1085 = vadd.f32 %v1064, %v1078
    %v1086 = vadd.f32 %v1065, %v1078
    %v1087 = vadd.f32 %v1066, %v1078
    %v1088 = vadd.f32 %v1067, %v1078
    %v1089 = vadd.f32 %v1068, %v1078
    %v1090 = vadd.f32 %v1069, %v1078
    %v1091 = vadd.f32 %v1070, %v1078
    %v1092 = vadd.f32 %v1071, %v1078
    %v1093 = vadd.f32 %v1072, %v1078
    %v1094 = vadd.f32 %v1073, %v1078
    %v1095 = vadd.f32 %v1074, %v1078
    %v1096 = vmax.f32 %v1080, 0.0
    %v1097 = vmax.f32 %v1081, 0.0
    %v1098 = vmax.f32 %v1082, 0.0
    %v1099 = vmax.f32 %v1083, 0.0
    %v1100 = vmax.f32 %v1084, 0.0
    %v1101 = vmax.f32 %v1085, 0.0
    %v1102 = vmax.f32 %v1086, 0.0
    %v1103 = vmax.f32 %v1087, 0.0
    %v1104 = vmax.f32 %v1088, 0.0
    %v1105 = vmax.f32 %v1089, 0.0
    %v1106 = vmax.f32 %v1090, 0.0
    %v1107 = vmax.f32 %v1091, 0.0
    %v1108 = vmax.f32 %v1092, 0.0
    %v1109 = vmax.f32 %v1093, 0.0
    %v1110 = vmax.f32 %v1094, 0.0
    %v1111 = vmax.f32 %v1095, 0.0
    %v1112 = vld [vmem:[#allocation2 + $0x20] sm:$0xff]
    %v1113 = vld [vmem:[#allocation2 + $0x28] sm:$0xff]
    %v1114 = vld [vmem:[#allocation2 + $0x30] sm:$0xff]
    %v1115 = vld [vmem:[#allocation2 + $0x38] sm:$0xff]
    %v1116 = vunpack.c.l.bf16 %v1112
    %v1117 = vunpack.c.h.bf16 %v1112
    %v1118 = vunpack.c.l.bf16 %v1113
    %v1119 = vunpack.c.h.bf16 %v1113
    %v1120 = vunpack.c.l.bf16 %v1114
    %v1121 = vunpack.c.h.bf16 %v1114
    %v1122 = vunpack.c.l.bf16 %v1115
    %v1123 = vunpack.c.h.bf16 %v1115
    %v1124 = vmul.f32 %v1096, %v1116
    %v1125 = vmul.f32 %v1097, %v1117
    %v1126 = vmul.f32 %v1098, %v1118
    %v1127 = vmul.f32 %v1099, %v1119
    %v1128 = vmul.f32 %v1100, %v1120
    %v1129 = vmul.f32 %v1101, %v1121
    %v1130 = vmul.f32 %v1102, %v1122
    %v1131 = vmul.f32 %v1103, %v1123
    %v1132 = vmul.f32 %v1104, %v1116
    %v1133 = vmul.f32 %v1105, %v1117
    %v1134 = vmul.f32 %v1106, %v1118
    %v1135 = vmul.f32 %v1107, %v1119
    %v1136 = vmul.f32 %v1108, %v1120
    %v1137 = vmul.f32 %v1109, %v1121
    %v1138 = vmul.f32 %v1110, %v1122
    %v1139 = vmul.f32 %v1111, %v1123
    %v1140 = vadd.f32 %v1124, %v1125
    %v1141 = vadd.f32 %v1140, %v1126
    %v1142 = vadd.f32 %v1141, %v1127
    %v1143 = vadd.f32 %v1142, %v1128
    %v1144 = vadd.f32 %v1143, %v1129
    %v1145 = vadd.f32 %v1144, %v1130
    %v1146 = vsel %vm567, %v1131, 0.0
    %v1147 = vadd.f32 %v1145, %v1146
    %1148 = vadd.xlane.f32.xlu0 %v1147
    %v1149 = vpop.xlane.xlu0 %1148
    %v1150 = vadd.f32 %v1132, %v1133
    %v1151 = vadd.f32 %v1150, %v1134
    %v1152 = vadd.f32 %v1151, %v1135
    %v1153 = vadd.f32 %v1152, %v1136
    %v1154 = vadd.f32 %v1153, %v1137
    %v1155 = vadd.f32 %v1154, %v1138
    %v1156 = vsel %vm567, %v1139, 0.0
    %v1157 = vadd.f32 %v1155, %v1156
    %1158 = vadd.xlane.f32.xlu0 %v1157
    %v1159 = vpop.xlane.xlu0 %1158
    %v1162 = vlaneseq
    %v1163 = vshrl.u32 %v1162, 7
    %v1164 = vsub.s32 %v585, %v1163
    %v1165 = vrot.slane %v1149, %v1164
    %v1166 = vlaneseq
    %v1167 = vshrl.u32 %v1166, 7
    %v1168 = vsub.s32 %v585, %v1167
    %v1169 = vrot.slane %v1159, %v1168
    %v1170 = vsel %vm594, %v1169, %v1165
    %v1172 = vsel %vm597, %v1170, 0.0
    %1173 = vadd.xlane.f32.xlu0 %v1172
    %v1174 = vpop.xlane.xlu0 %1173
    %v1175 = vadd.f32 %v601, %v1174
    %v1176 = vld [vmem:[%s602 + $0x20] sm:$0xff]
    %v1177 = vld [vmem:[%s602 + $0x28] sm:$0xff]
    %v1178 = vld [vmem:[%s602 + $0x30] sm:$0xff]
    %v1179 = vld [vmem:[%s602 + $0x38] sm:$0xff]
    %v1180 = vunpack.c.l.bf16 %v1176
    %v1181 = vunpack.c.h.bf16 %v1176
    %v1182 = vunpack.c.l.bf16 %v1177
    %v1183 = vunpack.c.h.bf16 %v1177
    %v1184 = vunpack.c.l.bf16 %v1178
    %v1185 = vunpack.c.h.bf16 %v1178
    %v1186 = vunpack.c.l.bf16 %v1179
    %v1187 = vunpack.c.h.bf16 %v1179
    %v1188 = vmul.f32 %v1096, %v1180
    %v1189 = vmul.f32 %v1097, %v1181
    %v1190 = vmul.f32 %v1098, %v1182
    %v1191 = vmul.f32 %v1099, %v1183
    %v1192 = vmul.f32 %v1100, %v1184
    %v1193 = vmul.f32 %v1101, %v1185
    %v1194 = vmul.f32 %v1102, %v1186
    %v1195 = vmul.f32 %v1103, %v1187
    %v1196 = vmul.f32 %v1104, %v1180
    %v1197 = vmul.f32 %v1105, %v1181
    %v1198 = vmul.f32 %v1106, %v1182
    %v1199 = vmul.f32 %v1107, %v1183
    %v1200 = vmul.f32 %v1108, %v1184
    %v1201 = vmul.f32 %v1109, %v1185
    %v1202 = vmul.f32 %v1110, %v1186
    %v1203 = vmul.f32 %v1111, %v1187
    %v1204 = vadd.f32 %v1188, %v1189
    %v1205 = vadd.f32 %v1204, %v1190
    %v1206 = vadd.f32 %v1205, %v1191
    %v1207 = vadd.f32 %v1206, %v1192
    %v1208 = vadd.f32 %v1207, %v1193
    %v1209 = vadd.f32 %v1208, %v1194
    %v1210 = vsel %vm567, %v1195, 0.0
    %v1211 = vadd.f32 %v1209, %v1210
    %1212 = vadd.xlane.f32.xlu0 %v1211
    %v1213 = vpop.xlane.xlu0 %1212
    %v1214 = vadd.f32 %v1196, %v1197
    %v1215 = vadd.f32 %v1214, %v1198
    %v1216 = vadd.f32 %v1215, %v1199
    %v1217 = vadd.f32 %v1216, %v1200
    %v1218 = vadd.f32 %v1217, %v1201
    %v1219 = vadd.f32 %v1218, %v1202
    %v1220 = vsel %vm567, %v1203, 0.0
    %v1221 = vadd.f32 %v1219, %v1220
    %1222 = vadd.xlane.f32.xlu0 %v1221
    %v1223 = vpop.xlane.xlu0 %1222
    %v1226 = vlaneseq
    %v1227 = vshrl.u32 %v1226, 7
    %v1228 = vsub.s32 %v585, %v1227
    %v1229 = vrot.slane %v1213, %v1228
    %v1230 = vlaneseq
    %v1231 = vshrl.u32 %v1230, 7
    %v1232 = vsub.s32 %v585, %v1231
    %v1233 = vrot.slane %v1223, %v1232
    %v1234 = vsel %vm594, %v1233, %v1229
    %v1236 = vsel %vm597, %v1234, 0.0
    %1237 = vadd.xlane.f32.xlu0 %v1236
    %v1238 = vpop.xlane.xlu0 %1237
    %v1239 = vadd.f32 %v666, %v1238
    %v1240 = vld [vmem:[%s667 + $0x20] sm:$0xff]
    %v1241 = vld [vmem:[%s667 + $0x28] sm:$0xff]
    %v1242 = vld [vmem:[%s667 + $0x30] sm:$0xff]
    %v1243 = vld [vmem:[%s667 + $0x38] sm:$0xff]
    %v1244 = vunpack.c.l.bf16 %v1240
    %v1245 = vunpack.c.h.bf16 %v1240
    %v1246 = vunpack.c.l.bf16 %v1241
    %v1247 = vunpack.c.h.bf16 %v1241
    %v1248 = vunpack.c.l.bf16 %v1242
    %v1249 = vunpack.c.h.bf16 %v1242
    %v1250 = vunpack.c.l.bf16 %v1243
    %v1251 = vunpack.c.h.bf16 %v1243
    %v1252 = vmul.f32 %v1096, %v1244
    %v1253 = vmul.f32 %v1097, %v1245
    %v1254 = vmul.f32 %v1098, %v1246
    %v1255 = vmul.f32 %v1099, %v1247
    %v1256 = vmul.f32 %v1100, %v1248
    %v1257 = vmul.f32 %v1101, %v1249
    %v1258 = vmul.f32 %v1102, %v1250
    %v1259 = vmul.f32 %v1103, %v1251
    %v1260 = vmul.f32 %v1104, %v1244
    %v1261 = vmul.f32 %v1105, %v1245
    %v1262 = vmul.f32 %v1106, %v1246
    %v1263 = vmul.f32 %v1107, %v1247
    %v1264 = vmul.f32 %v1108, %v1248
    %v1265 = vmul.f32 %v1109, %v1249
    %v1266 = vmul.f32 %v1110, %v1250
    %v1267 = vmul.f32 %v1111, %v1251
    %v1268 = vadd.f32 %v1252, %v1253
    %v1269 = vadd.f32 %v1268, %v1254
    %v1270 = vadd.f32 %v1269, %v1255
    %v1271 = vadd.f32 %v1270, %v1256
    %v1272 = vadd.f32 %v1271, %v1257
    %v1273 = vadd.f32 %v1272, %v1258
    %v1274 = vsel %vm567, %v1259, 0.0
    %v1275 = vadd.f32 %v1273, %v1274
    %1276 = vadd.xlane.f32.xlu0 %v1275
    %v1277 = vpop.xlane.xlu0 %1276
    %v1278 = vadd.f32 %v1260, %v1261
    %v1279 = vadd.f32 %v1278, %v1262
    %v1280 = vadd.f32 %v1279, %v1263
    %v1281 = vadd.f32 %v1280, %v1264
    %v1282 = vadd.f32 %v1281, %v1265
    %v1283 = vadd.f32 %v1282, %v1266
    %v1284 = vsel %vm567, %v1267, 0.0
    %v1285 = vadd.f32 %v1283, %v1284
    %1286 = vadd.xlane.f32.xlu0 %v1285
    %v1287 = vpop.xlane.xlu0 %1286
    %v1290 = vlaneseq
    %v1291 = vshrl.u32 %v1290, 7
    %v1292 = vsub.s32 %v585, %v1291
    %v1293 = vrot.slane %v1277, %v1292
    %v1294 = vlaneseq
    %v1295 = vshrl.u32 %v1294, 7
    %v1296 = vsub.s32 %v585, %v1295
    %v1297 = vrot.slane %v1287, %v1296
    %v1298 = vsel %vm594, %v1297, %v1293
    %v1300 = vsel %vm597, %v1298, 0.0
    %1301 = vadd.xlane.f32.xlu0 %v1300
    %v1302 = vpop.xlane.xlu0 %1301
    %v1303 = vadd.f32 %v731, %v1302
    %1305 = vset.pattern.permute.xlu0 0
    %1306 = vperm.xlu0 %1305, %v39
    %v1307 = vpop.permute.xlu0 %1306
    %v1309 = vmul.f32 %v1307, %v79
    %v1310 = vmul.f32 %v1307, %v83
    %v1311 = vmul.f32 %v1307, %v87
    %v1312 = vmul.f32 %v1307, %v91
    %v1313 = vmul.f32 %v1307, %v95
    %v1314 = vmul.f32 %v1307, %v99
    %v1315 = vmul.f32 %v1307, %v103
    %v1316 = vmul.f32 %v1307, %v107
    %v1317 = vmul.f32 %v1307, %v111
    %v1318 = vmul.f32 %v1307, %v115
    %v1319 = vmul.f32 %v1307, %v119
    %v1320 = vmul.f32 %v1307, %v123
    %v1321 = vmul.f32 %v1307, %v127
    %v1322 = vmul.f32 %v1307, %v131
    %v1323 = vmul.f32 %v1307, %v135
    %v1324 = vmul.f32 %v1307, %v139
    %1325 = vset.pattern.permute.xlu0 1
    %1326 = vperm.xlu0 %1325, %v39
    %v1327 = vpop.permute.xlu0 %1326
    %v1329 = vmul.f32 %v1327, %v79
    %v1330 = vmul.f32 %v1327, %v83
    %v1331 = vmul.f32 %v1327, %v87
    %v1332 = vmul.f32 %v1327, %v91
    %v1333 = vmul.f32 %v1327, %v95
    %v1334 = vmul.f32 %v1327, %v99
    %v1335 = vmul.f32 %v1327, %v103
    %v1336 = vmul.f32 %v1327, %v107
    %v1337 = vmul.f32 %v1327, %v111
    %v1338 = vmul.f32 %v1327, %v115
    %v1339 = vmul.f32 %v1327, %v119
    %v1340 = vmul.f32 %v1327, %v123
    %v1341 = vmul.f32 %v1327, %v127
    %v1342 = vmul.f32 %v1327, %v131
    %v1343 = vmul.f32 %v1327, %v135
    %v1344 = vmul.f32 %v1327, %v139
    %1361 = vrot.lane.b32.xlu0 %v1329, 127
    %v1362 = vpop.permute.xlu0 %1361
    %1363 = vrot.lane.b32.xlu0 %v1330, 127
    %v1364 = vpop.permute.xlu0 %1363
    %1365 = vrot.lane.b32.xlu0 %v1331, 127
    %v1366 = vpop.permute.xlu0 %1365
    %1367 = vrot.lane.b32.xlu0 %v1332, 127
    %v1368 = vpop.permute.xlu0 %1367
    %1369 = vrot.lane.b32.xlu0 %v1333, 127
    %v1370 = vpop.permute.xlu0 %1369
    %1371 = vrot.lane.b32.xlu0 %v1334, 127
    %v1372 = vpop.permute.xlu0 %1371
    %1373 = vrot.lane.b32.xlu0 %v1335, 127
    %v1374 = vpop.permute.xlu0 %1373
    %1375 = vrot.lane.b32.xlu0 %v1336, 127
    %v1376 = vpop.permute.xlu0 %1375
    %1377 = vrot.lane.b32.xlu0 %v1337, 127
    %v1378 = vpop.permute.xlu0 %1377
    %1379 = vrot.lane.b32.xlu0 %v1338, 127
    %v1380 = vpop.permute.xlu0 %1379
    %1381 = vrot.lane.b32.xlu0 %v1339, 127
    %v1382 = vpop.permute.xlu0 %1381
    %1383 = vrot.lane.b32.xlu0 %v1340, 127
    %v1384 = vpop.permute.xlu0 %1383
    %1385 = vrot.lane.b32.xlu0 %v1341, 127
    %v1386 = vpop.permute.xlu0 %1385
    %1387 = vrot.lane.b32.xlu0 %v1342, 127
    %v1388 = vpop.permute.xlu0 %1387
    %1389 = vrot.lane.b32.xlu0 %v1343, 127
    %v1390 = vpop.permute.xlu0 %1389
    %1391 = vrot.lane.b32.xlu0 %v1344, 127
    %v1392 = vpop.permute.xlu0 %1391
    %v1393 = vsel %vm240, %v1362, %v1364
    %v1394 = vsel %vm240, %v1364, %v1366
    %v1395 = vsel %vm240, %v1366, %v1368
    %v1396 = vsel %vm240, %v1368, %v1370
    %v1397 = vsel %vm240, %v1370, %v1372
    %v1398 = vsel %vm240, %v1372, %v1374
    %v1399 = vsel %vm240, %v1374, %v1376
    %v1400 = vsel %vm240, %v1378, %v1380
    %v1401 = vsel %vm240, %v1380, %v1382
    %v1402 = vsel %vm240, %v1382, %v1384
    %v1403 = vsel %vm240, %v1384, %v1386
    %v1404 = vsel %vm240, %v1386, %v1388
    %v1405 = vsel %vm240, %v1388, %v1390
    %v1406 = vsel %vm240, %v1390, %v1392
    %v1423 = vadd.f32 %v1309, %v1393
    %v1424 = vadd.f32 %v1310, %v1394
    %v1425 = vadd.f32 %v1311, %v1395
    %v1426 = vadd.f32 %v1312, %v1396
    %v1427 = vadd.f32 %v1313, %v1397
    %v1428 = vadd.f32 %v1314, %v1398
    %v1429 = vadd.f32 %v1315, %v1399
    %v1430 = vadd.f32 %v1316, %v1376
    %v1431 = vadd.f32 %v1317, %v1400
    %v1432 = vadd.f32 %v1318, %v1401
    %v1433 = vadd.f32 %v1319, %v1402
    %v1434 = vadd.f32 %v1320, %v1403
    %v1435 = vadd.f32 %v1321, %v1404
    %v1436 = vadd.f32 %v1322, %v1405
    %v1437 = vadd.f32 %v1323, %v1406
    %v1438 = vadd.f32 %v1324, %v1392
    %1439 = vset.pattern.permute.xlu0 2
    %1440 = vperm.xlu0 %1439, %v39
    %v1441 = vpop.permute.xlu0 %1440
    %v1443 = vmul.f32 %v1441, %v79
    %v1444 = vmul.f32 %v1441, %v83
    %v1445 = vmul.f32 %v1441, %v87
    %v1446 = vmul.f32 %v1441, %v91
    %v1447 = vmul.f32 %v1441, %v95
    %v1448 = vmul.f32 %v1441, %v99
    %v1449 = vmul.f32 %v1441, %v103
    %v1450 = vmul.f32 %v1441, %v107
    %v1451 = vmul.f32 %v1441, %v111
    %v1452 = vmul.f32 %v1441, %v115
    %v1453 = vmul.f32 %v1441, %v119
    %v1454 = vmul.f32 %v1441, %v123
    %v1455 = vmul.f32 %v1441, %v127
    %v1456 = vmul.f32 %v1441, %v131
    %v1457 = vmul.f32 %v1441, %v135
    %v1458 = vmul.f32 %v1441, %v139
    %1475 = vrot.lane.b32.xlu0 %v1443, 126
    %v1476 = vpop.permute.xlu0 %1475
    %1477 = vrot.lane.b32.xlu0 %v1444, 126
    %v1478 = vpop.permute.xlu0 %1477
    %1479 = vrot.lane.b32.xlu0 %v1445, 126
    %v1480 = vpop.permute.xlu0 %1479
    %1481 = vrot.lane.b32.xlu0 %v1446, 126
    %v1482 = vpop.permute.xlu0 %1481
    %1483 = vrot.lane.b32.xlu0 %v1447, 126
    %v1484 = vpop.permute.xlu0 %1483
    %1485 = vrot.lane.b32.xlu0 %v1448, 126
    %v1486 = vpop.permute.xlu0 %1485
    %1487 = vrot.lane.b32.xlu0 %v1449, 126
    %v1488 = vpop.permute.xlu0 %1487
    %1489 = vrot.lane.b32.xlu0 %v1450, 126
    %v1490 = vpop.permute.xlu0 %1489
    %1491 = vrot.lane.b32.xlu0 %v1451, 126
    %v1492 = vpop.permute.xlu0 %1491
    %1493 = vrot.lane.b32.xlu0 %v1452, 126
    %v1494 = vpop.permute.xlu0 %1493
    %1495 = vrot.lane.b32.xlu0 %v1453, 126
    %v1496 = vpop.permute.xlu0 %1495
    %1497 = vrot.lane.b32.xlu0 %v1454, 126
    %v1498 = vpop.permute.xlu0 %1497
    %1499 = vrot.lane.b32.xlu0 %v1455, 126
    %v1500 = vpop.permute.xlu0 %1499
    %1501 = vrot.lane.b32.xlu0 %v1456, 126
    %v1502 = vpop.permute.xlu0 %1501
    %1503 = vrot.lane.b32.xlu0 %v1457, 126
    %v1504 = vpop.permute.xlu0 %1503
    %1505 = vrot.lane.b32.xlu0 %v1458, 126
    %v1506 = vpop.permute.xlu0 %1505
    %v1507 = vsel %vm355, %v1476, %v1478
    %v1508 = vsel %vm355, %v1478, %v1480
    %v1509 = vsel %vm355, %v1480, %v1482
    %v1510 = vsel %vm355, %v1482, %v1484
    %v1511 = vsel %vm355, %v1484, %v1486
    %v1512 = vsel %vm355, %v1486, %v1488
    %v1513 = vsel %vm355, %v1488, %v1490
    %v1514 = vsel %vm355, %v1492, %v1494
    %v1515 = vsel %vm355, %v1494, %v1496
    %v1516 = vsel %vm355, %v1496, %v1498
    %v1517 = vsel %vm355, %v1498, %v1500
    %v1518 = vsel %vm355, %v1500, %v1502
    %v1519 = vsel %vm355, %v1502, %v1504
    %v1520 = vsel %vm355, %v1504, %v1506
    %v1537 = vadd.f32 %v1423, %v1507
    %v1538 = vadd.f32 %v1424, %v1508
    %v1539 = vadd.f32 %v1425, %v1509
    %v1540 = vadd.f32 %v1426, %v1510
    %v1541 = vadd.f32 %v1427, %v1511
    %v1542 = vadd.f32 %v1428, %v1512
    %v1543 = vadd.f32 %v1429, %v1513
    %v1544 = vadd.f32 %v1430, %v1490
    %v1545 = vadd.f32 %v1431, %v1514
    %v1546 = vadd.f32 %v1432, %v1515
    %v1547 = vadd.f32 %v1433, %v1516
    %v1548 = vadd.f32 %v1434, %v1517
    %v1549 = vadd.f32 %v1435, %v1518
    %v1550 = vadd.f32 %v1436, %v1519
    %v1551 = vadd.f32 %v1437, %v1520
    %v1552 = vadd.f32 %v1438, %v1506
    %1569 = vrot.lane.b32.xlu0 %v1537, 127
    %v1570 = vpop.permute.xlu0 %1569
    %1571 = vrot.lane.b32.xlu0 %v1538, 127
    %v1572 = vpop.permute.xlu0 %1571
    %1573 = vrot.lane.b32.xlu0 %v1539, 127
    %v1574 = vpop.permute.xlu0 %1573
    %1575 = vrot.lane.b32.xlu0 %v1540, 127
    %v1576 = vpop.permute.xlu0 %1575
    %1577 = vrot.lane.b32.xlu0 %v1541, 127
    %v1578 = vpop.permute.xlu0 %1577
    %1579 = vrot.lane.b32.xlu0 %v1542, 127
    %v1580 = vpop.permute.xlu0 %1579
    %1581 = vrot.lane.b32.xlu0 %v1543, 127
    %v1582 = vpop.permute.xlu0 %1581
    %1583 = vrot.lane.b32.xlu0 %v1544, 127
    %v1584 = vpop.permute.xlu0 %1583
    %1585 = vrot.lane.b32.xlu0 %v1545, 127
    %v1586 = vpop.permute.xlu0 %1585
    %1587 = vrot.lane.b32.xlu0 %v1546, 127
    %v1588 = vpop.permute.xlu0 %1587
    %1589 = vrot.lane.b32.xlu0 %v1547, 127
    %v1590 = vpop.permute.xlu0 %1589
    %1591 = vrot.lane.b32.xlu0 %v1548, 127
    %v1592 = vpop.permute.xlu0 %1591
    %1593 = vrot.lane.b32.xlu0 %v1549, 127
    %v1594 = vpop.permute.xlu0 %1593
    %1595 = vrot.lane.b32.xlu0 %v1550, 127
    %v1596 = vpop.permute.xlu0 %1595
    %1597 = vrot.lane.b32.xlu0 %v1551, 127
    %v1598 = vpop.permute.xlu0 %1597
    %1599 = vrot.lane.b32.xlu0 %v1552, 127
    %v1600 = vpop.permute.xlu0 %1599
    %v1601 = vsel %vm240, %v1570, %v1572
    %v1602 = vsel %vm240, %v1572, %v1574
    %v1603 = vsel %vm240, %v1574, %v1576
    %v1604 = vsel %vm240, %v1576, %v1578
    %v1605 = vsel %vm240, %v1578, %v1580
    %v1606 = vsel %vm240, %v1580, %v1582
    %v1607 = vsel %vm240, %v1582, %v1584
    %v1608 = vsel %vm240, %v1586, %v1588
    %v1609 = vsel %vm240, %v1588, %v1590
    %v1610 = vsel %vm240, %v1590, %v1592
    %v1611 = vsel %vm240, %v1592, %v1594
    %v1612 = vsel %vm240, %v1594, %v1596
    %v1613 = vsel %vm240, %v1596, %v1598
    %v1614 = vsel %vm240, %v1598, %v1600
    %v1631 = vmax.f32 %v1537, %v1601
    %v1632 = vmax.f32 %v1538, %v1602
    %v1633 = vmax.f32 %v1539, %v1603
    %v1634 = vmax.f32 %v1540, %v1604
    %v1635 = vmax.f32 %v1541, %v1605
    %v1636 = vmax.f32 %v1542, %v1606
    %v1637 = vmax.f32 %v1543, %v1607
    %v1638 = vmax.f32 %v1544, %v1584
    %v1639 = vmax.f32 %v1545, %v1608
    %v1640 = vmax.f32 %v1546, %v1609
    %v1641 = vmax.f32 %v1547, %v1610
    %v1642 = vmax.f32 %v1548, %v1611
    %v1643 = vmax.f32 %v1549, %v1612
    %v1644 = vmax.f32 %v1550, %v1613
    %v1645 = vmax.f32 %v1551, %v1614
    %v1646 = vmax.f32 %v1552, %v1600
    %1648 = vset.pattern.permute.xlu0 0
    %1649 = vperm.xlu0 %1648, %v47
    %v1650 = vpop.permute.xlu0 %1649
    %v1652 = vadd.f32 %v1631, %v1650
    %v1653 = vadd.f32 %v1632, %v1650
    %v1654 = vadd.f32 %v1633, %v1650
    %v1655 = vadd.f32 %v1634, %v1650
    %v1656 = vadd.f32 %v1635, %v1650
    %v1657 = vadd.f32 %v1636, %v1650
    %v1658 = vadd.f32 %v1637, %v1650
    %v1659 = vadd.f32 %v1638, %v1650
    %v1660 = vadd.f32 %v1639, %v1650
    %v1661 = vadd.f32 %v1640, %v1650
    %v1662 = vadd.f32 %v1641, %v1650
    %v1663 = vadd.f32 %v1642, %v1650
    %v1664 = vadd.f32 %v1643, %v1650
    %v1665 = vadd.f32 %v1644, %v1650
    %v1666 = vadd.f32 %v1645, %v1650
    %v1667 = vadd.f32 %v1646, %v1650
    %v1668 = vmax.f32 %v1652, 0.0
    %v1669 = vmax.f32 %v1653, 0.0
    %v1670 = vmax.f32 %v1654, 0.0
    %v1671 = vmax.f32 %v1655, 0.0
    %v1672 = vmax.f32 %v1656, 0.0
    %v1673 = vmax.f32 %v1657, 0.0
    %v1674 = vmax.f32 %v1658, 0.0
    %v1675 = vmax.f32 %v1659, 0.0
    %v1676 = vmax.f32 %v1660, 0.0
    %v1677 = vmax.f32 %v1661, 0.0
    %v1678 = vmax.f32 %v1662, 0.0
    %v1679 = vmax.f32 %v1663, 0.0
    %v1680 = vmax.f32 %v1664, 0.0
    %v1681 = vmax.f32 %v1665, 0.0
    %v1682 = vmax.f32 %v1666, 0.0
    %v1683 = vmax.f32 %v1667, 0.0
    %v1684 = vld [vmem:[#allocation2 + $0x40] sm:$0xff]
    %v1685 = vld [vmem:[#allocation2 + $0x48] sm:$0xff]
    %v1686 = vld [vmem:[#allocation2 + $0x50] sm:$0xff]
    %v1687 = vld [vmem:[#allocation2 + $0x58] sm:$0xff]
    %v1688 = vunpack.c.l.bf16 %v1684
    %v1689 = vunpack.c.h.bf16 %v1684
    %v1690 = vunpack.c.l.bf16 %v1685
    %v1691 = vunpack.c.h.bf16 %v1685
    %v1692 = vunpack.c.l.bf16 %v1686
    %v1693 = vunpack.c.h.bf16 %v1686
    %v1694 = vunpack.c.l.bf16 %v1687
    %v1695 = vunpack.c.h.bf16 %v1687
    %v1696 = vmul.f32 %v1668, %v1688
    %v1697 = vmul.f32 %v1669, %v1689
    %v1698 = vmul.f32 %v1670, %v1690
    %v1699 = vmul.f32 %v1671, %v1691
    %v1700 = vmul.f32 %v1672, %v1692
    %v1701 = vmul.f32 %v1673, %v1693
    %v1702 = vmul.f32 %v1674, %v1694
    %v1703 = vmul.f32 %v1675, %v1695
    %v1704 = vmul.f32 %v1676, %v1688
    %v1705 = vmul.f32 %v1677, %v1689
    %v1706 = vmul.f32 %v1678, %v1690
    %v1707 = vmul.f32 %v1679, %v1691
    %v1708 = vmul.f32 %v1680, %v1692
    %v1709 = vmul.f32 %v1681, %v1693
    %v1710 = vmul.f32 %v1682, %v1694
    %v1711 = vmul.f32 %v1683, %v1695
    %v1712 = vadd.f32 %v1696, %v1697
    %v1713 = vadd.f32 %v1712, %v1698
    %v1714 = vadd.f32 %v1713, %v1699
    %v1715 = vadd.f32 %v1714, %v1700
    %v1716 = vadd.f32 %v1715, %v1701
    %v1717 = vadd.f32 %v1716, %v1702
    %v1718 = vsel %vm567, %v1703, 0.0
    %v1719 = vadd.f32 %v1717, %v1718
    %1720 = vadd.xlane.f32.xlu0 %v1719
    %v1721 = vpop.xlane.xlu0 %1720
    %v1722 = vadd.f32 %v1704, %v1705
    %v1723 = vadd.f32 %v1722, %v1706
    %v1724 = vadd.f32 %v1723, %v1707
    %v1725 = vadd.f32 %v1724, %v1708
    %v1726 = vadd.f32 %v1725, %v1709
    %v1727 = vadd.f32 %v1726, %v1710
    %v1728 = vsel %vm567, %v1711, 0.0
    %v1729 = vadd.f32 %v1727, %v1728
    %1730 = vadd.xlane.f32.xlu0 %v1729
    %v1731 = vpop.xlane.xlu0 %1730
    %v1734 = vlaneseq
    %v1735 = vshrl.u32 %v1734, 7
    %v1736 = vsub.s32 %v585, %v1735
    %v1737 = vrot.slane %v1721, %v1736
    %v1738 = vlaneseq
    %v1739 = vshrl.u32 %v1738, 7
    %v1740 = vsub.s32 %v585, %v1739
    %v1741 = vrot.slane %v1731, %v1740
    %v1742 = vsel %vm594, %v1741, %v1737
    %v1744 = vsel %vm597, %v1742, 0.0
    %1745 = vadd.xlane.f32.xlu0 %v1744
    %v1746 = vpop.xlane.xlu0 %1745
    %v1747 = vadd.f32 %v1175, %v1746
    %v1748 = vld [vmem:[%s602 + $0x40] sm:$0xff]
    %v1749 = vld [vmem:[%s602 + $0x48] sm:$0xff]
    %v1750 = vld [vmem:[%s602 + $0x50] sm:$0xff]
    %v1751 = vld [vmem:[%s602 + $0x58] sm:$0xff]
    %v1752 = vunpack.c.l.bf16 %v1748
    %v1753 = vunpack.c.h.bf16 %v1748
    %v1754 = vunpack.c.l.bf16 %v1749
    %v1755 = vunpack.c.h.bf16 %v1749
    %v1756 = vunpack.c.l.bf16 %v1750
    %v1757 = vunpack.c.h.bf16 %v1750
    %v1758 = vunpack.c.l.bf16 %v1751
    %v1759 = vunpack.c.h.bf16 %v1751
    %v1760 = vmul.f32 %v1668, %v1752
    %v1761 = vmul.f32 %v1669, %v1753
    %v1762 = vmul.f32 %v1670, %v1754
    %v1763 = vmul.f32 %v1671, %v1755
    %v1764 = vmul.f32 %v1672, %v1756
    %v1765 = vmul.f32 %v1673, %v1757
    %v1766 = vmul.f32 %v1674, %v1758
    %v1767 = vmul.f32 %v1675, %v1759
    %v1768 = vmul.f32 %v1676, %v1752
    %v1769 = vmul.f32 %v1677, %v1753
    %v1770 = vmul.f32 %v1678, %v1754
    %v1771 = vmul.f32 %v1679, %v1755
    %v1772 = vmul.f32 %v1680, %v1756
    %v1773 = vmul.f32 %v1681, %v1757
    %v1774 = vmul.f32 %v1682, %v1758
    %v1775 = vmul.f32 %v1683, %v1759
    %v1776 = vadd.f32 %v1760, %v1761
    %v1777 = vadd.f32 %v1776, %v1762
    %v1778 = vadd.f32 %v1777, %v1763
    %v1779 = vadd.f32 %v1778, %v1764
    %v1780 = vadd.f32 %v1779, %v1765
    %v1781 = vadd.f32 %v1780, %v1766
    %v1782 = vsel %vm567, %v1767, 0.0
    %v1783 = vadd.f32 %v1781, %v1782
    %1784 = vadd.xlane.f32.xlu0 %v1783
    %v1785 = vpop.xlane.xlu0 %1784
    %v1786 = vadd.f32 %v1768, %v1769
    %v1787 = vadd.f32 %v1786, %v1770
    %v1788 = vadd.f32 %v1787, %v1771
    %v1789 = vadd.f32 %v1788, %v1772
    %v1790 = vadd.f32 %v1789, %v1773
    %v1791 = vadd.f32 %v1790, %v1774
    %v1792 = vsel %vm567, %v1775, 0.0
    %v1793 = vadd.f32 %v1791, %v1792
    %1794 = vadd.xlane.f32.xlu0 %v1793
    %v1795 = vpop.xlane.xlu0 %1794
    %v1798 = vlaneseq
    %v1799 = vshrl.u32 %v1798, 7
    %v1800 = vsub.s32 %v585, %v1799
    %v1801 = vrot.slane %v1785, %v1800
    %v1802 = vlaneseq
    %v1803 = vshrl.u32 %v1802, 7
    %v1804 = vsub.s32 %v585, %v1803
    %v1805 = vrot.slane %v1795, %v1804
    %v1806 = vsel %vm594, %v1805, %v1801
    %v1808 = vsel %vm597, %v1806, 0.0
    %1809 = vadd.xlane.f32.xlu0 %v1808
    %v1810 = vpop.xlane.xlu0 %1809
    %v1811 = vadd.f32 %v1239, %v1810
    %v1812 = vld [vmem:[%s667 + $0x40] sm:$0xff]
    %v1813 = vld [vmem:[%s667 + $0x48] sm:$0xff]
    %v1814 = vld [vmem:[%s667 + $0x50] sm:$0xff]
    %v1815 = vld [vmem:[%s667 + $0x58] sm:$0xff]
    %v1816 = vunpack.c.l.bf16 %v1812
    %v1817 = vunpack.c.h.bf16 %v1812
    %v1818 = vunpack.c.l.bf16 %v1813
    %v1819 = vunpack.c.h.bf16 %v1813
    %v1820 = vunpack.c.l.bf16 %v1814
    %v1821 = vunpack.c.h.bf16 %v1814
    %v1822 = vunpack.c.l.bf16 %v1815
    %v1823 = vunpack.c.h.bf16 %v1815
    %v1824 = vmul.f32 %v1668, %v1816
    %v1825 = vmul.f32 %v1669, %v1817
    %v1826 = vmul.f32 %v1670, %v1818
    %v1827 = vmul.f32 %v1671, %v1819
    %v1828 = vmul.f32 %v1672, %v1820
    %v1829 = vmul.f32 %v1673, %v1821
    %v1830 = vmul.f32 %v1674, %v1822
    %v1831 = vmul.f32 %v1675, %v1823
    %v1832 = vmul.f32 %v1676, %v1816
    %v1833 = vmul.f32 %v1677, %v1817
    %v1834 = vmul.f32 %v1678, %v1818
    %v1835 = vmul.f32 %v1679, %v1819
    %v1836 = vmul.f32 %v1680, %v1820
    %v1837 = vmul.f32 %v1681, %v1821
    %v1838 = vmul.f32 %v1682, %v1822
    %v1839 = vmul.f32 %v1683, %v1823
    %v1840 = vadd.f32 %v1824, %v1825
    %v1841 = vadd.f32 %v1840, %v1826
    %v1842 = vadd.f32 %v1841, %v1827
    %v1843 = vadd.f32 %v1842, %v1828
    %v1844 = vadd.f32 %v1843, %v1829
    %v1845 = vadd.f32 %v1844, %v1830
    %v1846 = vsel %vm567, %v1831, 0.0
    %v1847 = vadd.f32 %v1845, %v1846
    %1848 = vadd.xlane.f32.xlu0 %v1847
    %v1849 = vpop.xlane.xlu0 %1848
    %v1850 = vadd.f32 %v1832, %v1833
    %v1851 = vadd.f32 %v1850, %v1834
    %v1852 = vadd.f32 %v1851, %v1835
    %v1853 = vadd.f32 %v1852, %v1836
    %v1854 = vadd.f32 %v1853, %v1837
    %v1855 = vadd.f32 %v1854, %v1838
    %v1856 = vsel %vm567, %v1839, 0.0
    %v1857 = vadd.f32 %v1855, %v1856
    %1858 = vadd.xlane.f32.xlu0 %v1857
    %v1859 = vpop.xlane.xlu0 %1858
    %v1862 = vlaneseq
    %v1863 = vshrl.u32 %v1862, 7
    %v1864 = vsub.s32 %v585, %v1863
    %v1865 = vrot.slane %v1849, %v1864
    %v1866 = vlaneseq
    %v1867 = vshrl.u32 %v1866, 7
    %v1868 = vsub.s32 %v585, %v1867
    %v1869 = vrot.slane %v1859, %v1868
    %v1870 = vsel %vm594, %v1869, %v1865
    %v1872 = vsel %vm597, %v1870, 0.0
    %1873 = vadd.xlane.f32.xlu0 %v1872
    %v1874 = vpop.xlane.xlu0 %1873
    %v1875 = vadd.f32 %v1303, %v1874
    %1877 = vset.pattern.permute.xlu0 0
    %1878 = vperm.xlu0 %1877, %v40
    %v1879 = vpop.permute.xlu0 %1878
    %v1881 = vmul.f32 %v1879, %v79
    %v1882 = vmul.f32 %v1879, %v83
    %v1883 = vmul.f32 %v1879, %v87
    %v1884 = vmul.f32 %v1879, %v91
    %v1885 = vmul.f32 %v1879, %v95
    %v1886 = vmul.f32 %v1879, %v99
    %v1887 = vmul.f32 %v1879, %v103
    %v1888 = vmul.f32 %v1879, %v107
    %v1889 = vmul.f32 %v1879, %v111
    %v1890 = vmul.f32 %v1879, %v115
    %v1891 = vmul.f32 %v1879, %v119
    %v1892 = vmul.f32 %v1879, %v123
    %v1893 = vmul.f32 %v1879, %v127
    %v1894 = vmul.f32 %v1879, %v131
    %v1895 = vmul.f32 %v1879, %v135
    %v1896 = vmul.f32 %v1879, %v139
    %1897 = vset.pattern.permute.xlu0 1
    %1898 = vperm.xlu0 %1897, %v40
    %v1899 = vpop.permute.xlu0 %1898
    %v1901 = vmul.f32 %v1899, %v79
    %v1902 = vmul.f32 %v1899, %v83
    %v1903 = vmul.f32 %v1899, %v87
    %v1904 = vmul.f32 %v1899, %v91
    %v1905 = vmul.f32 %v1899, %v95
    %v1906 = vmul.f32 %v1899, %v99
    %v1907 = vmul.f32 %v1899, %v103
    %v1908 = vmul.f32 %v1899, %v107
    %v1909 = vmul.f32 %v1899, %v111
    %v1910 = vmul.f32 %v1899, %v115
    %v1911 = vmul.f32 %v1899, %v119
    %v1912 = vmul.f32 %v1899, %v123
    %v1913 = vmul.f32 %v1899, %v127
    %v1914 = vmul.f32 %v1899, %v131
    %v1915 = vmul.f32 %v1899, %v135
    %v1916 = vmul.f32 %v1899, %v139
    %1933 = vrot.lane.b32.xlu0 %v1901, 127
    %v1934 = vpop.permute.xlu0 %1933
    %1935 = vrot.lane.b32.xlu0 %v1902, 127
    %v1936 = vpop.permute.xlu0 %1935
    %1937 = vrot.lane.b32.xlu0 %v1903, 127
    %v1938 = vpop.permute.xlu0 %1937
    %1939 = vrot.lane.b32.xlu0 %v1904, 127
    %v1940 = vpop.permute.xlu0 %1939
    %1941 = vrot.lane.b32.xlu0 %v1905, 127
    %v1942 = vpop.permute.xlu0 %1941
    %1943 = vrot.lane.b32.xlu0 %v1906, 127
    %v1944 = vpop.permute.xlu0 %1943
    %1945 = vrot.lane.b32.xlu0 %v1907, 127
    %v1946 = vpop.permute.xlu0 %1945
    %1947 = vrot.lane.b32.xlu0 %v1908, 127
    %v1948 = vpop.permute.xlu0 %1947
    %1949 = vrot.lane.b32.xlu0 %v1909, 127
    %v1950 = vpop.permute.xlu0 %1949
    %1951 = vrot.lane.b32.xlu0 %v1910, 127
    %v1952 = vpop.permute.xlu0 %1951
    %1953 = vrot.lane.b32.xlu0 %v1911, 127
    %v1954 = vpop.permute.xlu0 %1953
    %1955 = vrot.lane.b32.xlu0 %v1912, 127
    %v1956 = vpop.permute.xlu0 %1955
    %1957 = vrot.lane.b32.xlu0 %v1913, 127
    %v1958 = vpop.permute.xlu0 %1957
    %1959 = vrot.lane.b32.xlu0 %v1914, 127
    %v1960 = vpop.permute.xlu0 %1959
    %1961 = vrot.lane.b32.xlu0 %v1915, 127
    %v1962 = vpop.permute.xlu0 %1961
    %1963 = vrot.lane.b32.xlu0 %v1916, 127
    %v1964 = vpop.permute.xlu0 %1963
    %v1965 = vsel %vm240, %v1934, %v1936
    %v1966 = vsel %vm240, %v1936, %v1938
    %v1967 = vsel %vm240, %v1938, %v1940
    %v1968 = vsel %vm240, %v1940, %v1942
    %v1969 = vsel %vm240, %v1942, %v1944
    %v1970 = vsel %vm240, %v1944, %v1946
    %v1971 = vsel %vm240, %v1946, %v1948
    %v1972 = vsel %vm240, %v1950, %v1952
    %v1973 = vsel %vm240, %v1952, %v1954
    %v1974 = vsel %vm240, %v1954, %v1956
    %v1975 = vsel %vm240, %v1956, %v1958
    %v1976 = vsel %vm240, %v1958, %v1960
    %v1977 = vsel %vm240, %v1960, %v1962
    %v1978 = vsel %vm240, %v1962, %v1964
    %v1995 = vadd.f32 %v1881, %v1965
    %v1996 = vadd.f32 %v1882, %v1966
    %v1997 = vadd.f32 %v1883, %v1967
    %v1998 = vadd.f32 %v1884, %v1968
    %v1999 = vadd.f32 %v1885, %v1969
    %v2000 = vadd.f32 %v1886, %v1970
    %v2001 = vadd.f32 %v1887, %v1971
    %v2002 = vadd.f32 %v1888, %v1948
    %v2003 = vadd.f32 %v1889, %v1972
    %v2004 = vadd.f32 %v1890, %v1973
    %v2005 = vadd.f32 %v1891, %v1974
    %v2006 = vadd.f32 %v1892, %v1975
    %v2007 = vadd.f32 %v1893, %v1976
    %v2008 = vadd.f32 %v1894, %v1977
    %v2009 = vadd.f32 %v1895, %v1978
    %v2010 = vadd.f32 %v1896, %v1964
    %2011 = vset.pattern.permute.xlu0 2
    %2012 = vperm.xlu0 %2011, %v40
    %v2013 = vpop.permute.xlu0 %2012
    %v2015 = vmul.f32 %v2013, %v79
    %v2016 = vmul.f32 %v2013, %v83
    %v2017 = vmul.f32 %v2013, %v87
    %v2018 = vmul.f32 %v2013, %v91
    %v2019 = vmul.f32 %v2013, %v95
    %v2020 = vmul.f32 %v2013, %v99
    %v2021 = vmul.f32 %v2013, %v103
    %v2022 = vmul.f32 %v2013, %v107
    %v2023 = vmul.f32 %v2013, %v111
    %v2024 = vmul.f32 %v2013, %v115
    %v2025 = vmul.f32 %v2013, %v119
    %v2026 = vmul.f32 %v2013, %v123
    %v2027 = vmul.f32 %v2013, %v127
    %v2028 = vmul.f32 %v2013, %v131
    %v2029 = vmul.f32 %v2013, %v135
    %v2030 = vmul.f32 %v2013, %v139
    %2047 = vrot.lane.b32.xlu0 %v2015, 126
    %v2048 = vpop.permute.xlu0 %2047
    %2049 = vrot.lane.b32.xlu0 %v2016, 126
    %v2050 = vpop.permute.xlu0 %2049
    %2051 = vrot.lane.b32.xlu0 %v2017, 126
    %v2052 = vpop.permute.xlu0 %2051
    %2053 = vrot.lane.b32.xlu0 %v2018, 126
    %v2054 = vpop.permute.xlu0 %2053
    %2055 = vrot.lane.b32.xlu0 %v2019, 126
    %v2056 = vpop.permute.xlu0 %2055
    %2057 = vrot.lane.b32.xlu0 %v2020, 126
    %v2058 = vpop.permute.xlu0 %2057
    %2059 = vrot.lane.b32.xlu0 %v2021, 126
    %v2060 = vpop.permute.xlu0 %2059
    %2061 = vrot.lane.b32.xlu0 %v2022, 126
    %v2062 = vpop.permute.xlu0 %2061
    %2063 = vrot.lane.b32.xlu0 %v2023, 126
    %v2064 = vpop.permute.xlu0 %2063
    %2065 = vrot.lane.b32.xlu0 %v2024, 126
    %v2066 = vpop.permute.xlu0 %2065
    %2067 = vrot.lane.b32.xlu0 %v2025, 126
    %v2068 = vpop.permute.xlu0 %2067
    %2069 = vrot.lane.b32.xlu0 %v2026, 126
    %v2070 = vpop.permute.xlu0 %2069
    %2071 = vrot.lane.b32.xlu0 %v2027, 126
    %v2072 = vpop.permute.xlu0 %2071
    %2073 = vrot.lane.b32.xlu0 %v2028, 126
    %v2074 = vpop.permute.xlu0 %2073
    %2075 = vrot.lane.b32.xlu0 %v2029, 126
    %v2076 = vpop.permute.xlu0 %2075
    %2077 = vrot.lane.b32.xlu0 %v2030, 126
    %v2078 = vpop.permute.xlu0 %2077
    %v2079 = vsel %vm355, %v2048, %v2050
    %v2080 = vsel %vm355, %v2050, %v2052
    %v2081 = vsel %vm355, %v2052, %v2054
    %v2082 = vsel %vm355, %v2054, %v2056
    %v2083 = vsel %vm355, %v2056, %v2058
    %v2084 = vsel %vm355, %v2058, %v2060
    %v2085 = vsel %vm355, %v2060, %v2062
    %v2086 = vsel %vm355, %v2064, %v2066
    %v2087 = vsel %vm355, %v2066, %v2068
    %v2088 = vsel %vm355, %v2068, %v2070
    %v2089 = vsel %vm355, %v2070, %v2072
    %v2090 = vsel %vm355, %v2072, %v2074
    %v2091 = vsel %vm355, %v2074, %v2076
    %v2092 = vsel %vm355, %v2076, %v2078
    %v2109 = vadd.f32 %v1995, %v2079
    %v2110 = vadd.f32 %v1996, %v2080
    %v2111 = vadd.f32 %v1997, %v2081
    %v2112 = vadd.f32 %v1998, %v2082
    %v2113 = vadd.f32 %v1999, %v2083
    %v2114 = vadd.f32 %v2000, %v2084
    %v2115 = vadd.f32 %v2001, %v2085
    %v2116 = vadd.f32 %v2002, %v2062
    %v2117 = vadd.f32 %v2003, %v2086
    %v2118 = vadd.f32 %v2004, %v2087
    %v2119 = vadd.f32 %v2005, %v2088
    %v2120 = vadd.f32 %v2006, %v2089
    %v2121 = vadd.f32 %v2007, %v2090
    %v2122 = vadd.f32 %v2008, %v2091
    %v2123 = vadd.f32 %v2009, %v2092
    %v2124 = vadd.f32 %v2010, %v2078
    %2141 = vrot.lane.b32.xlu0 %v2109, 127
    %v2142 = vpop.permute.xlu0 %2141
    %2143 = vrot.lane.b32.xlu0 %v2110, 127
    %v2144 = vpop.permute.xlu0 %2143
    %2145 = vrot.lane.b32.xlu0 %v2111, 127
    %v2146 = vpop.permute.xlu0 %2145
    %2147 = vrot.lane.b32.xlu0 %v2112, 127
    %v2148 = vpop.permute.xlu0 %2147
    %2149 = vrot.lane.b32.xlu0 %v2113, 127
    %v2150 = vpop.permute.xlu0 %2149
    %2151 = vrot.lane.b32.xlu0 %v2114, 127
    %v2152 = vpop.permute.xlu0 %2151
    %2153 = vrot.lane.b32.xlu0 %v2115, 127
    %v2154 = vpop.permute.xlu0 %2153
    %2155 = vrot.lane.b32.xlu0 %v2116, 127
    %v2156 = vpop.permute.xlu0 %2155
    %2157 = vrot.lane.b32.xlu0 %v2117, 127
    %v2158 = vpop.permute.xlu0 %2157
    %2159 = vrot.lane.b32.xlu0 %v2118, 127
    %v2160 = vpop.permute.xlu0 %2159
    %2161 = vrot.lane.b32.xlu0 %v2119, 127
    %v2162 = vpop.permute.xlu0 %2161
    %2163 = vrot.lane.b32.xlu0 %v2120, 127
    %v2164 = vpop.permute.xlu0 %2163
    %2165 = vrot.lane.b32.xlu0 %v2121, 127
    %v2166 = vpop.permute.xlu0 %2165
    %2167 = vrot.lane.b32.xlu0 %v2122, 127
    %v2168 = vpop.permute.xlu0 %2167
    %2169 = vrot.lane.b32.xlu0 %v2123, 127
    %v2170 = vpop.permute.xlu0 %2169
    %2171 = vrot.lane.b32.xlu0 %v2124, 127
    %v2172 = vpop.permute.xlu0 %2171
    %v2173 = vsel %vm240, %v2142, %v2144
    %v2174 = vsel %vm240, %v2144, %v2146
    %v2175 = vsel %vm240, %v2146, %v2148
    %v2176 = vsel %vm240, %v2148, %v2150
    %v2177 = vsel %vm240, %v2150, %v2152
    %v2178 = vsel %vm240, %v2152, %v2154
    %v2179 = vsel %vm240, %v2154, %v2156
    %v2180 = vsel %vm240, %v2158, %v2160
    %v2181 = vsel %vm240, %v2160, %v2162
    %v2182 = vsel %vm240, %v2162, %v2164
    %v2183 = vsel %vm240, %v2164, %v2166
    %v2184 = vsel %vm240, %v2166, %v2168
    %v2185 = vsel %vm240, %v2168, %v2170
    %v2186 = vsel %vm240, %v2170, %v2172
    %v2203 = vmax.f32 %v2109, %v2173
    %v2204 = vmax.f32 %v2110, %v2174
    %v2205 = vmax.f32 %v2111, %v2175
    %v2206 = vmax.f32 %v2112, %v2176
    %v2207 = vmax.f32 %v2113, %v2177
    %v2208 = vmax.f32 %v2114, %v2178
    %v2209 = vmax.f32 %v2115, %v2179
    %v2210 = vmax.f32 %v2116, %v2156
    %v2211 = vmax.f32 %v2117, %v2180
    %v2212 = vmax.f32 %v2118, %v2181
    %v2213 = vmax.f32 %v2119, %v2182
    %v2214 = vmax.f32 %v2120, %v2183
    %v2215 = vmax.f32 %v2121, %v2184
    %v2216 = vmax.f32 %v2122, %v2185
    %v2217 = vmax.f32 %v2123, %v2186
    %v2218 = vmax.f32 %v2124, %v2172
    %2220 = vset.pattern.permute.xlu0 0
    %2221 = vperm.xlu0 %2220, %v48
    %v2222 = vpop.permute.xlu0 %2221
    %v2224 = vadd.f32 %v2203, %v2222
    %v2225 = vadd.f32 %v2204, %v2222
    %v2226 = vadd.f32 %v2205, %v2222
    %v2227 = vadd.f32 %v2206, %v2222
    %v2228 = vadd.f32 %v2207, %v2222
    %v2229 = vadd.f32 %v2208, %v2222
    %v2230 = vadd.f32 %v2209, %v2222
    %v2231 = vadd.f32 %v2210, %v2222
    %v2232 = vadd.f32 %v2211, %v2222
    %v2233 = vadd.f32 %v2212, %v2222
    %v2234 = vadd.f32 %v2213, %v2222
    %v2235 = vadd.f32 %v2214, %v2222
    %v2236 = vadd.f32 %v2215, %v2222
    %v2237 = vadd.f32 %v2216, %v2222
    %v2238 = vadd.f32 %v2217, %v2222
    %v2239 = vadd.f32 %v2218, %v2222
    %v2240 = vmax.f32 %v2224, 0.0
    %v2241 = vmax.f32 %v2225, 0.0
    %v2242 = vmax.f32 %v2226, 0.0
    %v2243 = vmax.f32 %v2227, 0.0
    %v2244 = vmax.f32 %v2228, 0.0
    %v2245 = vmax.f32 %v2229, 0.0
    %v2246 = vmax.f32 %v2230, 0.0
    %v2247 = vmax.f32 %v2231, 0.0
    %v2248 = vmax.f32 %v2232, 0.0
    %v2249 = vmax.f32 %v2233, 0.0
    %v2250 = vmax.f32 %v2234, 0.0
    %v2251 = vmax.f32 %v2235, 0.0
    %v2252 = vmax.f32 %v2236, 0.0
    %v2253 = vmax.f32 %v2237, 0.0
    %v2254 = vmax.f32 %v2238, 0.0
    %v2255 = vmax.f32 %v2239, 0.0
    %v2256 = vld [vmem:[#allocation2 + $0x60] sm:$0xff]
    %v2257 = vld [vmem:[#allocation2 + $0x68] sm:$0xff]
    %v2258 = vld [vmem:[#allocation2 + $0x70] sm:$0xff]
    %v2259 = vld [vmem:[#allocation2 + $0x78] sm:$0xff]
    %v2260 = vunpack.c.l.bf16 %v2256
    %v2261 = vunpack.c.h.bf16 %v2256
    %v2262 = vunpack.c.l.bf16 %v2257
    %v2263 = vunpack.c.h.bf16 %v2257
    %v2264 = vunpack.c.l.bf16 %v2258
    %v2265 = vunpack.c.h.bf16 %v2258
    %v2266 = vunpack.c.l.bf16 %v2259
    %v2267 = vunpack.c.h.bf16 %v2259
    %v2268 = vmul.f32 %v2240, %v2260
    %v2269 = vmul.f32 %v2241, %v2261
    %v2270 = vmul.f32 %v2242, %v2262
    %v2271 = vmul.f32 %v2243, %v2263
    %v2272 = vmul.f32 %v2244, %v2264
    %v2273 = vmul.f32 %v2245, %v2265
    %v2274 = vmul.f32 %v2246, %v2266
    %v2275 = vmul.f32 %v2247, %v2267
    %v2276 = vmul.f32 %v2248, %v2260
    %v2277 = vmul.f32 %v2249, %v2261
    %v2278 = vmul.f32 %v2250, %v2262
    %v2279 = vmul.f32 %v2251, %v2263
    %v2280 = vmul.f32 %v2252, %v2264
    %v2281 = vmul.f32 %v2253, %v2265
    %v2282 = vmul.f32 %v2254, %v2266
    %v2283 = vmul.f32 %v2255, %v2267
    %v2284 = vadd.f32 %v2268, %v2269
    %v2285 = vadd.f32 %v2284, %v2270
    %v2286 = vadd.f32 %v2285, %v2271
    %v2287 = vadd.f32 %v2286, %v2272
    %v2288 = vadd.f32 %v2287, %v2273
    %v2289 = vadd.f32 %v2288, %v2274
    %v2290 = vsel %vm567, %v2275, 0.0
    %v2291 = vadd.f32 %v2289, %v2290
    %2292 = vadd.xlane.f32.xlu0 %v2291
    %v2293 = vpop.xlane.xlu0 %2292
    %v2294 = vadd.f32 %v2276, %v2277
    %v2295 = vadd.f32 %v2294, %v2278
    %v2296 = vadd.f32 %v2295, %v2279
    %v2297 = vadd.f32 %v2296, %v2280
    %v2298 = vadd.f32 %v2297, %v2281
    %v2299 = vadd.f32 %v2298, %v2282
    %v2300 = vsel %vm567, %v2283, 0.0
    %v2301 = vadd.f32 %v2299, %v2300
    %2302 = vadd.xlane.f32.xlu0 %v2301
    %v2303 = vpop.xlane.xlu0 %2302
    %v2306 = vlaneseq
    %v2307 = vshrl.u32 %v2306, 7
    %v2308 = vsub.s32 %v585, %v2307
    %v2309 = vrot.slane %v2293, %v2308
    %v2310 = vlaneseq
    %v2311 = vshrl.u32 %v2310, 7
    %v2312 = vsub.s32 %v585, %v2311
    %v2313 = vrot.slane %v2303, %v2312
    %v2314 = vsel %vm594, %v2313, %v2309
    %v2316 = vsel %vm597, %v2314, 0.0
    %2317 = vadd.xlane.f32.xlu0 %v2316
    %v2318 = vpop.xlane.xlu0 %2317
    %v2319 = vadd.f32 %v1747, %v2318
    %v2320 = vld [vmem:[%s602 + $0x60] sm:$0xff]
    %v2321 = vld [vmem:[%s602 + $0x68] sm:$0xff]
    %v2322 = vld [vmem:[%s602 + $0x70] sm:$0xff]
    %v2323 = vld [vmem:[%s602 + $0x78] sm:$0xff]
    %v2324 = vunpack.c.l.bf16 %v2320
    %v2325 = vunpack.c.h.bf16 %v2320
    %v2326 = vunpack.c.l.bf16 %v2321
    %v2327 = vunpack.c.h.bf16 %v2321
    %v2328 = vunpack.c.l.bf16 %v2322
    %v2329 = vunpack.c.h.bf16 %v2322
    %v2330 = vunpack.c.l.bf16 %v2323
    %v2331 = vunpack.c.h.bf16 %v2323
    %v2332 = vmul.f32 %v2240, %v2324
    %v2333 = vmul.f32 %v2241, %v2325
    %v2334 = vmul.f32 %v2242, %v2326
    %v2335 = vmul.f32 %v2243, %v2327
    %v2336 = vmul.f32 %v2244, %v2328
    %v2337 = vmul.f32 %v2245, %v2329
    %v2338 = vmul.f32 %v2246, %v2330
    %v2339 = vmul.f32 %v2247, %v2331
    %v2340 = vmul.f32 %v2248, %v2324
    %v2341 = vmul.f32 %v2249, %v2325
    %v2342 = vmul.f32 %v2250, %v2326
    %v2343 = vmul.f32 %v2251, %v2327
    %v2344 = vmul.f32 %v2252, %v2328
    %v2345 = vmul.f32 %v2253, %v2329
    %v2346 = vmul.f32 %v2254, %v2330
    %v2347 = vmul.f32 %v2255, %v2331
    %v2348 = vadd.f32 %v2332, %v2333
    %v2349 = vadd.f32 %v2348, %v2334
    %v2350 = vadd.f32 %v2349, %v2335
    %v2351 = vadd.f32 %v2350, %v2336
    %v2352 = vadd.f32 %v2351, %v2337
    %v2353 = vadd.f32 %v2352, %v2338
    %v2354 = vsel %vm567, %v2339, 0.0
    %v2355 = vadd.f32 %v2353, %v2354
    %2356 = vadd.xlane.f32.xlu0 %v2355
    %v2357 = vpop.xlane.xlu0 %2356
    %v2358 = vadd.f32 %v2340, %v2341
    %v2359 = vadd.f32 %v2358, %v2342
    %v2360 = vadd.f32 %v2359, %v2343
    %v2361 = vadd.f32 %v2360, %v2344
    %v2362 = vadd.f32 %v2361, %v2345
    %v2363 = vadd.f32 %v2362, %v2346
    %v2364 = vsel %vm567, %v2347, 0.0
    %v2365 = vadd.f32 %v2363, %v2364
    %2366 = vadd.xlane.f32.xlu0 %v2365
    %v2367 = vpop.xlane.xlu0 %2366
    %v2370 = vlaneseq
    %v2371 = vshrl.u32 %v2370, 7
    %v2372 = vsub.s32 %v585, %v2371
    %v2373 = vrot.slane %v2357, %v2372
    %v2374 = vlaneseq
    %v2375 = vshrl.u32 %v2374, 7
    %v2376 = vsub.s32 %v585, %v2375
    %v2377 = vrot.slane %v2367, %v2376
    %v2378 = vsel %vm594, %v2377, %v2373
    %v2380 = vsel %vm597, %v2378, 0.0
    %2381 = vadd.xlane.f32.xlu0 %v2380
    %v2382 = vpop.xlane.xlu0 %2381
    %v2383 = vadd.f32 %v1811, %v2382
    %v2384 = vld [vmem:[%s667 + $0x60] sm:$0xff]
    %v2385 = vld [vmem:[%s667 + $0x68] sm:$0xff]
    %v2386 = vld [vmem:[%s667 + $0x70] sm:$0xff]
    %v2387 = vld [vmem:[%s667 + $0x78] sm:$0xff]
    %v2388 = vunpack.c.l.bf16 %v2384
    %v2389 = vunpack.c.h.bf16 %v2384
    %v2390 = vunpack.c.l.bf16 %v2385
    %v2391 = vunpack.c.h.bf16 %v2385
    %v2392 = vunpack.c.l.bf16 %v2386
    %v2393 = vunpack.c.h.bf16 %v2386
    %v2394 = vunpack.c.l.bf16 %v2387
    %v2395 = vunpack.c.h.bf16 %v2387
    %v2396 = vmul.f32 %v2240, %v2388
    %v2397 = vmul.f32 %v2241, %v2389
    %v2398 = vmul.f32 %v2242, %v2390
    %v2399 = vmul.f32 %v2243, %v2391
    %v2400 = vmul.f32 %v2244, %v2392
    %v2401 = vmul.f32 %v2245, %v2393
    %v2402 = vmul.f32 %v2246, %v2394
    %v2403 = vmul.f32 %v2247, %v2395
    %v2404 = vmul.f32 %v2248, %v2388
    %v2405 = vmul.f32 %v2249, %v2389
    %v2406 = vmul.f32 %v2250, %v2390
    %v2407 = vmul.f32 %v2251, %v2391
    %v2408 = vmul.f32 %v2252, %v2392
    %v2409 = vmul.f32 %v2253, %v2393
    %v2410 = vmul.f32 %v2254, %v2394
    %v2411 = vmul.f32 %v2255, %v2395
    %v2412 = vadd.f32 %v2396, %v2397
    %v2413 = vadd.f32 %v2412, %v2398
    %v2414 = vadd.f32 %v2413, %v2399
    %v2415 = vadd.f32 %v2414, %v2400
    %v2416 = vadd.f32 %v2415, %v2401
    %v2417 = vadd.f32 %v2416, %v2402
    %v2418 = vsel %vm567, %v2403, 0.0
    %v2419 = vadd.f32 %v2417, %v2418
    %2420 = vadd.xlane.f32.xlu0 %v2419
    %v2421 = vpop.xlane.xlu0 %2420
    %v2422 = vadd.f32 %v2404, %v2405
    %v2423 = vadd.f32 %v2422, %v2406
    %v2424 = vadd.f32 %v2423, %v2407
    %v2425 = vadd.f32 %v2424, %v2408
    %v2426 = vadd.f32 %v2425, %v2409
    %v2427 = vadd.f32 %v2426, %v2410
    %v2428 = vsel %vm567, %v2411, 0.0
    %v2429 = vadd.f32 %v2427, %v2428
    %2430 = vadd.xlane.f32.xlu0 %v2429
    %v2431 = vpop.xlane.xlu0 %2430
    %v2434 = vlaneseq
    %v2435 = vshrl.u32 %v2434, 7
    %v2436 = vsub.s32 %v585, %v2435
    %v2437 = vrot.slane %v2421, %v2436
    %v2438 = vlaneseq
    %v2439 = vshrl.u32 %v2438, 7
    %v2440 = vsub.s32 %v585, %v2439
    %v2441 = vrot.slane %v2431, %v2440
    %v2442 = vsel %vm594, %v2441, %v2437
    %v2444 = vsel %vm597, %v2442, 0.0
    %2445 = vadd.xlane.f32.xlu0 %v2444
    %v2446 = vpop.xlane.xlu0 %2445
    %v2447 = vadd.f32 %v1875, %v2446
    %2449 = vset.pattern.permute.xlu0 0
    %2450 = vperm.xlu0 %2449, %v41
    %v2451 = vpop.permute.xlu0 %2450
    %v2453 = vmul.f32 %v2451, %v79
    %v2454 = vmul.f32 %v2451, %v83
    %v2455 = vmul.f32 %v2451, %v87
    %v2456 = vmul.f32 %v2451, %v91
    %v2457 = vmul.f32 %v2451, %v95
    %v2458 = vmul.f32 %v2451, %v99
    %v2459 = vmul.f32 %v2451, %v103
    %v2460 = vmul.f32 %v2451, %v107
    %v2461 = vmul.f32 %v2451, %v111
    %v2462 = vmul.f32 %v2451, %v115
    %v2463 = vmul.f32 %v2451, %v119
    %v2464 = vmul.f32 %v2451, %v123
    %v2465 = vmul.f32 %v2451, %v127
    %v2466 = vmul.f32 %v2451, %v131
    %v2467 = vmul.f32 %v2451, %v135
    %v2468 = vmul.f32 %v2451, %v139
    %2469 = vset.pattern.permute.xlu0 1
    %2470 = vperm.xlu0 %2469, %v41
    %v2471 = vpop.permute.xlu0 %2470
    %v2473 = vmul.f32 %v2471, %v79
    %v2474 = vmul.f32 %v2471, %v83
    %v2475 = vmul.f32 %v2471, %v87
    %v2476 = vmul.f32 %v2471, %v91
    %v2477 = vmul.f32 %v2471, %v95
    %v2478 = vmul.f32 %v2471, %v99
    %v2479 = vmul.f32 %v2471, %v103
    %v2480 = vmul.f32 %v2471, %v107
    %v2481 = vmul.f32 %v2471, %v111
    %v2482 = vmul.f32 %v2471, %v115
    %v2483 = vmul.f32 %v2471, %v119
    %v2484 = vmul.f32 %v2471, %v123
    %v2485 = vmul.f32 %v2471, %v127
    %v2486 = vmul.f32 %v2471, %v131
    %v2487 = vmul.f32 %v2471, %v135
    %v2488 = vmul.f32 %v2471, %v139
    %2505 = vrot.lane.b32.xlu0 %v2473, 127
    %v2506 = vpop.permute.xlu0 %2505
    %2507 = vrot.lane.b32.xlu0 %v2474, 127
    %v2508 = vpop.permute.xlu0 %2507
    %2509 = vrot.lane.b32.xlu0 %v2475, 127
    %v2510 = vpop.permute.xlu0 %2509
    %2511 = vrot.lane.b32.xlu0 %v2476, 127
    %v2512 = vpop.permute.xlu0 %2511
    %2513 = vrot.lane.b32.xlu0 %v2477, 127
    %v2514 = vpop.permute.xlu0 %2513
    %2515 = vrot.lane.b32.xlu0 %v2478, 127
    %v2516 = vpop.permute.xlu0 %2515
    %2517 = vrot.lane.b32.xlu0 %v2479, 127
    %v2518 = vpop.permute.xlu0 %2517
    %2519 = vrot.lane.b32.xlu0 %v2480, 127
    %v2520 = vpop.permute.xlu0 %2519
    %2521 = vrot.lane.b32.xlu0 %v2481, 127
    %v2522 = vpop.permute.xlu0 %2521
    %2523 = vrot.lane.b32.xlu0 %v2482, 127
    %v2524 = vpop.permute.xlu0 %2523
    %2525 = vrot.lane.b32.xlu0 %v2483, 127
    %v2526 = vpop.permute.xlu0 %2525
    %2527 = vrot.lane.b32.xlu0 %v2484, 127
    %v2528 = vpop.permute.xlu0 %2527
    %2529 = vrot.lane.b32.xlu0 %v2485, 127
    %v2530 = vpop.permute.xlu0 %2529
    %2531 = vrot.lane.b32.xlu0 %v2486, 127
    %v2532 = vpop.permute.xlu0 %2531
    %2533 = vrot.lane.b32.xlu0 %v2487, 127
    %v2534 = vpop.permute.xlu0 %2533
    %2535 = vrot.lane.b32.xlu0 %v2488, 127
    %v2536 = vpop.permute.xlu0 %2535
    %v2537 = vsel %vm240, %v2506, %v2508
    %v2538 = vsel %vm240, %v2508, %v2510
    %v2539 = vsel %vm240, %v2510, %v2512
    %v2540 = vsel %vm240, %v2512, %v2514
    %v2541 = vsel %vm240, %v2514, %v2516
    %v2542 = vsel %vm240, %v2516, %v2518
    %v2543 = vsel %vm240, %v2518, %v2520
    %v2544 = vsel %vm240, %v2522, %v2524
    %v2545 = vsel %vm240, %v2524, %v2526
    %v2546 = vsel %vm240, %v2526, %v2528
    %v2547 = vsel %vm240, %v2528, %v2530
    %v2548 = vsel %vm240, %v2530, %v2532
    %v2549 = vsel %vm240, %v2532, %v2534
    %v2550 = vsel %vm240, %v2534, %v2536
    %v2567 = vadd.f32 %v2453, %v2537
    %v2568 = vadd.f32 %v2454, %v2538
    %v2569 = vadd.f32 %v2455, %v2539
    %v2570 = vadd.f32 %v2456, %v2540
    %v2571 = vadd.f32 %v2457, %v2541
    %v2572 = vadd.f32 %v2458, %v2542
    %v2573 = vadd.f32 %v2459, %v2543
    %v2574 = vadd.f32 %v2460, %v2520
    %v2575 = vadd.f32 %v2461, %v2544
    %v2576 = vadd.f32 %v2462, %v2545
    %v2577 = vadd.f32 %v2463, %v2546
    %v2578 = vadd.f32 %v2464, %v2547
    %v2579 = vadd.f32 %v2465, %v2548
    %v2580 = vadd.f32 %v2466, %v2549
    %v2581 = vadd.f32 %v2467, %v2550
    %v2582 = vadd.f32 %v2468, %v2536
    %2583 = vset.pattern.permute.xlu0 2
    %2584 = vperm.xlu0 %2583, %v41
    %v2585 = vpop.permute.xlu0 %2584
    %v2587 = vmul.f32 %v2585, %v79
    %v2588 = vmul.f32 %v2585, %v83
    %v2589 = vmul.f32 %v2585, %v87
    %v2590 = vmul.f32 %v2585, %v91
    %v2591 = vmul.f32 %v2585, %v95
    %v2592 = vmul.f32 %v2585, %v99
    %v2593 = vmul.f32 %v2585, %v103
    %v2594 = vmul.f32 %v2585, %v107
    %v2595 = vmul.f32 %v2585, %v111
    %v2596 = vmul.f32 %v2585, %v115
    %v2597 = vmul.f32 %v2585, %v119
    %v2598 = vmul.f32 %v2585, %v123
    %v2599 = vmul.f32 %v2585, %v127
    %v2600 = vmul.f32 %v2585, %v131
    %v2601 = vmul.f32 %v2585, %v135
    %v2602 = vmul.f32 %v2585, %v139
    %2619 = vrot.lane.b32.xlu0 %v2587, 126
    %v2620 = vpop.permute.xlu0 %2619
    %2621 = vrot.lane.b32.xlu0 %v2588, 126
    %v2622 = vpop.permute.xlu0 %2621
    %2623 = vrot.lane.b32.xlu0 %v2589, 126
    %v2624 = vpop.permute.xlu0 %2623
    %2625 = vrot.lane.b32.xlu0 %v2590, 126
    %v2626 = vpop.permute.xlu0 %2625
    %2627 = vrot.lane.b32.xlu0 %v2591, 126
    %v2628 = vpop.permute.xlu0 %2627
    %2629 = vrot.lane.b32.xlu0 %v2592, 126
    %v2630 = vpop.permute.xlu0 %2629
    %2631 = vrot.lane.b32.xlu0 %v2593, 126
    %v2632 = vpop.permute.xlu0 %2631
    %2633 = vrot.lane.b32.xlu0 %v2594, 126
    %v2634 = vpop.permute.xlu0 %2633
    %2635 = vrot.lane.b32.xlu0 %v2595, 126
    %v2636 = vpop.permute.xlu0 %2635
    %2637 = vrot.lane.b32.xlu0 %v2596, 126
    %v2638 = vpop.permute.xlu0 %2637
    %2639 = vrot.lane.b32.xlu0 %v2597, 126
    %v2640 = vpop.permute.xlu0 %2639
    %2641 = vrot.lane.b32.xlu0 %v2598, 126
    %v2642 = vpop.permute.xlu0 %2641
    %2643 = vrot.lane.b32.xlu0 %v2599, 126
    %v2644 = vpop.permute.xlu0 %2643
    %2645 = vrot.lane.b32.xlu0 %v2600, 126
    %v2646 = vpop.permute.xlu0 %2645
    %2647 = vrot.lane.b32.xlu0 %v2601, 126
    %v2648 = vpop.permute.xlu0 %2647
    %2649 = vrot.lane.b32.xlu0 %v2602, 126
    %v2650 = vpop.permute.xlu0 %2649
    %v2651 = vsel %vm355, %v2620, %v2622
    %v2652 = vsel %vm355, %v2622, %v2624
    %v2653 = vsel %vm355, %v2624, %v2626
    %v2654 = vsel %vm355, %v2626, %v2628
    %v2655 = vsel %vm355, %v2628, %v2630
    %v2656 = vsel %vm355, %v2630, %v2632
    %v2657 = vsel %vm355, %v2632, %v2634
    %v2658 = vsel %vm355, %v2636, %v2638
    %v2659 = vsel %vm355, %v2638, %v2640
    %v2660 = vsel %vm355, %v2640, %v2642
    %v2661 = vsel %vm355, %v2642, %v2644
    %v2662 = vsel %vm355, %v2644, %v2646
    %v2663 = vsel %vm355, %v2646, %v2648
    %v2664 = vsel %vm355, %v2648, %v2650
    %v2681 = vadd.f32 %v2567, %v2651
    %v2682 = vadd.f32 %v2568, %v2652
    %v2683 = vadd.f32 %v2569, %v2653
    %v2684 = vadd.f32 %v2570, %v2654
    %v2685 = vadd.f32 %v2571, %v2655
    %v2686 = vadd.f32 %v2572, %v2656
    %v2687 = vadd.f32 %v2573, %v2657
    %v2688 = vadd.f32 %v2574, %v2634
    %v2689 = vadd.f32 %v2575, %v2658
    %v2690 = vadd.f32 %v2576, %v2659
    %v2691 = vadd.f32 %v2577, %v2660
    %v2692 = vadd.f32 %v2578, %v2661
    %v2693 = vadd.f32 %v2579, %v2662
    %v2694 = vadd.f32 %v2580, %v2663
    %v2695 = vadd.f32 %v2581, %v2664
    %v2696 = vadd.f32 %v2582, %v2650
    %2713 = vrot.lane.b32.xlu0 %v2681, 127
    %v2714 = vpop.permute.xlu0 %2713
    %2715 = vrot.lane.b32.xlu0 %v2682, 127
    %v2716 = vpop.permute.xlu0 %2715
    %2717 = vrot.lane.b32.xlu0 %v2683, 127
    %v2718 = vpop.permute.xlu0 %2717
    %2719 = vrot.lane.b32.xlu0 %v2684, 127
    %v2720 = vpop.permute.xlu0 %2719
    %2721 = vrot.lane.b32.xlu0 %v2685, 127
    %v2722 = vpop.permute.xlu0 %2721
    %2723 = vrot.lane.b32.xlu0 %v2686, 127
    %v2724 = vpop.permute.xlu0 %2723
    %2725 = vrot.lane.b32.xlu0 %v2687, 127
    %v2726 = vpop.permute.xlu0 %2725
    %2727 = vrot.lane.b32.xlu0 %v2688, 127
    %v2728 = vpop.permute.xlu0 %2727
    %2729 = vrot.lane.b32.xlu0 %v2689, 127
    %v2730 = vpop.permute.xlu0 %2729
    %2731 = vrot.lane.b32.xlu0 %v2690, 127
    %v2732 = vpop.permute.xlu0 %2731
    %2733 = vrot.lane.b32.xlu0 %v2691, 127
    %v2734 = vpop.permute.xlu0 %2733
    %2735 = vrot.lane.b32.xlu0 %v2692, 127
    %v2736 = vpop.permute.xlu0 %2735
    %2737 = vrot.lane.b32.xlu0 %v2693, 127
    %v2738 = vpop.permute.xlu0 %2737
    %2739 = vrot.lane.b32.xlu0 %v2694, 127
    %v2740 = vpop.permute.xlu0 %2739
    %2741 = vrot.lane.b32.xlu0 %v2695, 127
    %v2742 = vpop.permute.xlu0 %2741
    %2743 = vrot.lane.b32.xlu0 %v2696, 127
    %v2744 = vpop.permute.xlu0 %2743
    %v2745 = vsel %vm240, %v2714, %v2716
    %v2746 = vsel %vm240, %v2716, %v2718
    %v2747 = vsel %vm240, %v2718, %v2720
    %v2748 = vsel %vm240, %v2720, %v2722
    %v2749 = vsel %vm240, %v2722, %v2724
    %v2750 = vsel %vm240, %v2724, %v2726
    %v2751 = vsel %vm240, %v2726, %v2728
    %v2752 = vsel %vm240, %v2730, %v2732
    %v2753 = vsel %vm240, %v2732, %v2734
    %v2754 = vsel %vm240, %v2734, %v2736
    %v2755 = vsel %vm240, %v2736, %v2738
    %v2756 = vsel %vm240, %v2738, %v2740
    %v2757 = vsel %vm240, %v2740, %v2742
    %v2758 = vsel %vm240, %v2742, %v2744
    %v2775 = vmax.f32 %v2681, %v2745
    %v2776 = vmax.f32 %v2682, %v2746
    %v2777 = vmax.f32 %v2683, %v2747
    %v2778 = vmax.f32 %v2684, %v2748
    %v2779 = vmax.f32 %v2685, %v2749
    %v2780 = vmax.f32 %v2686, %v2750
    %v2781 = vmax.f32 %v2687, %v2751
    %v2782 = vmax.f32 %v2688, %v2728
    %v2783 = vmax.f32 %v2689, %v2752
    %v2784 = vmax.f32 %v2690, %v2753
    %v2785 = vmax.f32 %v2691, %v2754
    %v2786 = vmax.f32 %v2692, %v2755
    %v2787 = vmax.f32 %v2693, %v2756
    %v2788 = vmax.f32 %v2694, %v2757
    %v2789 = vmax.f32 %v2695, %v2758
    %v2790 = vmax.f32 %v2696, %v2744
    %2792 = vset.pattern.permute.xlu0 0
    %2793 = vperm.xlu0 %2792, %v49
    %v2794 = vpop.permute.xlu0 %2793
    %v2796 = vadd.f32 %v2775, %v2794
    %v2797 = vadd.f32 %v2776, %v2794
    %v2798 = vadd.f32 %v2777, %v2794
    %v2799 = vadd.f32 %v2778, %v2794
    %v2800 = vadd.f32 %v2779, %v2794
    %v2801 = vadd.f32 %v2780, %v2794
    %v2802 = vadd.f32 %v2781, %v2794
    %v2803 = vadd.f32 %v2782, %v2794
    %v2804 = vadd.f32 %v2783, %v2794
    %v2805 = vadd.f32 %v2784, %v2794
    %v2806 = vadd.f32 %v2785, %v2794
    %v2807 = vadd.f32 %v2786, %v2794
    %v2808 = vadd.f32 %v2787, %v2794
    %v2809 = vadd.f32 %v2788, %v2794
    %v2810 = vadd.f32 %v2789, %v2794
    %v2811 = vadd.f32 %v2790, %v2794
    %v2812 = vmax.f32 %v2796, 0.0
    %v2813 = vmax.f32 %v2797, 0.0
    %v2814 = vmax.f32 %v2798, 0.0
    %v2815 = vmax.f32 %v2799, 0.0
    %v2816 = vmax.f32 %v2800, 0.0
    %v2817 = vmax.f32 %v2801, 0.0
    %v2818 = vmax.f32 %v2802, 0.0
    %v2819 = vmax.f32 %v2803, 0.0
    %v2820 = vmax.f32 %v2804, 0.0
    %v2821 = vmax.f32 %v2805, 0.0
    %v2822 = vmax.f32 %v2806, 0.0
    %v2823 = vmax.f32 %v2807, 0.0
    %v2824 = vmax.f32 %v2808, 0.0
    %v2825 = vmax.f32 %v2809, 0.0
    %v2826 = vmax.f32 %v2810, 0.0
    %v2827 = vmax.f32 %v2811, 0.0
    %v2828 = vld [vmem:[#allocation2 + $0x80] sm:$0xff]
    %v2829 = vld [vmem:[#allocation2 + $0x88] sm:$0xff]
    %v2830 = vld [vmem:[#allocation2 + $0x90] sm:$0xff]
    %v2831 = vld [vmem:[#allocation2 + $0x98] sm:$0xff]
    %v2832 = vunpack.c.l.bf16 %v2828
    %v2833 = vunpack.c.h.bf16 %v2828
    %v2834 = vunpack.c.l.bf16 %v2829
    %v2835 = vunpack.c.h.bf16 %v2829
    %v2836 = vunpack.c.l.bf16 %v2830
    %v2837 = vunpack.c.h.bf16 %v2830
    %v2838 = vunpack.c.l.bf16 %v2831
    %v2839 = vunpack.c.h.bf16 %v2831
    %v2840 = vmul.f32 %v2812, %v2832
    %v2841 = vmul.f32 %v2813, %v2833
    %v2842 = vmul.f32 %v2814, %v2834
    %v2843 = vmul.f32 %v2815, %v2835
    %v2844 = vmul.f32 %v2816, %v2836
    %v2845 = vmul.f32 %v2817, %v2837
    %v2846 = vmul.f32 %v2818, %v2838
    %v2847 = vmul.f32 %v2819, %v2839
    %v2848 = vmul.f32 %v2820, %v2832
    %v2849 = vmul.f32 %v2821, %v2833
    %v2850 = vmul.f32 %v2822, %v2834
    %v2851 = vmul.f32 %v2823, %v2835
    %v2852 = vmul.f32 %v2824, %v2836
    %v2853 = vmul.f32 %v2825, %v2837
    %v2854 = vmul.f32 %v2826, %v2838
    %v2855 = vmul.f32 %v2827, %v2839
    %v2856 = vadd.f32 %v2840, %v2841
    %v2857 = vadd.f32 %v2856, %v2842
    %v2858 = vadd.f32 %v2857, %v2843
    %v2859 = vadd.f32 %v2858, %v2844
    %v2860 = vadd.f32 %v2859, %v2845
    %v2861 = vadd.f32 %v2860, %v2846
    %v2862 = vsel %vm567, %v2847, 0.0
    %v2863 = vadd.f32 %v2861, %v2862
    %2864 = vadd.xlane.f32.xlu0 %v2863
    %v2865 = vpop.xlane.xlu0 %2864
    %v2866 = vadd.f32 %v2848, %v2849
    %v2867 = vadd.f32 %v2866, %v2850
    %v2868 = vadd.f32 %v2867, %v2851
    %v2869 = vadd.f32 %v2868, %v2852
    %v2870 = vadd.f32 %v2869, %v2853
    %v2871 = vadd.f32 %v2870, %v2854
    %v2872 = vsel %vm567, %v2855, 0.0
    %v2873 = vadd.f32 %v2871, %v2872
    %2874 = vadd.xlane.f32.xlu0 %v2873
    %v2875 = vpop.xlane.xlu0 %2874
    %v2878 = vlaneseq
    %v2879 = vshrl.u32 %v2878, 7
    %v2880 = vsub.s32 %v585, %v2879
    %v2881 = vrot.slane %v2865, %v2880
    %v2882 = vlaneseq
    %v2883 = vshrl.u32 %v2882, 7
    %v2884 = vsub.s32 %v585, %v2883
    %v2885 = vrot.slane %v2875, %v2884
    %v2886 = vsel %vm594, %v2885, %v2881
    %v2888 = vsel %vm597, %v2886, 0.0
    %2889 = vadd.xlane.f32.xlu0 %v2888
    %v2890 = vpop.xlane.xlu0 %2889
    %v2891 = vadd.f32 %v2319, %v2890
    %v2892 = vld [vmem:[%s602 + $0x80] sm:$0xff]
    %v2893 = vld [vmem:[%s602 + $0x88] sm:$0xff]
    %v2894 = vld [vmem:[%s602 + $0x90] sm:$0xff]
    %v2895 = vld [vmem:[%s602 + $0x98] sm:$0xff]
    %v2896 = vunpack.c.l.bf16 %v2892
    %v2897 = vunpack.c.h.bf16 %v2892
    %v2898 = vunpack.c.l.bf16 %v2893
    %v2899 = vunpack.c.h.bf16 %v2893
    %v2900 = vunpack.c.l.bf16 %v2894
    %v2901 = vunpack.c.h.bf16 %v2894
    %v2902 = vunpack.c.l.bf16 %v2895
    %v2903 = vunpack.c.h.bf16 %v2895
    %v2904 = vmul.f32 %v2812, %v2896
    %v2905 = vmul.f32 %v2813, %v2897
    %v2906 = vmul.f32 %v2814, %v2898
    %v2907 = vmul.f32 %v2815, %v2899
    %v2908 = vmul.f32 %v2816, %v2900
    %v2909 = vmul.f32 %v2817, %v2901
    %v2910 = vmul.f32 %v2818, %v2902
    %v2911 = vmul.f32 %v2819, %v2903
    %v2912 = vmul.f32 %v2820, %v2896
    %v2913 = vmul.f32 %v2821, %v2897
    %v2914 = vmul.f32 %v2822, %v2898
    %v2915 = vmul.f32 %v2823, %v2899
    %v2916 = vmul.f32 %v2824, %v2900
    %v2917 = vmul.f32 %v2825, %v2901
    %v2918 = vmul.f32 %v2826, %v2902
    %v2919 = vmul.f32 %v2827, %v2903
    %v2920 = vadd.f32 %v2904, %v2905
    %v2921 = vadd.f32 %v2920, %v2906
    %v2922 = vadd.f32 %v2921, %v2907
    %v2923 = vadd.f32 %v2922, %v2908
    %v2924 = vadd.f32 %v2923, %v2909
    %v2925 = vadd.f32 %v2924, %v2910
    %v2926 = vsel %vm567, %v2911, 0.0
    %v2927 = vadd.f32 %v2925, %v2926
    %2928 = vadd.xlane.f32.xlu0 %v2927
    %v2929 = vpop.xlane.xlu0 %2928
    %v2930 = vadd.f32 %v2912, %v2913
    %v2931 = vadd.f32 %v2930, %v2914
    %v2932 = vadd.f32 %v2931, %v2915
    %v2933 = vadd.f32 %v2932, %v2916
    %v2934 = vadd.f32 %v2933, %v2917
    %v2935 = vadd.f32 %v2934, %v2918
    %v2936 = vsel %vm567, %v2919, 0.0
    %v2937 = vadd.f32 %v2935, %v2936
    %2938 = vadd.xlane.f32.xlu0 %v2937
    %v2939 = vpop.xlane.xlu0 %2938
    %v2942 = vlaneseq
    %v2943 = vshrl.u32 %v2942, 7
    %v2944 = vsub.s32 %v585, %v2943
    %v2945 = vrot.slane %v2929, %v2944
    %v2946 = vlaneseq
    %v2947 = vshrl.u32 %v2946, 7
    %v2948 = vsub.s32 %v585, %v2947
    %v2949 = vrot.slane %v2939, %v2948
    %v2950 = vsel %vm594, %v2949, %v2945
    %v2952 = vsel %vm597, %v2950, 0.0
    %2953 = vadd.xlane.f32.xlu0 %v2952
    %v2954 = vpop.xlane.xlu0 %2953
    %v2955 = vadd.f32 %v2383, %v2954
    %v2956 = vld [vmem:[%s667 + $0x80] sm:$0xff]
    %v2957 = vld [vmem:[%s667 + $0x88] sm:$0xff]
    %v2958 = vld [vmem:[%s667 + $0x90] sm:$0xff]
    %v2959 = vld [vmem:[%s667 + $0x98] sm:$0xff]
    %v2960 = vunpack.c.l.bf16 %v2956
    %v2961 = vunpack.c.h.bf16 %v2956
    %v2962 = vunpack.c.l.bf16 %v2957
    %v2963 = vunpack.c.h.bf16 %v2957
    %v2964 = vunpack.c.l.bf16 %v2958
    %v2965 = vunpack.c.h.bf16 %v2958
    %v2966 = vunpack.c.l.bf16 %v2959
    %v2967 = vunpack.c.h.bf16 %v2959
    %v2968 = vmul.f32 %v2812, %v2960
    %v2969 = vmul.f32 %v2813, %v2961
    %v2970 = vmul.f32 %v2814, %v2962
    %v2971 = vmul.f32 %v2815, %v2963
    %v2972 = vmul.f32 %v2816, %v2964
    %v2973 = vmul.f32 %v2817, %v2965
    %v2974 = vmul.f32 %v2818, %v2966
    %v2975 = vmul.f32 %v2819, %v2967
    %v2976 = vmul.f32 %v2820, %v2960
    %v2977 = vmul.f32 %v2821, %v2961
    %v2978 = vmul.f32 %v2822, %v2962
    %v2979 = vmul.f32 %v2823, %v2963
    %v2980 = vmul.f32 %v2824, %v2964
    %v2981 = vmul.f32 %v2825, %v2965
    %v2982 = vmul.f32 %v2826, %v2966
    %v2983 = vmul.f32 %v2827, %v2967
    %v2984 = vadd.f32 %v2968, %v2969
    %v2985 = vadd.f32 %v2984, %v2970
    %v2986 = vadd.f32 %v2985, %v2971
    %v2987 = vadd.f32 %v2986, %v2972
    %v2988 = vadd.f32 %v2987, %v2973
    %v2989 = vadd.f32 %v2988, %v2974
    %v2990 = vsel %vm567, %v2975, 0.0
    %v2991 = vadd.f32 %v2989, %v2990
    %2992 = vadd.xlane.f32.xlu0 %v2991
    %v2993 = vpop.xlane.xlu0 %2992
    %v2994 = vadd.f32 %v2976, %v2977
    %v2995 = vadd.f32 %v2994, %v2978
    %v2996 = vadd.f32 %v2995, %v2979
    %v2997 = vadd.f32 %v2996, %v2980
    %v2998 = vadd.f32 %v2997, %v2981
    %v2999 = vadd.f32 %v2998, %v2982
    %v3000 = vsel %vm567, %v2983, 0.0
    %v3001 = vadd.f32 %v2999, %v3000
    %3002 = vadd.xlane.f32.xlu0 %v3001
    %v3003 = vpop.xlane.xlu0 %3002
    %v3006 = vlaneseq
    %v3007 = vshrl.u32 %v3006, 7
    %v3008 = vsub.s32 %v585, %v3007
    %v3009 = vrot.slane %v2993, %v3008
    %v3010 = vlaneseq
    %v3011 = vshrl.u32 %v3010, 7
    %v3012 = vsub.s32 %v585, %v3011
    %v3013 = vrot.slane %v3003, %v3012
    %v3014 = vsel %vm594, %v3013, %v3009
    %v3016 = vsel %vm597, %v3014, 0.0
    %3017 = vadd.xlane.f32.xlu0 %v3016
    %v3018 = vpop.xlane.xlu0 %3017
    %v3019 = vadd.f32 %v2447, %v3018
    %3021 = vset.pattern.permute.xlu0 0
    %3022 = vperm.xlu0 %3021, %v42
    %v3023 = vpop.permute.xlu0 %3022
    %v3025 = vmul.f32 %v3023, %v79
    %v3026 = vmul.f32 %v3023, %v83
    %v3027 = vmul.f32 %v3023, %v87
    %v3028 = vmul.f32 %v3023, %v91
    %v3029 = vmul.f32 %v3023, %v95
    %v3030 = vmul.f32 %v3023, %v99
    %v3031 = vmul.f32 %v3023, %v103
    %v3032 = vmul.f32 %v3023, %v107
    %v3033 = vmul.f32 %v3023, %v111
    %v3034 = vmul.f32 %v3023, %v115
    %v3035 = vmul.f32 %v3023, %v119
    %v3036 = vmul.f32 %v3023, %v123
    %v3037 = vmul.f32 %v3023, %v127
    %v3038 = vmul.f32 %v3023, %v131
    %v3039 = vmul.f32 %v3023, %v135
    %v3040 = vmul.f32 %v3023, %v139
    %3041 = vset.pattern.permute.xlu0 1
    %3042 = vperm.xlu0 %3041, %v42
    %v3043 = vpop.permute.xlu0 %3042
    %v3045 = vmul.f32 %v3043, %v79
    %v3046 = vmul.f32 %v3043, %v83
    %v3047 = vmul.f32 %v3043, %v87
    %v3048 = vmul.f32 %v3043, %v91
    %v3049 = vmul.f32 %v3043, %v95
    %v3050 = vmul.f32 %v3043, %v99
    %v3051 = vmul.f32 %v3043, %v103
    %v3052 = vmul.f32 %v3043, %v107
    %v3053 = vmul.f32 %v3043, %v111
    %v3054 = vmul.f32 %v3043, %v115
    %v3055 = vmul.f32 %v3043, %v119
    %v3056 = vmul.f32 %v3043, %v123
    %v3057 = vmul.f32 %v3043, %v127
    %v3058 = vmul.f32 %v3043, %v131
    %v3059 = vmul.f32 %v3043, %v135
    %v3060 = vmul.f32 %v3043, %v139
    %3077 = vrot.lane.b32.xlu0 %v3045, 127
    %v3078 = vpop.permute.xlu0 %3077
    %3079 = vrot.lane.b32.xlu0 %v3046, 127
    %v3080 = vpop.permute.xlu0 %3079
    %3081 = vrot.lane.b32.xlu0 %v3047, 127
    %v3082 = vpop.permute.xlu0 %3081
    %3083 = vrot.lane.b32.xlu0 %v3048, 127
    %v3084 = vpop.permute.xlu0 %3083
    %3085 = vrot.lane.b32.xlu0 %v3049, 127
    %v3086 = vpop.permute.xlu0 %3085
    %3087 = vrot.lane.b32.xlu0 %v3050, 127
    %v3088 = vpop.permute.xlu0 %3087
    %3089 = vrot.lane.b32.xlu0 %v3051, 127
    %v3090 = vpop.permute.xlu0 %3089
    %3091 = vrot.lane.b32.xlu0 %v3052, 127
    %v3092 = vpop.permute.xlu0 %3091
    %3093 = vrot.lane.b32.xlu0 %v3053, 127
    %v3094 = vpop.permute.xlu0 %3093
    %3095 = vrot.lane.b32.xlu0 %v3054, 127
    %v3096 = vpop.permute.xlu0 %3095
    %3097 = vrot.lane.b32.xlu0 %v3055, 127
    %v3098 = vpop.permute.xlu0 %3097
    %3099 = vrot.lane.b32.xlu0 %v3056, 127
    %v3100 = vpop.permute.xlu0 %3099
    %3101 = vrot.lane.b32.xlu0 %v3057, 127
    %v3102 = vpop.permute.xlu0 %3101
    %3103 = vrot.lane.b32.xlu0 %v3058, 127
    %v3104 = vpop.permute.xlu0 %3103
    %3105 = vrot.lane.b32.xlu0 %v3059, 127
    %v3106 = vpop.permute.xlu0 %3105
    %3107 = vrot.lane.b32.xlu0 %v3060, 127
    %v3108 = vpop.permute.xlu0 %3107
    %v3109 = vsel %vm240, %v3078, %v3080
    %v3110 = vsel %vm240, %v3080, %v3082
    %v3111 = vsel %vm240, %v3082, %v3084
    %v3112 = vsel %vm240, %v3084, %v3086
    %v3113 = vsel %vm240, %v3086, %v3088
    %v3114 = vsel %vm240, %v3088, %v3090
    %v3115 = vsel %vm240, %v3090, %v3092
    %v3116 = vsel %vm240, %v3094, %v3096
    %v3117 = vsel %vm240, %v3096, %v3098
    %v3118 = vsel %vm240, %v3098, %v3100
    %v3119 = vsel %vm240, %v3100, %v3102
    %v3120 = vsel %vm240, %v3102, %v3104
    %v3121 = vsel %vm240, %v3104, %v3106
    %v3122 = vsel %vm240, %v3106, %v3108
    %v3139 = vadd.f32 %v3025, %v3109
    %v3140 = vadd.f32 %v3026, %v3110
    %v3141 = vadd.f32 %v3027, %v3111
    %v3142 = vadd.f32 %v3028, %v3112
    %v3143 = vadd.f32 %v3029, %v3113
    %v3144 = vadd.f32 %v3030, %v3114
    %v3145 = vadd.f32 %v3031, %v3115
    %v3146 = vadd.f32 %v3032, %v3092
    %v3147 = vadd.f32 %v3033, %v3116
    %v3148 = vadd.f32 %v3034, %v3117
    %v3149 = vadd.f32 %v3035, %v3118
    %v3150 = vadd.f32 %v3036, %v3119
    %v3151 = vadd.f32 %v3037, %v3120
    %v3152 = vadd.f32 %v3038, %v3121
    %v3153 = vadd.f32 %v3039, %v3122
    %v3154 = vadd.f32 %v3040, %v3108
    %3155 = vset.pattern.permute.xlu0 2
    %3156 = vperm.xlu0 %3155, %v42
    %v3157 = vpop.permute.xlu0 %3156
    %v3159 = vmul.f32 %v3157, %v79
    %v3160 = vmul.f32 %v3157, %v83
    %v3161 = vmul.f32 %v3157, %v87
    %v3162 = vmul.f32 %v3157, %v91
    %v3163 = vmul.f32 %v3157, %v95
    %v3164 = vmul.f32 %v3157, %v99
    %v3165 = vmul.f32 %v3157, %v103
    %v3166 = vmul.f32 %v3157, %v107
    %v3167 = vmul.f32 %v3157, %v111
    %v3168 = vmul.f32 %v3157, %v115
    %v3169 = vmul.f32 %v3157, %v119
    %v3170 = vmul.f32 %v3157, %v123
    %v3171 = vmul.f32 %v3157, %v127
    %v3172 = vmul.f32 %v3157, %v131
    %v3173 = vmul.f32 %v3157, %v135
    %v3174 = vmul.f32 %v3157, %v139
    %3191 = vrot.lane.b32.xlu0 %v3159, 126
    %v3192 = vpop.permute.xlu0 %3191
    %3193 = vrot.lane.b32.xlu0 %v3160, 126
    %v3194 = vpop.permute.xlu0 %3193
    %3195 = vrot.lane.b32.xlu0 %v3161, 126
    %v3196 = vpop.permute.xlu0 %3195
    %3197 = vrot.lane.b32.xlu0 %v3162, 126
    %v3198 = vpop.permute.xlu0 %3197
    %3199 = vrot.lane.b32.xlu0 %v3163, 126
    %v3200 = vpop.permute.xlu0 %3199
    %3201 = vrot.lane.b32.xlu0 %v3164, 126
    %v3202 = vpop.permute.xlu0 %3201
    %3203 = vrot.lane.b32.xlu0 %v3165, 126
    %v3204 = vpop.permute.xlu0 %3203
    %3205 = vrot.lane.b32.xlu0 %v3166, 126
    %v3206 = vpop.permute.xlu0 %3205
    %3207 = vrot.lane.b32.xlu0 %v3167, 126
    %v3208 = vpop.permute.xlu0 %3207
    %3209 = vrot.lane.b32.xlu0 %v3168, 126
    %v3210 = vpop.permute.xlu0 %3209
    %3211 = vrot.lane.b32.xlu0 %v3169, 126
    %v3212 = vpop.permute.xlu0 %3211
    %3213 = vrot.lane.b32.xlu0 %v3170, 126
    %v3214 = vpop.permute.xlu0 %3213
    %3215 = vrot.lane.b32.xlu0 %v3171, 126
    %v3216 = vpop.permute.xlu0 %3215
    %3217 = vrot.lane.b32.xlu0 %v3172, 126
    %v3218 = vpop.permute.xlu0 %3217
    %3219 = vrot.lane.b32.xlu0 %v3173, 126
    %v3220 = vpop.permute.xlu0 %3219
    %3221 = vrot.lane.b32.xlu0 %v3174, 126
    %v3222 = vpop.permute.xlu0 %3221
    %v3223 = vsel %vm355, %v3192, %v3194
    %v3224 = vsel %vm355, %v3194, %v3196
    %v3225 = vsel %vm355, %v3196, %v3198
    %v3226 = vsel %vm355, %v3198, %v3200
    %v3227 = vsel %vm355, %v3200, %v3202
    %v3228 = vsel %vm355, %v3202, %v3204
    %v3229 = vsel %vm355, %v3204, %v3206
    %v3230 = vsel %vm355, %v3208, %v3210
    %v3231 = vsel %vm355, %v3210, %v3212
    %v3232 = vsel %vm355, %v3212, %v3214
    %v3233 = vsel %vm355, %v3214, %v3216
    %v3234 = vsel %vm355, %v3216, %v3218
    %v3235 = vsel %vm355, %v3218, %v3220
    %v3236 = vsel %vm355, %v3220, %v3222
    %v3253 = vadd.f32 %v3139, %v3223
    %v3254 = vadd.f32 %v3140, %v3224
    %v3255 = vadd.f32 %v3141, %v3225
    %v3256 = vadd.f32 %v3142, %v3226
    %v3257 = vadd.f32 %v3143, %v3227
    %v3258 = vadd.f32 %v3144, %v3228
    %v3259 = vadd.f32 %v3145, %v3229
    %v3260 = vadd.f32 %v3146, %v3206
    %v3261 = vadd.f32 %v3147, %v3230
    %v3262 = vadd.f32 %v3148, %v3231
    %v3263 = vadd.f32 %v3149, %v3232
    %v3264 = vadd.f32 %v3150, %v3233
    %v3265 = vadd.f32 %v3151, %v3234
    %v3266 = vadd.f32 %v3152, %v3235
    %v3267 = vadd.f32 %v3153, %v3236
    %v3268 = vadd.f32 %v3154, %v3222
    %3285 = vrot.lane.b32.xlu0 %v3253, 127
    %v3286 = vpop.permute.xlu0 %3285
    %3287 = vrot.lane.b32.xlu0 %v3254, 127
    %v3288 = vpop.permute.xlu0 %3287
    %3289 = vrot.lane.b32.xlu0 %v3255, 127
    %v3290 = vpop.permute.xlu0 %3289
    %3291 = vrot.lane.b32.xlu0 %v3256, 127
    %v3292 = vpop.permute.xlu0 %3291
    %3293 = vrot.lane.b32.xlu0 %v3257, 127
    %v3294 = vpop.permute.xlu0 %3293
    %3295 = vrot.lane.b32.xlu0 %v3258, 127
    %v3296 = vpop.permute.xlu0 %3295
    %3297 = vrot.lane.b32.xlu0 %v3259, 127
    %v3298 = vpop.permute.xlu0 %3297
    %3299 = vrot.lane.b32.xlu0 %v3260, 127
    %v3300 = vpop.permute.xlu0 %3299
    %3301 = vrot.lane.b32.xlu0 %v3261, 127
    %v3302 = vpop.permute.xlu0 %3301
    %3303 = vrot.lane.b32.xlu0 %v3262, 127
    %v3304 = vpop.permute.xlu0 %3303
    %3305 = vrot.lane.b32.xlu0 %v3263, 127
    %v3306 = vpop.permute.xlu0 %3305
    %3307 = vrot.lane.b32.xlu0 %v3264, 127
    %v3308 = vpop.permute.xlu0 %3307
    %3309 = vrot.lane.b32.xlu0 %v3265, 127
    %v3310 = vpop.permute.xlu0 %3309
    %3311 = vrot.lane.b32.xlu0 %v3266, 127
    %v3312 = vpop.permute.xlu0 %3311
    %3313 = vrot.lane.b32.xlu0 %v3267, 127
    %v3314 = vpop.permute.xlu0 %3313
    %3315 = vrot.lane.b32.xlu0 %v3268, 127
    %v3316 = vpop.permute.xlu0 %3315
    %v3317 = vsel %vm240, %v3286, %v3288
    %v3318 = vsel %vm240, %v3288, %v3290
    %v3319 = vsel %vm240, %v3290, %v3292
    %v3320 = vsel %vm240, %v3292, %v3294
    %v3321 = vsel %vm240, %v3294, %v3296
    %v3322 = vsel %vm240, %v3296, %v3298
    %v3323 = vsel %vm240, %v3298, %v3300
    %v3324 = vsel %vm240, %v3302, %v3304
    %v3325 = vsel %vm240, %v3304, %v3306
    %v3326 = vsel %vm240, %v3306, %v3308
    %v3327 = vsel %vm240, %v3308, %v3310
    %v3328 = vsel %vm240, %v3310, %v3312
    %v3329 = vsel %vm240, %v3312, %v3314
    %v3330 = vsel %vm240, %v3314, %v3316
    %v3347 = vmax.f32 %v3253, %v3317
    %v3348 = vmax.f32 %v3254, %v3318
    %v3349 = vmax.f32 %v3255, %v3319
    %v3350 = vmax.f32 %v3256, %v3320
    %v3351 = vmax.f32 %v3257, %v3321
    %v3352 = vmax.f32 %v3258, %v3322
    %v3353 = vmax.f32 %v3259, %v3323
    %v3354 = vmax.f32 %v3260, %v3300
    %v3355 = vmax.f32 %v3261, %v3324
    %v3356 = vmax.f32 %v3262, %v3325
    %v3357 = vmax.f32 %v3263, %v3326
    %v3358 = vmax.f32 %v3264, %v3327
    %v3359 = vmax.f32 %v3265, %v3328
    %v3360 = vmax.f32 %v3266, %v3329
    %v3361 = vmax.f32 %v3267, %v3330
    %v3362 = vmax.f32 %v3268, %v3316
    %3364 = vset.pattern.permute.xlu0 0
    %3365 = vperm.xlu0 %3364, %v50
    %v3366 = vpop.permute.xlu0 %3365
    %v3368 = vadd.f32 %v3347, %v3366
    %v3369 = vadd.f32 %v3348, %v3366
    %v3370 = vadd.f32 %v3349, %v3366
    %v3371 = vadd.f32 %v3350, %v3366
    %v3372 = vadd.f32 %v3351, %v3366
    %v3373 = vadd.f32 %v3352, %v3366
    %v3374 = vadd.f32 %v3353, %v3366
    %v3375 = vadd.f32 %v3354, %v3366
    %v3376 = vadd.f32 %v3355, %v3366
    %v3377 = vadd.f32 %v3356, %v3366
    %v3378 = vadd.f32 %v3357, %v3366
    %v3379 = vadd.f32 %v3358, %v3366
    %v3380 = vadd.f32 %v3359, %v3366
    %v3381 = vadd.f32 %v3360, %v3366
    %v3382 = vadd.f32 %v3361, %v3366
    %v3383 = vadd.f32 %v3362, %v3366
    %v3384 = vmax.f32 %v3368, 0.0
    %v3385 = vmax.f32 %v3369, 0.0
    %v3386 = vmax.f32 %v3370, 0.0
    %v3387 = vmax.f32 %v3371, 0.0
    %v3388 = vmax.f32 %v3372, 0.0
    %v3389 = vmax.f32 %v3373, 0.0
    %v3390 = vmax.f32 %v3374, 0.0
    %v3391 = vmax.f32 %v3375, 0.0
    %v3392 = vmax.f32 %v3376, 0.0
    %v3393 = vmax.f32 %v3377, 0.0
    %v3394 = vmax.f32 %v3378, 0.0
    %v3395 = vmax.f32 %v3379, 0.0
    %v3396 = vmax.f32 %v3380, 0.0
    %v3397 = vmax.f32 %v3381, 0.0
    %v3398 = vmax.f32 %v3382, 0.0
    %v3399 = vmax.f32 %v3383, 0.0
    %v3400 = vld [vmem:[#allocation2 + $0xa0] sm:$0xff]
    %v3401 = vld [vmem:[#allocation2 + $0xa8] sm:$0xff]
    %v3402 = vld [vmem:[#allocation2 + $0xb0] sm:$0xff]
    %v3403 = vld [vmem:[#allocation2 + $0xb8] sm:$0xff]
    %v3404 = vunpack.c.l.bf16 %v3400
    %v3405 = vunpack.c.h.bf16 %v3400
    %v3406 = vunpack.c.l.bf16 %v3401
    %v3407 = vunpack.c.h.bf16 %v3401
    %v3408 = vunpack.c.l.bf16 %v3402
    %v3409 = vunpack.c.h.bf16 %v3402
    %v3410 = vunpack.c.l.bf16 %v3403
    %v3411 = vunpack.c.h.bf16 %v3403
    %v3412 = vmul.f32 %v3384, %v3404
    %v3413 = vmul.f32 %v3385, %v3405
    %v3414 = vmul.f32 %v3386, %v3406
    %v3415 = vmul.f32 %v3387, %v3407
    %v3416 = vmul.f32 %v3388, %v3408
    %v3417 = vmul.f32 %v3389, %v3409
    %v3418 = vmul.f32 %v3390, %v3410
    %v3419 = vmul.f32 %v3391, %v3411
    %v3420 = vmul.f32 %v3392, %v3404
    %v3421 = vmul.f32 %v3393, %v3405
    %v3422 = vmul.f32 %v3394, %v3406
    %v3423 = vmul.f32 %v3395, %v3407
    %v3424 = vmul.f32 %v3396, %v3408
    %v3425 = vmul.f32 %v3397, %v3409
    %v3426 = vmul.f32 %v3398, %v3410
    %v3427 = vmul.f32 %v3399, %v3411
    %v3428 = vadd.f32 %v3412, %v3413
    %v3429 = vadd.f32 %v3428, %v3414
    %v3430 = vadd.f32 %v3429, %v3415
    %v3431 = vadd.f32 %v3430, %v3416
    %v3432 = vadd.f32 %v3431, %v3417
    %v3433 = vadd.f32 %v3432, %v3418
    %v3434 = vsel %vm567, %v3419, 0.0
    %v3435 = vadd.f32 %v3433, %v3434
    %3436 = vadd.xlane.f32.xlu0 %v3435
    %v3437 = vpop.xlane.xlu0 %3436
    %v3438 = vadd.f32 %v3420, %v3421
    %v3439 = vadd.f32 %v3438, %v3422
    %v3440 = vadd.f32 %v3439, %v3423
    %v3441 = vadd.f32 %v3440, %v3424
    %v3442 = vadd.f32 %v3441, %v3425
    %v3443 = vadd.f32 %v3442, %v3426
    %v3444 = vsel %vm567, %v3427, 0.0
    %v3445 = vadd.f32 %v3443, %v3444
    %3446 = vadd.xlane.f32.xlu0 %v3445
    %v3447 = vpop.xlane.xlu0 %3446
    %v3450 = vlaneseq
    %v3451 = vshrl.u32 %v3450, 7
    %v3452 = vsub.s32 %v585, %v3451
    %v3453 = vrot.slane %v3437, %v3452
    %v3454 = vlaneseq
    %v3455 = vshrl.u32 %v3454, 7
    %v3456 = vsub.s32 %v585, %v3455
    %v3457 = vrot.slane %v3447, %v3456
    %v3458 = vsel %vm594, %v3457, %v3453
    %v3460 = vsel %vm597, %v3458, 0.0
    %3461 = vadd.xlane.f32.xlu0 %v3460
    %v3462 = vpop.xlane.xlu0 %3461
    %v3463 = vadd.f32 %v2891, %v3462
    %v3464 = vld [vmem:[%s602 + $0xa0] sm:$0xff]
    %v3465 = vld [vmem:[%s602 + $0xa8] sm:$0xff]
    %v3466 = vld [vmem:[%s602 + $0xb0] sm:$0xff]
    %v3467 = vld [vmem:[%s602 + $0xb8] sm:$0xff]
    %v3468 = vunpack.c.l.bf16 %v3464
    %v3469 = vunpack.c.h.bf16 %v3464
    %v3470 = vunpack.c.l.bf16 %v3465
    %v3471 = vunpack.c.h.bf16 %v3465
    %v3472 = vunpack.c.l.bf16 %v3466
    %v3473 = vunpack.c.h.bf16 %v3466
    %v3474 = vunpack.c.l.bf16 %v3467
    %v3475 = vunpack.c.h.bf16 %v3467
    %v3476 = vmul.f32 %v3384, %v3468
    %v3477 = vmul.f32 %v3385, %v3469
    %v3478 = vmul.f32 %v3386, %v3470
    %v3479 = vmul.f32 %v3387, %v3471
    %v3480 = vmul.f32 %v3388, %v3472
    %v3481 = vmul.f32 %v3389, %v3473
    %v3482 = vmul.f32 %v3390, %v3474
    %v3483 = vmul.f32 %v3391, %v3475
    %v3484 = vmul.f32 %v3392, %v3468
    %v3485 = vmul.f32 %v3393, %v3469
    %v3486 = vmul.f32 %v3394, %v3470
    %v3487 = vmul.f32 %v3395, %v3471
    %v3488 = vmul.f32 %v3396, %v3472
    %v3489 = vmul.f32 %v3397, %v3473
    %v3490 = vmul.f32 %v3398, %v3474
    %v3491 = vmul.f32 %v3399, %v3475
    %v3492 = vadd.f32 %v3476, %v3477
    %v3493 = vadd.f32 %v3492, %v3478
    %v3494 = vadd.f32 %v3493, %v3479
    %v3495 = vadd.f32 %v3494, %v3480
    %v3496 = vadd.f32 %v3495, %v3481
    %v3497 = vadd.f32 %v3496, %v3482
    %v3498 = vsel %vm567, %v3483, 0.0
    %v3499 = vadd.f32 %v3497, %v3498
    %3500 = vadd.xlane.f32.xlu0 %v3499
    %v3501 = vpop.xlane.xlu0 %3500
    %v3502 = vadd.f32 %v3484, %v3485
    %v3503 = vadd.f32 %v3502, %v3486
    %v3504 = vadd.f32 %v3503, %v3487
    %v3505 = vadd.f32 %v3504, %v3488
    %v3506 = vadd.f32 %v3505, %v3489
    %v3507 = vadd.f32 %v3506, %v3490
    %v3508 = vsel %vm567, %v3491, 0.0
    %v3509 = vadd.f32 %v3507, %v3508
    %3510 = vadd.xlane.f32.xlu0 %v3509
    %v3511 = vpop.xlane.xlu0 %3510
    %v3514 = vlaneseq
    %v3515 = vshrl.u32 %v3514, 7
    %v3516 = vsub.s32 %v585, %v3515
    %v3517 = vrot.slane %v3501, %v3516
    %v3518 = vlaneseq
    %v3519 = vshrl.u32 %v3518, 7
    %v3520 = vsub.s32 %v585, %v3519
    %v3521 = vrot.slane %v3511, %v3520
    %v3522 = vsel %vm594, %v3521, %v3517
    %v3524 = vsel %vm597, %v3522, 0.0
    %3525 = vadd.xlane.f32.xlu0 %v3524
    %v3526 = vpop.xlane.xlu0 %3525
    %v3527 = vadd.f32 %v2955, %v3526
    %v3528 = vld [vmem:[%s667 + $0xa0] sm:$0xff]
    %v3529 = vld [vmem:[%s667 + $0xa8] sm:$0xff]
    %v3530 = vld [vmem:[%s667 + $0xb0] sm:$0xff]
    %v3531 = vld [vmem:[%s667 + $0xb8] sm:$0xff]
    %v3532 = vunpack.c.l.bf16 %v3528
    %v3533 = vunpack.c.h.bf16 %v3528
    %v3534 = vunpack.c.l.bf16 %v3529
    %v3535 = vunpack.c.h.bf16 %v3529
    %v3536 = vunpack.c.l.bf16 %v3530
    %v3537 = vunpack.c.h.bf16 %v3530
    %v3538 = vunpack.c.l.bf16 %v3531
    %v3539 = vunpack.c.h.bf16 %v3531
    %v3540 = vmul.f32 %v3384, %v3532
    %v3541 = vmul.f32 %v3385, %v3533
    %v3542 = vmul.f32 %v3386, %v3534
    %v3543 = vmul.f32 %v3387, %v3535
    %v3544 = vmul.f32 %v3388, %v3536
    %v3545 = vmul.f32 %v3389, %v3537
    %v3546 = vmul.f32 %v3390, %v3538
    %v3547 = vmul.f32 %v3391, %v3539
    %v3548 = vmul.f32 %v3392, %v3532
    %v3549 = vmul.f32 %v3393, %v3533
    %v3550 = vmul.f32 %v3394, %v3534
    %v3551 = vmul.f32 %v3395, %v3535
    %v3552 = vmul.f32 %v3396, %v3536
    %v3553 = vmul.f32 %v3397, %v3537
    %v3554 = vmul.f32 %v3398, %v3538
    %v3555 = vmul.f32 %v3399, %v3539
    %v3556 = vadd.f32 %v3540, %v3541
    %v3557 = vadd.f32 %v3556, %v3542
    %v3558 = vadd.f32 %v3557, %v3543
    %v3559 = vadd.f32 %v3558, %v3544
    %v3560 = vadd.f32 %v3559, %v3545
    %v3561 = vadd.f32 %v3560, %v3546
    %v3562 = vsel %vm567, %v3547, 0.0
    %v3563 = vadd.f32 %v3561, %v3562
    %3564 = vadd.xlane.f32.xlu0 %v3563
    %v3565 = vpop.xlane.xlu0 %3564
    %v3566 = vadd.f32 %v3548, %v3549
    %v3567 = vadd.f32 %v3566, %v3550
    %v3568 = vadd.f32 %v3567, %v3551
    %v3569 = vadd.f32 %v3568, %v3552
    %v3570 = vadd.f32 %v3569, %v3553
    %v3571 = vadd.f32 %v3570, %v3554
    %v3572 = vsel %vm567, %v3555, 0.0
    %v3573 = vadd.f32 %v3571, %v3572
    %3574 = vadd.xlane.f32.xlu0 %v3573
    %v3575 = vpop.xlane.xlu0 %3574
    %v3578 = vlaneseq
    %v3579 = vshrl.u32 %v3578, 7
    %v3580 = vsub.s32 %v585, %v3579
    %v3581 = vrot.slane %v3565, %v3580
    %v3582 = vlaneseq
    %v3583 = vshrl.u32 %v3582, 7
    %v3584 = vsub.s32 %v585, %v3583
    %v3585 = vrot.slane %v3575, %v3584
    %v3586 = vsel %vm594, %v3585, %v3581
    %v3588 = vsel %vm597, %v3586, 0.0
    %3589 = vadd.xlane.f32.xlu0 %v3588
    %v3590 = vpop.xlane.xlu0 %3589
    %v3591 = vadd.f32 %v3019, %v3590
    %3593 = vset.pattern.permute.xlu0 0
    %3594 = vperm.xlu0 %3593, %v43
    %v3595 = vpop.permute.xlu0 %3594
    %v3597 = vmul.f32 %v3595, %v79
    %v3598 = vmul.f32 %v3595, %v83
    %v3599 = vmul.f32 %v3595, %v87
    %v3600 = vmul.f32 %v3595, %v91
    %v3601 = vmul.f32 %v3595, %v95
    %v3602 = vmul.f32 %v3595, %v99
    %v3603 = vmul.f32 %v3595, %v103
    %v3604 = vmul.f32 %v3595, %v107
    %v3605 = vmul.f32 %v3595, %v111
    %v3606 = vmul.f32 %v3595, %v115
    %v3607 = vmul.f32 %v3595, %v119
    %v3608 = vmul.f32 %v3595, %v123
    %v3609 = vmul.f32 %v3595, %v127
    %v3610 = vmul.f32 %v3595, %v131
    %v3611 = vmul.f32 %v3595, %v135
    %v3612 = vmul.f32 %v3595, %v139
    %3613 = vset.pattern.permute.xlu0 1
    %3614 = vperm.xlu0 %3613, %v43
    %v3615 = vpop.permute.xlu0 %3614
    %v3617 = vmul.f32 %v3615, %v79
    %v3618 = vmul.f32 %v3615, %v83
    %v3619 = vmul.f32 %v3615, %v87
    %v3620 = vmul.f32 %v3615, %v91
    %v3621 = vmul.f32 %v3615, %v95
    %v3622 = vmul.f32 %v3615, %v99
    %v3623 = vmul.f32 %v3615, %v103
    %v3624 = vmul.f32 %v3615, %v107
    %v3625 = vmul.f32 %v3615, %v111
    %v3626 = vmul.f32 %v3615, %v115
    %v3627 = vmul.f32 %v3615, %v119
    %v3628 = vmul.f32 %v3615, %v123
    %v3629 = vmul.f32 %v3615, %v127
    %v3630 = vmul.f32 %v3615, %v131
    %v3631 = vmul.f32 %v3615, %v135
    %v3632 = vmul.f32 %v3615, %v139
    %3649 = vrot.lane.b32.xlu0 %v3617, 127
    %v3650 = vpop.permute.xlu0 %3649
    %3651 = vrot.lane.b32.xlu0 %v3618, 127
    %v3652 = vpop.permute.xlu0 %3651
    %3653 = vrot.lane.b32.xlu0 %v3619, 127
    %v3654 = vpop.permute.xlu0 %3653
    %3655 = vrot.lane.b32.xlu0 %v3620, 127
    %v3656 = vpop.permute.xlu0 %3655
    %3657 = vrot.lane.b32.xlu0 %v3621, 127
    %v3658 = vpop.permute.xlu0 %3657
    %3659 = vrot.lane.b32.xlu0 %v3622, 127
    %v3660 = vpop.permute.xlu0 %3659
    %3661 = vrot.lane.b32.xlu0 %v3623, 127
    %v3662 = vpop.permute.xlu0 %3661
    %3663 = vrot.lane.b32.xlu0 %v3624, 127
    %v3664 = vpop.permute.xlu0 %3663
    %3665 = vrot.lane.b32.xlu0 %v3625, 127
    %v3666 = vpop.permute.xlu0 %3665
    %3667 = vrot.lane.b32.xlu0 %v3626, 127
    %v3668 = vpop.permute.xlu0 %3667
    %3669 = vrot.lane.b32.xlu0 %v3627, 127
    %v3670 = vpop.permute.xlu0 %3669
    %3671 = vrot.lane.b32.xlu0 %v3628, 127
    %v3672 = vpop.permute.xlu0 %3671
    %3673 = vrot.lane.b32.xlu0 %v3629, 127
    %v3674 = vpop.permute.xlu0 %3673
    %3675 = vrot.lane.b32.xlu0 %v3630, 127
    %v3676 = vpop.permute.xlu0 %3675
    %3677 = vrot.lane.b32.xlu0 %v3631, 127
    %v3678 = vpop.permute.xlu0 %3677
    %3679 = vrot.lane.b32.xlu0 %v3632, 127
    %v3680 = vpop.permute.xlu0 %3679
    %v3681 = vsel %vm240, %v3650, %v3652
    %v3682 = vsel %vm240, %v3652, %v3654
    %v3683 = vsel %vm240, %v3654, %v3656
    %v3684 = vsel %vm240, %v3656, %v3658
    %v3685 = vsel %vm240, %v3658, %v3660
    %v3686 = vsel %vm240, %v3660, %v3662
    %v3687 = vsel %vm240, %v3662, %v3664
    %v3688 = vsel %vm240, %v3666, %v3668
    %v3689 = vsel %vm240, %v3668, %v3670
    %v3690 = vsel %vm240, %v3670, %v3672
    %v3691 = vsel %vm240, %v3672, %v3674
    %v3692 = vsel %vm240, %v3674, %v3676
    %v3693 = vsel %vm240, %v3676, %v3678
    %v3694 = vsel %vm240, %v3678, %v3680
    %v3711 = vadd.f32 %v3597, %v3681
    %v3712 = vadd.f32 %v3598, %v3682
    %v3713 = vadd.f32 %v3599, %v3683
    %v3714 = vadd.f32 %v3600, %v3684
    %v3715 = vadd.f32 %v3601, %v3685
    %v3716 = vadd.f32 %v3602, %v3686
    %v3717 = vadd.f32 %v3603, %v3687
    %v3718 = vadd.f32 %v3604, %v3664
    %v3719 = vadd.f32 %v3605, %v3688
    %v3720 = vadd.f32 %v3606, %v3689
    %v3721 = vadd.f32 %v3607, %v3690
    %v3722 = vadd.f32 %v3608, %v3691
    %v3723 = vadd.f32 %v3609, %v3692
    %v3724 = vadd.f32 %v3610, %v3693
    %v3725 = vadd.f32 %v3611, %v3694
    %v3726 = vadd.f32 %v3612, %v3680
    %3727 = vset.pattern.permute.xlu0 2
    %3728 = vperm.xlu0 %3727, %v43
    %v3729 = vpop.permute.xlu0 %3728
    %v3731 = vmul.f32 %v3729, %v79
    %v3732 = vmul.f32 %v3729, %v83
    %v3733 = vmul.f32 %v3729, %v87
    %v3734 = vmul.f32 %v3729, %v91
    %v3735 = vmul.f32 %v3729, %v95
    %v3736 = vmul.f32 %v3729, %v99
    %v3737 = vmul.f32 %v3729, %v103
    %v3738 = vmul.f32 %v3729, %v107
    %v3739 = vmul.f32 %v3729, %v111
    %v3740 = vmul.f32 %v3729, %v115
    %v3741 = vmul.f32 %v3729, %v119
    %v3742 = vmul.f32 %v3729, %v123
    %v3743 = vmul.f32 %v3729, %v127
    %v3744 = vmul.f32 %v3729, %v131
    %v3745 = vmul.f32 %v3729, %v135
    %v3746 = vmul.f32 %v3729, %v139
    %3763 = vrot.lane.b32.xlu0 %v3731, 126
    %v3764 = vpop.permute.xlu0 %3763
    %3765 = vrot.lane.b32.xlu0 %v3732, 126
    %v3766 = vpop.permute.xlu0 %3765
    %3767 = vrot.lane.b32.xlu0 %v3733, 126
    %v3768 = vpop.permute.xlu0 %3767
    %3769 = vrot.lane.b32.xlu0 %v3734, 126
    %v3770 = vpop.permute.xlu0 %3769
    %3771 = vrot.lane.b32.xlu0 %v3735, 126
    %v3772 = vpop.permute.xlu0 %3771
    %3773 = vrot.lane.b32.xlu0 %v3736, 126
    %v3774 = vpop.permute.xlu0 %3773
    %3775 = vrot.lane.b32.xlu0 %v3737, 126
    %v3776 = vpop.permute.xlu0 %3775
    %3777 = vrot.lane.b32.xlu0 %v3738, 126
    %v3778 = vpop.permute.xlu0 %3777
    %3779 = vrot.lane.b32.xlu0 %v3739, 126
    %v3780 = vpop.permute.xlu0 %3779
    %3781 = vrot.lane.b32.xlu0 %v3740, 126
    %v3782 = vpop.permute.xlu0 %3781
    %3783 = vrot.lane.b32.xlu0 %v3741, 126
    %v3784 = vpop.permute.xlu0 %3783
    %3785 = vrot.lane.b32.xlu0 %v3742, 126
    %v3786 = vpop.permute.xlu0 %3785
    %3787 = vrot.lane.b32.xlu0 %v3743, 126
    %v3788 = vpop.permute.xlu0 %3787
    %3789 = vrot.lane.b32.xlu0 %v3744, 126
    %v3790 = vpop.permute.xlu0 %3789
    %3791 = vrot.lane.b32.xlu0 %v3745, 126
    %v3792 = vpop.permute.xlu0 %3791
    %3793 = vrot.lane.b32.xlu0 %v3746, 126
    %v3794 = vpop.permute.xlu0 %3793
    %v3795 = vsel %vm355, %v3764, %v3766
    %v3796 = vsel %vm355, %v3766, %v3768
    %v3797 = vsel %vm355, %v3768, %v3770
    %v3798 = vsel %vm355, %v3770, %v3772
    %v3799 = vsel %vm355, %v3772, %v3774
    %v3800 = vsel %vm355, %v3774, %v3776
    %v3801 = vsel %vm355, %v3776, %v3778
    %v3802 = vsel %vm355, %v3780, %v3782
    %v3803 = vsel %vm355, %v3782, %v3784
    %v3804 = vsel %vm355, %v3784, %v3786
    %v3805 = vsel %vm355, %v3786, %v3788
    %v3806 = vsel %vm355, %v3788, %v3790
    %v3807 = vsel %vm355, %v3790, %v3792
    %v3808 = vsel %vm355, %v3792, %v3794
    %v3825 = vadd.f32 %v3711, %v3795
    %v3826 = vadd.f32 %v3712, %v3796
    %v3827 = vadd.f32 %v3713, %v3797
    %v3828 = vadd.f32 %v3714, %v3798
    %v3829 = vadd.f32 %v3715, %v3799
    %v3830 = vadd.f32 %v3716, %v3800
    %v3831 = vadd.f32 %v3717, %v3801
    %v3832 = vadd.f32 %v3718, %v3778
    %v3833 = vadd.f32 %v3719, %v3802
    %v3834 = vadd.f32 %v3720, %v3803
    %v3835 = vadd.f32 %v3721, %v3804
    %v3836 = vadd.f32 %v3722, %v3805
    %v3837 = vadd.f32 %v3723, %v3806
    %v3838 = vadd.f32 %v3724, %v3807
    %v3839 = vadd.f32 %v3725, %v3808
    %v3840 = vadd.f32 %v3726, %v3794
    %3857 = vrot.lane.b32.xlu0 %v3825, 127
    %v3858 = vpop.permute.xlu0 %3857
    %3859 = vrot.lane.b32.xlu0 %v3826, 127
    %v3860 = vpop.permute.xlu0 %3859
    %3861 = vrot.lane.b32.xlu0 %v3827, 127
    %v3862 = vpop.permute.xlu0 %3861
    %3863 = vrot.lane.b32.xlu0 %v3828, 127
    %v3864 = vpop.permute.xlu0 %3863
    %3865 = vrot.lane.b32.xlu0 %v3829, 127
    %v3866 = vpop.permute.xlu0 %3865
    %3867 = vrot.lane.b32.xlu0 %v3830, 127
    %v3868 = vpop.permute.xlu0 %3867
    %3869 = vrot.lane.b32.xlu0 %v3831, 127
    %v3870 = vpop.permute.xlu0 %3869
    %3871 = vrot.lane.b32.xlu0 %v3832, 127
    %v3872 = vpop.permute.xlu0 %3871
    %3873 = vrot.lane.b32.xlu0 %v3833, 127
    %v3874 = vpop.permute.xlu0 %3873
    %3875 = vrot.lane.b32.xlu0 %v3834, 127
    %v3876 = vpop.permute.xlu0 %3875
    %3877 = vrot.lane.b32.xlu0 %v3835, 127
    %v3878 = vpop.permute.xlu0 %3877
    %3879 = vrot.lane.b32.xlu0 %v3836, 127
    %v3880 = vpop.permute.xlu0 %3879
    %3881 = vrot.lane.b32.xlu0 %v3837, 127
    %v3882 = vpop.permute.xlu0 %3881
    %3883 = vrot.lane.b32.xlu0 %v3838, 127
    %v3884 = vpop.permute.xlu0 %3883
    %3885 = vrot.lane.b32.xlu0 %v3839, 127
    %v3886 = vpop.permute.xlu0 %3885
    %3887 = vrot.lane.b32.xlu0 %v3840, 127
    %v3888 = vpop.permute.xlu0 %3887
    %v3889 = vsel %vm240, %v3858, %v3860
    %v3890 = vsel %vm240, %v3860, %v3862
    %v3891 = vsel %vm240, %v3862, %v3864
    %v3892 = vsel %vm240, %v3864, %v3866
    %v3893 = vsel %vm240, %v3866, %v3868
    %v3894 = vsel %vm240, %v3868, %v3870
    %v3895 = vsel %vm240, %v3870, %v3872
    %v3896 = vsel %vm240, %v3874, %v3876
    %v3897 = vsel %vm240, %v3876, %v3878
    %v3898 = vsel %vm240, %v3878, %v3880
    %v3899 = vsel %vm240, %v3880, %v3882
    %v3900 = vsel %vm240, %v3882, %v3884
    %v3901 = vsel %vm240, %v3884, %v3886
    %v3902 = vsel %vm240, %v3886, %v3888
    %v3919 = vmax.f32 %v3825, %v3889
    %v3920 = vmax.f32 %v3826, %v3890
    %v3921 = vmax.f32 %v3827, %v3891
    %v3922 = vmax.f32 %v3828, %v3892
    %v3923 = vmax.f32 %v3829, %v3893
    %v3924 = vmax.f32 %v3830, %v3894
    %v3925 = vmax.f32 %v3831, %v3895
    %v3926 = vmax.f32 %v3832, %v3872
    %v3927 = vmax.f32 %v3833, %v3896
    %v3928 = vmax.f32 %v3834, %v3897
    %v3929 = vmax.f32 %v3835, %v3898
    %v3930 = vmax.f32 %v3836, %v3899
    %v3931 = vmax.f32 %v3837, %v3900
    %v3932 = vmax.f32 %v3838, %v3901
    %v3933 = vmax.f32 %v3839, %v3902
    %v3934 = vmax.f32 %v3840, %v3888
    %3936 = vset.pattern.permute.xlu0 0
    %3937 = vperm.xlu0 %3936, %v51
    %v3938 = vpop.permute.xlu0 %3937
    %v3940 = vadd.f32 %v3919, %v3938
    %v3941 = vadd.f32 %v3920, %v3938
    %v3942 = vadd.f32 %v3921, %v3938
    %v3943 = vadd.f32 %v3922, %v3938
    %v3944 = vadd.f32 %v3923, %v3938
    %v3945 = vadd.f32 %v3924, %v3938
    %v3946 = vadd.f32 %v3925, %v3938
    %v3947 = vadd.f32 %v3926, %v3938
    %v3948 = vadd.f32 %v3927, %v3938
    %v3949 = vadd.f32 %v3928, %v3938
    %v3950 = vadd.f32 %v3929, %v3938
    %v3951 = vadd.f32 %v3930, %v3938
    %v3952 = vadd.f32 %v3931, %v3938
    %v3953 = vadd.f32 %v3932, %v3938
    %v3954 = vadd.f32 %v3933, %v3938
    %v3955 = vadd.f32 %v3934, %v3938
    %v3956 = vmax.f32 %v3940, 0.0
    %v3957 = vmax.f32 %v3941, 0.0
    %v3958 = vmax.f32 %v3942, 0.0
    %v3959 = vmax.f32 %v3943, 0.0
    %v3960 = vmax.f32 %v3944, 0.0
    %v3961 = vmax.f32 %v3945, 0.0
    %v3962 = vmax.f32 %v3946, 0.0
    %v3963 = vmax.f32 %v3947, 0.0
    %v3964 = vmax.f32 %v3948, 0.0
    %v3965 = vmax.f32 %v3949, 0.0
    %v3966 = vmax.f32 %v3950, 0.0
    %v3967 = vmax.f32 %v3951, 0.0
    %v3968 = vmax.f32 %v3952, 0.0
    %v3969 = vmax.f32 %v3953, 0.0
    %v3970 = vmax.f32 %v3954, 0.0
    %v3971 = vmax.f32 %v3955, 0.0
    %v3972 = vld [vmem:[#allocation2 + $0xc0] sm:$0xff]
    %v3973 = vld [vmem:[#allocation2 + $0xc8] sm:$0xff]
    %v3974 = vld [vmem:[#allocation2 + $0xd0] sm:$0xff]
    %v3975 = vld [vmem:[#allocation2 + $0xd8] sm:$0xff]
    %v3976 = vunpack.c.l.bf16 %v3972
    %v3977 = vunpack.c.h.bf16 %v3972
    %v3978 = vunpack.c.l.bf16 %v3973
    %v3979 = vunpack.c.h.bf16 %v3973
    %v3980 = vunpack.c.l.bf16 %v3974
    %v3981 = vunpack.c.h.bf16 %v3974
    %v3982 = vunpack.c.l.bf16 %v3975
    %v3983 = vunpack.c.h.bf16 %v3975
    %v3984 = vmul.f32 %v3956, %v3976
    %v3985 = vmul.f32 %v3957, %v3977
    %v3986 = vmul.f32 %v3958, %v3978
    %v3987 = vmul.f32 %v3959, %v3979
    %v3988 = vmul.f32 %v3960, %v3980
    %v3989 = vmul.f32 %v3961, %v3981
    %v3990 = vmul.f32 %v3962, %v3982
    %v3991 = vmul.f32 %v3963, %v3983
    %v3992 = vmul.f32 %v3964, %v3976
    %v3993 = vmul.f32 %v3965, %v3977
    %v3994 = vmul.f32 %v3966, %v3978
    %v3995 = vmul.f32 %v3967, %v3979
    %v3996 = vmul.f32 %v3968, %v3980
    %v3997 = vmul.f32 %v3969, %v3981
    %v3998 = vmul.f32 %v3970, %v3982
    %v3999 = vmul.f32 %v3971, %v3983
    %v4000 = vadd.f32 %v3984, %v3985
    %v4001 = vadd.f32 %v4000, %v3986
    %v4002 = vadd.f32 %v4001, %v3987
    %v4003 = vadd.f32 %v4002, %v3988
    %v4004 = vadd.f32 %v4003, %v3989
    %v4005 = vadd.f32 %v4004, %v3990
    %v4006 = vsel %vm567, %v3991, 0.0
    %v4007 = vadd.f32 %v4005, %v4006
    %4008 = vadd.xlane.f32.xlu0 %v4007
    %v4009 = vpop.xlane.xlu0 %4008
    %v4010 = vadd.f32 %v3992, %v3993
    %v4011 = vadd.f32 %v4010, %v3994
    %v4012 = vadd.f32 %v4011, %v3995
    %v4013 = vadd.f32 %v4012, %v3996
    %v4014 = vadd.f32 %v4013, %v3997
    %v4015 = vadd.f32 %v4014, %v3998
    %v4016 = vsel %vm567, %v3999, 0.0
    %v4017 = vadd.f32 %v4015, %v4016
    %4018 = vadd.xlane.f32.xlu0 %v4017
    %v4019 = vpop.xlane.xlu0 %4018
    %v4022 = vlaneseq
    %v4023 = vshrl.u32 %v4022, 7
    %v4024 = vsub.s32 %v585, %v4023
    %v4025 = vrot.slane %v4009, %v4024
    %v4026 = vlaneseq
    %v4027 = vshrl.u32 %v4026, 7
    %v4028 = vsub.s32 %v585, %v4027
    %v4029 = vrot.slane %v4019, %v4028
    %v4030 = vsel %vm594, %v4029, %v4025
    %v4032 = vsel %vm597, %v4030, 0.0
    %4033 = vadd.xlane.f32.xlu0 %v4032
    %v4034 = vpop.xlane.xlu0 %4033
    %v4035 = vadd.f32 %v3463, %v4034
    %v4036 = vld [vmem:[%s602 + $0xc0] sm:$0xff]
    %v4037 = vld [vmem:[%s602 + $0xc8] sm:$0xff]
    %v4038 = vld [vmem:[%s602 + $0xd0] sm:$0xff]
    %v4039 = vld [vmem:[%s602 + $0xd8] sm:$0xff]
    %v4040 = vunpack.c.l.bf16 %v4036
    %v4041 = vunpack.c.h.bf16 %v4036
    %v4042 = vunpack.c.l.bf16 %v4037
    %v4043 = vunpack.c.h.bf16 %v4037
    %v4044 = vunpack.c.l.bf16 %v4038
    %v4045 = vunpack.c.h.bf16 %v4038
    %v4046 = vunpack.c.l.bf16 %v4039
    %v4047 = vunpack.c.h.bf16 %v4039
    %v4048 = vmul.f32 %v3956, %v4040
    %v4049 = vmul.f32 %v3957, %v4041
    %v4050 = vmul.f32 %v3958, %v4042
    %v4051 = vmul.f32 %v3959, %v4043
    %v4052 = vmul.f32 %v3960, %v4044
    %v4053 = vmul.f32 %v3961, %v4045
    %v4054 = vmul.f32 %v3962, %v4046
    %v4055 = vmul.f32 %v3963, %v4047
    %v4056 = vmul.f32 %v3964, %v4040
    %v4057 = vmul.f32 %v3965, %v4041
    %v4058 = vmul.f32 %v3966, %v4042
    %v4059 = vmul.f32 %v3967, %v4043
    %v4060 = vmul.f32 %v3968, %v4044
    %v4061 = vmul.f32 %v3969, %v4045
    %v4062 = vmul.f32 %v3970, %v4046
    %v4063 = vmul.f32 %v3971, %v4047
    %v4064 = vadd.f32 %v4048, %v4049
    %v4065 = vadd.f32 %v4064, %v4050
    %v4066 = vadd.f32 %v4065, %v4051
    %v4067 = vadd.f32 %v4066, %v4052
    %v4068 = vadd.f32 %v4067, %v4053
    %v4069 = vadd.f32 %v4068, %v4054
    %v4070 = vsel %vm567, %v4055, 0.0
    %v4071 = vadd.f32 %v4069, %v4070
    %4072 = vadd.xlane.f32.xlu0 %v4071
    %v4073 = vpop.xlane.xlu0 %4072
    %v4074 = vadd.f32 %v4056, %v4057
    %v4075 = vadd.f32 %v4074, %v4058
    %v4076 = vadd.f32 %v4075, %v4059
    %v4077 = vadd.f32 %v4076, %v4060
    %v4078 = vadd.f32 %v4077, %v4061
    %v4079 = vadd.f32 %v4078, %v4062
    %v4080 = vsel %vm567, %v4063, 0.0
    %v4081 = vadd.f32 %v4079, %v4080
    %4082 = vadd.xlane.f32.xlu0 %v4081
    %v4083 = vpop.xlane.xlu0 %4082
    %v4086 = vlaneseq
    %v4087 = vshrl.u32 %v4086, 7
    %v4088 = vsub.s32 %v585, %v4087
    %v4089 = vrot.slane %v4073, %v4088
    %v4090 = vlaneseq
    %v4091 = vshrl.u32 %v4090, 7
    %v4092 = vsub.s32 %v585, %v4091
    %v4093 = vrot.slane %v4083, %v4092
    %v4094 = vsel %vm594, %v4093, %v4089
    %v4096 = vsel %vm597, %v4094, 0.0
    %4097 = vadd.xlane.f32.xlu0 %v4096
    %v4098 = vpop.xlane.xlu0 %4097
    %v4099 = vadd.f32 %v3527, %v4098
    %v4100 = vld [vmem:[%s667 + $0xc0] sm:$0xff]
    %v4101 = vld [vmem:[%s667 + $0xc8] sm:$0xff]
    %v4102 = vld [vmem:[%s667 + $0xd0] sm:$0xff]
    %v4103 = vld [vmem:[%s667 + $0xd8] sm:$0xff]
    %v4104 = vunpack.c.l.bf16 %v4100
    %v4105 = vunpack.c.h.bf16 %v4100
    %v4106 = vunpack.c.l.bf16 %v4101
    %v4107 = vunpack.c.h.bf16 %v4101
    %v4108 = vunpack.c.l.bf16 %v4102
    %v4109 = vunpack.c.h.bf16 %v4102
    %v4110 = vunpack.c.l.bf16 %v4103
    %v4111 = vunpack.c.h.bf16 %v4103
    %v4112 = vmul.f32 %v3956, %v4104
    %v4113 = vmul.f32 %v3957, %v4105
    %v4114 = vmul.f32 %v3958, %v4106
    %v4115 = vmul.f32 %v3959, %v4107
    %v4116 = vmul.f32 %v3960, %v4108
    %v4117 = vmul.f32 %v3961, %v4109
    %v4118 = vmul.f32 %v3962, %v4110
    %v4119 = vmul.f32 %v3963, %v4111
    %v4120 = vmul.f32 %v3964, %v4104
    %v4121 = vmul.f32 %v3965, %v4105
    %v4122 = vmul.f32 %v3966, %v4106
    %v4123 = vmul.f32 %v3967, %v4107
    %v4124 = vmul.f32 %v3968, %v4108
    %v4125 = vmul.f32 %v3969, %v4109
    %v4126 = vmul.f32 %v3970, %v4110
    %v4127 = vmul.f32 %v3971, %v4111
    %v4128 = vadd.f32 %v4112, %v4113
    %v4129 = vadd.f32 %v4128, %v4114
    %v4130 = vadd.f32 %v4129, %v4115
    %v4131 = vadd.f32 %v4130, %v4116
    %v4132 = vadd.f32 %v4131, %v4117
    %v4133 = vadd.f32 %v4132, %v4118
    %v4134 = vsel %vm567, %v4119, 0.0
    %v4135 = vadd.f32 %v4133, %v4134
    %4136 = vadd.xlane.f32.xlu0 %v4135
    %v4137 = vpop.xlane.xlu0 %4136
    %v4138 = vadd.f32 %v4120, %v4121
    %v4139 = vadd.f32 %v4138, %v4122
    %v4140 = vadd.f32 %v4139, %v4123
    %v4141 = vadd.f32 %v4140, %v4124
    %v4142 = vadd.f32 %v4141, %v4125
    %v4143 = vadd.f32 %v4142, %v4126
    %v4144 = vsel %vm567, %v4127, 0.0
    %v4145 = vadd.f32 %v4143, %v4144
    %4146 = vadd.xlane.f32.xlu0 %v4145
    %v4147 = vpop.xlane.xlu0 %4146
    %v4150 = vlaneseq
    %v4151 = vshrl.u32 %v4150, 7
    %v4152 = vsub.s32 %v585, %v4151
    %v4153 = vrot.slane %v4137, %v4152
    %v4154 = vlaneseq
    %v4155 = vshrl.u32 %v4154, 7
    %v4156 = vsub.s32 %v585, %v4155
    %v4157 = vrot.slane %v4147, %v4156
    %v4158 = vsel %vm594, %v4157, %v4153
    %v4160 = vsel %vm597, %v4158, 0.0
    %4161 = vadd.xlane.f32.xlu0 %v4160
    %v4162 = vpop.xlane.xlu0 %4161
    %v4163 = vadd.f32 %v3591, %v4162
    %4165 = vset.pattern.permute.xlu0 0
    %4166 = vperm.xlu0 %4165, %v44
    %v4167 = vpop.permute.xlu0 %4166
    %v4169 = vmul.f32 %v4167, %v79
    %v4170 = vmul.f32 %v4167, %v83
    %v4171 = vmul.f32 %v4167, %v87
    %v4172 = vmul.f32 %v4167, %v91
    %v4173 = vmul.f32 %v4167, %v95
    %v4174 = vmul.f32 %v4167, %v99
    %v4175 = vmul.f32 %v4167, %v103
    %v4176 = vmul.f32 %v4167, %v107
    %v4177 = vmul.f32 %v4167, %v111
    %v4178 = vmul.f32 %v4167, %v115
    %v4179 = vmul.f32 %v4167, %v119
    %v4180 = vmul.f32 %v4167, %v123
    %v4181 = vmul.f32 %v4167, %v127
    %v4182 = vmul.f32 %v4167, %v131
    %v4183 = vmul.f32 %v4167, %v135
    %v4184 = vmul.f32 %v4167, %v139
    %4185 = vset.pattern.permute.xlu0 1
    %4186 = vperm.xlu0 %4185, %v44
    %v4187 = vpop.permute.xlu0 %4186
    %v4189 = vmul.f32 %v4187, %v79
    %v4190 = vmul.f32 %v4187, %v83
    %v4191 = vmul.f32 %v4187, %v87
    %v4192 = vmul.f32 %v4187, %v91
    %v4193 = vmul.f32 %v4187, %v95
    %v4194 = vmul.f32 %v4187, %v99
    %v4195 = vmul.f32 %v4187, %v103
    %v4196 = vmul.f32 %v4187, %v107
    %v4197 = vmul.f32 %v4187, %v111
    %v4198 = vmul.f32 %v4187, %v115
    %v4199 = vmul.f32 %v4187, %v119
    %v4200 = vmul.f32 %v4187, %v123
    %v4201 = vmul.f32 %v4187, %v127
    %v4202 = vmul.f32 %v4187, %v131
    %v4203 = vmul.f32 %v4187, %v135
    %v4204 = vmul.f32 %v4187, %v139
    %4221 = vrot.lane.b32.xlu0 %v4189, 127
    %v4222 = vpop.permute.xlu0 %4221
    %4223 = vrot.lane.b32.xlu0 %v4190, 127
    %v4224 = vpop.permute.xlu0 %4223
    %4225 = vrot.lane.b32.xlu0 %v4191, 127
    %v4226 = vpop.permute.xlu0 %4225
    %4227 = vrot.lane.b32.xlu0 %v4192, 127
    %v4228 = vpop.permute.xlu0 %4227
    %4229 = vrot.lane.b32.xlu0 %v4193, 127
    %v4230 = vpop.permute.xlu0 %4229
    %4231 = vrot.lane.b32.xlu0 %v4194, 127
    %v4232 = vpop.permute.xlu0 %4231
    %4233 = vrot.lane.b32.xlu0 %v4195, 127
    %v4234 = vpop.permute.xlu0 %4233
    %4235 = vrot.lane.b32.xlu0 %v4196, 127
    %v4236 = vpop.permute.xlu0 %4235
    %4237 = vrot.lane.b32.xlu0 %v4197, 127
    %v4238 = vpop.permute.xlu0 %4237
    %4239 = vrot.lane.b32.xlu0 %v4198, 127
    %v4240 = vpop.permute.xlu0 %4239
    %4241 = vrot.lane.b32.xlu0 %v4199, 127
    %v4242 = vpop.permute.xlu0 %4241
    %4243 = vrot.lane.b32.xlu0 %v4200, 127
    %v4244 = vpop.permute.xlu0 %4243
    %4245 = vrot.lane.b32.xlu0 %v4201, 127
    %v4246 = vpop.permute.xlu0 %4245
    %4247 = vrot.lane.b32.xlu0 %v4202, 127
    %v4248 = vpop.permute.xlu0 %4247
    %4249 = vrot.lane.b32.xlu0 %v4203, 127
    %v4250 = vpop.permute.xlu0 %4249
    %4251 = vrot.lane.b32.xlu0 %v4204, 127
    %v4252 = vpop.permute.xlu0 %4251
    %v4253 = vsel %vm240, %v4222, %v4224
    %v4254 = vsel %vm240, %v4224, %v4226
    %v4255 = vsel %vm240, %v4226, %v4228
    %v4256 = vsel %vm240, %v4228, %v4230
    %v4257 = vsel %vm240, %v4230, %v4232
    %v4258 = vsel %vm240, %v4232, %v4234
    %v4259 = vsel %vm240, %v4234, %v4236
    %v4260 = vsel %vm240, %v4238, %v4240
    %v4261 = vsel %vm240, %v4240, %v4242
    %v4262 = vsel %vm240, %v4242, %v4244
    %v4263 = vsel %vm240, %v4244, %v4246
    %v4264 = vsel %vm240, %v4246, %v4248
    %v4265 = vsel %vm240, %v4248, %v4250
    %v4266 = vsel %vm240, %v4250, %v4252
    %v4283 = vadd.f32 %v4169, %v4253
    %v4284 = vadd.f32 %v4170, %v4254
    %v4285 = vadd.f32 %v4171, %v4255
    %v4286 = vadd.f32 %v4172, %v4256
    %v4287 = vadd.f32 %v4173, %v4257
    %v4288 = vadd.f32 %v4174, %v4258
    %v4289 = vadd.f32 %v4175, %v4259
    %v4290 = vadd.f32 %v4176, %v4236
    %v4291 = vadd.f32 %v4177, %v4260
    %v4292 = vadd.f32 %v4178, %v4261
    %v4293 = vadd.f32 %v4179, %v4262
    %v4294 = vadd.f32 %v4180, %v4263
    %v4295 = vadd.f32 %v4181, %v4264
    %v4296 = vadd.f32 %v4182, %v4265
    %v4297 = vadd.f32 %v4183, %v4266
    %v4298 = vadd.f32 %v4184, %v4252
    %4299 = vset.pattern.permute.xlu0 2
    %4300 = vperm.xlu0 %4299, %v44
    %v4301 = vpop.permute.xlu0 %4300
    %v4303 = vmul.f32 %v4301, %v79
    %v4304 = vmul.f32 %v4301, %v83
    %v4305 = vmul.f32 %v4301, %v87
    %v4306 = vmul.f32 %v4301, %v91
    %v4307 = vmul.f32 %v4301, %v95
    %v4308 = vmul.f32 %v4301, %v99
    %v4309 = vmul.f32 %v4301, %v103
    %v4310 = vmul.f32 %v4301, %v107
    %v4311 = vmul.f32 %v4301, %v111
    %v4312 = vmul.f32 %v4301, %v115
    %v4313 = vmul.f32 %v4301, %v119
    %v4314 = vmul.f32 %v4301, %v123
    %v4315 = vmul.f32 %v4301, %v127
    %v4316 = vmul.f32 %v4301, %v131
    %v4317 = vmul.f32 %v4301, %v135
    %v4318 = vmul.f32 %v4301, %v139
    %4335 = vrot.lane.b32.xlu0 %v4303, 126
    %v4336 = vpop.permute.xlu0 %4335
    %4337 = vrot.lane.b32.xlu0 %v4304, 126
    %v4338 = vpop.permute.xlu0 %4337
    %4339 = vrot.lane.b32.xlu0 %v4305, 126
    %v4340 = vpop.permute.xlu0 %4339
    %4341 = vrot.lane.b32.xlu0 %v4306, 126
    %v4342 = vpop.permute.xlu0 %4341
    %4343 = vrot.lane.b32.xlu0 %v4307, 126
    %v4344 = vpop.permute.xlu0 %4343
    %4345 = vrot.lane.b32.xlu0 %v4308, 126
    %v4346 = vpop.permute.xlu0 %4345
    %4347 = vrot.lane.b32.xlu0 %v4309, 126
    %v4348 = vpop.permute.xlu0 %4347
    %4349 = vrot.lane.b32.xlu0 %v4310, 126
    %v4350 = vpop.permute.xlu0 %4349
    %4351 = vrot.lane.b32.xlu0 %v4311, 126
    %v4352 = vpop.permute.xlu0 %4351
    %4353 = vrot.lane.b32.xlu0 %v4312, 126
    %v4354 = vpop.permute.xlu0 %4353
    %4355 = vrot.lane.b32.xlu0 %v4313, 126
    %v4356 = vpop.permute.xlu0 %4355
    %4357 = vrot.lane.b32.xlu0 %v4314, 126
    %v4358 = vpop.permute.xlu0 %4357
    %4359 = vrot.lane.b32.xlu0 %v4315, 126
    %v4360 = vpop.permute.xlu0 %4359
    %4361 = vrot.lane.b32.xlu0 %v4316, 126
    %v4362 = vpop.permute.xlu0 %4361
    %4363 = vrot.lane.b32.xlu0 %v4317, 126
    %v4364 = vpop.permute.xlu0 %4363
    %4365 = vrot.lane.b32.xlu0 %v4318, 126
    %v4366 = vpop.permute.xlu0 %4365
    %v4367 = vsel %vm355, %v4336, %v4338
    %v4368 = vsel %vm355, %v4338, %v4340
    %v4369 = vsel %vm355, %v4340, %v4342
    %v4370 = vsel %vm355, %v4342, %v4344
    %v4371 = vsel %vm355, %v4344, %v4346
    %v4372 = vsel %vm355, %v4346, %v4348
    %v4373 = vsel %vm355, %v4348, %v4350
    %v4374 = vsel %vm355, %v4352, %v4354
    %v4375 = vsel %vm355, %v4354, %v4356
    %v4376 = vsel %vm355, %v4356, %v4358
    %v4377 = vsel %vm355, %v4358, %v4360
    %v4378 = vsel %vm355, %v4360, %v4362
    %v4379 = vsel %vm355, %v4362, %v4364
    %v4380 = vsel %vm355, %v4364, %v4366
    %v4397 = vadd.f32 %v4283, %v4367
    %v4398 = vadd.f32 %v4284, %v4368
    %v4399 = vadd.f32 %v4285, %v4369
    %v4400 = vadd.f32 %v4286, %v4370
    %v4401 = vadd.f32 %v4287, %v4371
    %v4402 = vadd.f32 %v4288, %v4372
    %v4403 = vadd.f32 %v4289, %v4373
    %v4404 = vadd.f32 %v4290, %v4350
    %v4405 = vadd.f32 %v4291, %v4374
    %v4406 = vadd.f32 %v4292, %v4375
    %v4407 = vadd.f32 %v4293, %v4376
    %v4408 = vadd.f32 %v4294, %v4377
    %v4409 = vadd.f32 %v4295, %v4378
    %v4410 = vadd.f32 %v4296, %v4379
    %v4411 = vadd.f32 %v4297, %v4380
    %v4412 = vadd.f32 %v4298, %v4366
    %4429 = vrot.lane.b32.xlu0 %v4397, 127
    %v4430 = vpop.permute.xlu0 %4429
    %4431 = vrot.lane.b32.xlu0 %v4398, 127
    %v4432 = vpop.permute.xlu0 %4431
    %4433 = vrot.lane.b32.xlu0 %v4399, 127
    %v4434 = vpop.permute.xlu0 %4433
    %4435 = vrot.lane.b32.xlu0 %v4400, 127
    %v4436 = vpop.permute.xlu0 %4435
    %4437 = vrot.lane.b32.xlu0 %v4401, 127
    %v4438 = vpop.permute.xlu0 %4437
    %4439 = vrot.lane.b32.xlu0 %v4402, 127
    %v4440 = vpop.permute.xlu0 %4439
    %4441 = vrot.lane.b32.xlu0 %v4403, 127
    %v4442 = vpop.permute.xlu0 %4441
    %4443 = vrot.lane.b32.xlu0 %v4404, 127
    %v4444 = vpop.permute.xlu0 %4443
    %4445 = vrot.lane.b32.xlu0 %v4405, 127
    %v4446 = vpop.permute.xlu0 %4445
    %4447 = vrot.lane.b32.xlu0 %v4406, 127
    %v4448 = vpop.permute.xlu0 %4447
    %4449 = vrot.lane.b32.xlu0 %v4407, 127
    %v4450 = vpop.permute.xlu0 %4449
    %4451 = vrot.lane.b32.xlu0 %v4408, 127
    %v4452 = vpop.permute.xlu0 %4451
    %4453 = vrot.lane.b32.xlu0 %v4409, 127
    %v4454 = vpop.permute.xlu0 %4453
    %4455 = vrot.lane.b32.xlu0 %v4410, 127
    %v4456 = vpop.permute.xlu0 %4455
    %4457 = vrot.lane.b32.xlu0 %v4411, 127
    %v4458 = vpop.permute.xlu0 %4457
    %4459 = vrot.lane.b32.xlu0 %v4412, 127
    %v4460 = vpop.permute.xlu0 %4459
    %v4461 = vsel %vm240, %v4430, %v4432
    %v4462 = vsel %vm240, %v4432, %v4434
    %v4463 = vsel %vm240, %v4434, %v4436
    %v4464 = vsel %vm240, %v4436, %v4438
    %v4465 = vsel %vm240, %v4438, %v4440
    %v4466 = vsel %vm240, %v4440, %v4442
    %v4467 = vsel %vm240, %v4442, %v4444
    %v4468 = vsel %vm240, %v4446, %v4448
    %v4469 = vsel %vm240, %v4448, %v4450
    %v4470 = vsel %vm240, %v4450, %v4452
    %v4471 = vsel %vm240, %v4452, %v4454
    %v4472 = vsel %vm240, %v4454, %v4456
    %v4473 = vsel %vm240, %v4456, %v4458
    %v4474 = vsel %vm240, %v4458, %v4460
    %v4491 = vmax.f32 %v4397, %v4461
    %v4492 = vmax.f32 %v4398, %v4462
    %v4493 = vmax.f32 %v4399, %v4463
    %v4494 = vmax.f32 %v4400, %v4464
    %v4495 = vmax.f32 %v4401, %v4465
    %v4496 = vmax.f32 %v4402, %v4466
    %v4497 = vmax.f32 %v4403, %v4467
    %v4498 = vmax.f32 %v4404, %v4444
    %v4499 = vmax.f32 %v4405, %v4468
    %v4500 = vmax.f32 %v4406, %v4469
    %v4501 = vmax.f32 %v4407, %v4470
    %v4502 = vmax.f32 %v4408, %v4471
    %v4503 = vmax.f32 %v4409, %v4472
    %v4504 = vmax.f32 %v4410, %v4473
    %v4505 = vmax.f32 %v4411, %v4474
    %v4506 = vmax.f32 %v4412, %v4460
    %4508 = vset.pattern.permute.xlu0 0
    %4509 = vperm.xlu0 %4508, %v52
    %v4510 = vpop.permute.xlu0 %4509
    %v4512 = vadd.f32 %v4491, %v4510
    %v4513 = vadd.f32 %v4492, %v4510
    %v4514 = vadd.f32 %v4493, %v4510
    %v4515 = vadd.f32 %v4494, %v4510
    %v4516 = vadd.f32 %v4495, %v4510
    %v4517 = vadd.f32 %v4496, %v4510
    %v4518 = vadd.f32 %v4497, %v4510
    %v4519 = vadd.f32 %v4498, %v4510
    %v4520 = vadd.f32 %v4499, %v4510
    %v4521 = vadd.f32 %v4500, %v4510
    %v4522 = vadd.f32 %v4501, %v4510
    %v4523 = vadd.f32 %v4502, %v4510
    %v4524 = vadd.f32 %v4503, %v4510
    %v4525 = vadd.f32 %v4504, %v4510
    %v4526 = vadd.f32 %v4505, %v4510
    %v4527 = vadd.f32 %v4506, %v4510
    %v4528 = vmax.f32 %v4512, 0.0
    %v4529 = vmax.f32 %v4513, 0.0
    %v4530 = vmax.f32 %v4514, 0.0
    %v4531 = vmax.f32 %v4515, 0.0
    %v4532 = vmax.f32 %v4516, 0.0
    %v4533 = vmax.f32 %v4517, 0.0
    %v4534 = vmax.f32 %v4518, 0.0
    %v4535 = vmax.f32 %v4519, 0.0
    %v4536 = vmax.f32 %v4520, 0.0
    %v4537 = vmax.f32 %v4521, 0.0
    %v4538 = vmax.f32 %v4522, 0.0
    %v4539 = vmax.f32 %v4523, 0.0
    %v4540 = vmax.f32 %v4524, 0.0
    %v4541 = vmax.f32 %v4525, 0.0
    %v4542 = vmax.f32 %v4526, 0.0
    %v4543 = vmax.f32 %v4527, 0.0
    %v4544 = vld [vmem:[#allocation2 + $0xe0] sm:$0xff]
    %v4545 = vld [vmem:[#allocation2 + $0xe8] sm:$0xff]
    %v4546 = vld [vmem:[#allocation2 + $0xf0] sm:$0xff]
    %v4547 = vld [vmem:[#allocation2 + $0xf8] sm:$0xff]
    %v4548 = vunpack.c.l.bf16 %v4544
    %v4549 = vunpack.c.h.bf16 %v4544
    %v4550 = vunpack.c.l.bf16 %v4545
    %v4551 = vunpack.c.h.bf16 %v4545
    %v4552 = vunpack.c.l.bf16 %v4546
    %v4553 = vunpack.c.h.bf16 %v4546
    %v4554 = vunpack.c.l.bf16 %v4547
    %v4555 = vunpack.c.h.bf16 %v4547
    %v4556 = vmul.f32 %v4528, %v4548
    %v4557 = vmul.f32 %v4529, %v4549
    %v4558 = vmul.f32 %v4530, %v4550
    %v4559 = vmul.f32 %v4531, %v4551
    %v4560 = vmul.f32 %v4532, %v4552
    %v4561 = vmul.f32 %v4533, %v4553
    %v4562 = vmul.f32 %v4534, %v4554
    %v4563 = vmul.f32 %v4535, %v4555
    %v4564 = vmul.f32 %v4536, %v4548
    %v4565 = vmul.f32 %v4537, %v4549
    %v4566 = vmul.f32 %v4538, %v4550
    %v4567 = vmul.f32 %v4539, %v4551
    %v4568 = vmul.f32 %v4540, %v4552
    %v4569 = vmul.f32 %v4541, %v4553
    %v4570 = vmul.f32 %v4542, %v4554
    %v4571 = vmul.f32 %v4543, %v4555
    %v4572 = vadd.f32 %v4556, %v4557
    %v4573 = vadd.f32 %v4572, %v4558
    %v4574 = vadd.f32 %v4573, %v4559
    %v4575 = vadd.f32 %v4574, %v4560
    %v4576 = vadd.f32 %v4575, %v4561
    %v4577 = vadd.f32 %v4576, %v4562
    %v4578 = vsel %vm567, %v4563, 0.0
    %v4579 = vadd.f32 %v4577, %v4578
    %4580 = vadd.xlane.f32.xlu0 %v4579
    %v4581 = vpop.xlane.xlu0 %4580
    %v4582 = vadd.f32 %v4564, %v4565
    %v4583 = vadd.f32 %v4582, %v4566
    %v4584 = vadd.f32 %v4583, %v4567
    %v4585 = vadd.f32 %v4584, %v4568
    %v4586 = vadd.f32 %v4585, %v4569
    %v4587 = vadd.f32 %v4586, %v4570
    %v4588 = vsel %vm567, %v4571, 0.0
    %v4589 = vadd.f32 %v4587, %v4588
    %4590 = vadd.xlane.f32.xlu0 %v4589
    %v4591 = vpop.xlane.xlu0 %4590
    %v4594 = vlaneseq
    %v4595 = vshrl.u32 %v4594, 7
    %v4596 = vsub.s32 %v585, %v4595
    %v4597 = vrot.slane %v4581, %v4596
    %v4598 = vlaneseq
    %v4599 = vshrl.u32 %v4598, 7
    %v4600 = vsub.s32 %v585, %v4599
    %v4601 = vrot.slane %v4591, %v4600
    %v4602 = vsel %vm594, %v4601, %v4597
    %v4604 = vsel %vm597, %v4602, 0.0
    %4605 = vadd.xlane.f32.xlu0 %v4604
    %v4606 = vpop.xlane.xlu0 %4605
    %v4607 = vadd.f32 %v4035, %v4606
    %v4608 = vld [vmem:[%s602 + $0xe0] sm:$0xff]
    %v4609 = vld [vmem:[%s602 + $0xe8] sm:$0xff]
    %v4610 = vld [vmem:[%s602 + $0xf0] sm:$0xff]
    %v4611 = vld [vmem:[%s602 + $0xf8] sm:$0xff]
    %v4612 = vunpack.c.l.bf16 %v4608
    %v4613 = vunpack.c.h.bf16 %v4608
    %v4614 = vunpack.c.l.bf16 %v4609
    %v4615 = vunpack.c.h.bf16 %v4609
    %v4616 = vunpack.c.l.bf16 %v4610
    %v4617 = vunpack.c.h.bf16 %v4610
    %v4618 = vunpack.c.l.bf16 %v4611
    %v4619 = vunpack.c.h.bf16 %v4611
    %v4620 = vmul.f32 %v4528, %v4612
    %v4621 = vmul.f32 %v4529, %v4613
    %v4622 = vmul.f32 %v4530, %v4614
    %v4623 = vmul.f32 %v4531, %v4615
    %v4624 = vmul.f32 %v4532, %v4616
    %v4625 = vmul.f32 %v4533, %v4617
    %v4626 = vmul.f32 %v4534, %v4618
    %v4627 = vmul.f32 %v4535, %v4619
    %v4628 = vmul.f32 %v4536, %v4612
    %v4629 = vmul.f32 %v4537, %v4613
    %v4630 = vmul.f32 %v4538, %v4614
    %v4631 = vmul.f32 %v4539, %v4615
    %v4632 = vmul.f32 %v4540, %v4616
    %v4633 = vmul.f32 %v4541, %v4617
    %v4634 = vmul.f32 %v4542, %v4618
    %v4635 = vmul.f32 %v4543, %v4619
    %v4636 = vadd.f32 %v4620, %v4621
    %v4637 = vadd.f32 %v4636, %v4622
    %v4638 = vadd.f32 %v4637, %v4623
    %v4639 = vadd.f32 %v4638, %v4624
    %v4640 = vadd.f32 %v4639, %v4625
    %v4641 = vadd.f32 %v4640, %v4626
    %v4642 = vsel %vm567, %v4627, 0.0
    %v4643 = vadd.f32 %v4641, %v4642
    %4644 = vadd.xlane.f32.xlu0 %v4643
    %v4645 = vpop.xlane.xlu0 %4644
    %v4646 = vadd.f32 %v4628, %v4629
    %v4647 = vadd.f32 %v4646, %v4630
    %v4648 = vadd.f32 %v4647, %v4631
    %v4649 = vadd.f32 %v4648, %v4632
    %v4650 = vadd.f32 %v4649, %v4633
    %v4651 = vadd.f32 %v4650, %v4634
    %v4652 = vsel %vm567, %v4635, 0.0
    %v4653 = vadd.f32 %v4651, %v4652
    %4654 = vadd.xlane.f32.xlu0 %v4653
    %v4655 = vpop.xlane.xlu0 %4654
    %v4658 = vlaneseq
    %v4659 = vshrl.u32 %v4658, 7
    %v4660 = vsub.s32 %v585, %v4659
    %v4661 = vrot.slane %v4645, %v4660
    %v4662 = vlaneseq
    %v4663 = vshrl.u32 %v4662, 7
    %v4664 = vsub.s32 %v585, %v4663
    %v4665 = vrot.slane %v4655, %v4664
    %v4666 = vsel %vm594, %v4665, %v4661
    %v4668 = vsel %vm597, %v4666, 0.0
    %4669 = vadd.xlane.f32.xlu0 %v4668
    %v4670 = vpop.xlane.xlu0 %4669
    %v4671 = vadd.f32 %v4099, %v4670
    %v4672 = vld [vmem:[%s667 + $0xe0] sm:$0xff]
    %v4673 = vld [vmem:[%s667 + $0xe8] sm:$0xff]
    %v4674 = vld [vmem:[%s667 + $0xf0] sm:$0xff]
    %v4675 = vld [vmem:[%s667 + $0xf8] sm:$0xff]
    %v4676 = vunpack.c.l.bf16 %v4672
    %v4677 = vunpack.c.h.bf16 %v4672
    %v4678 = vunpack.c.l.bf16 %v4673
    %v4679 = vunpack.c.h.bf16 %v4673
    %v4680 = vunpack.c.l.bf16 %v4674
    %v4681 = vunpack.c.h.bf16 %v4674
    %v4682 = vunpack.c.l.bf16 %v4675
    %v4683 = vunpack.c.h.bf16 %v4675
    %v4684 = vmul.f32 %v4528, %v4676
    %v4685 = vmul.f32 %v4529, %v4677
    %v4686 = vmul.f32 %v4530, %v4678
    %v4687 = vmul.f32 %v4531, %v4679
    %v4688 = vmul.f32 %v4532, %v4680
    %v4689 = vmul.f32 %v4533, %v4681
    %v4690 = vmul.f32 %v4534, %v4682
    %v4691 = vmul.f32 %v4535, %v4683
    %v4692 = vmul.f32 %v4536, %v4676
    %v4693 = vmul.f32 %v4537, %v4677
    %v4694 = vmul.f32 %v4538, %v4678
    %v4695 = vmul.f32 %v4539, %v4679
    %v4696 = vmul.f32 %v4540, %v4680
    %v4697 = vmul.f32 %v4541, %v4681
    %v4698 = vmul.f32 %v4542, %v4682
    %v4699 = vmul.f32 %v4543, %v4683
    %v4700 = vadd.f32 %v4684, %v4685
    %v4701 = vadd.f32 %v4700, %v4686
    %v4702 = vadd.f32 %v4701, %v4687
    %v4703 = vadd.f32 %v4702, %v4688
    %v4704 = vadd.f32 %v4703, %v4689
    %v4705 = vadd.f32 %v4704, %v4690
    %v4706 = vsel %vm567, %v4691, 0.0
    %v4707 = vadd.f32 %v4705, %v4706
    %4708 = vadd.xlane.f32.xlu0 %v4707
    %v4709 = vpop.xlane.xlu0 %4708
    %v4710 = vadd.f32 %v4692, %v4693
    %v4711 = vadd.f32 %v4710, %v4694
    %v4712 = vadd.f32 %v4711, %v4695
    %v4713 = vadd.f32 %v4712, %v4696
    %v4714 = vadd.f32 %v4713, %v4697
    %v4715 = vadd.f32 %v4714, %v4698
    %v4716 = vsel %vm567, %v4699, 0.0
    %v4717 = vadd.f32 %v4715, %v4716
    %4718 = vadd.xlane.f32.xlu0 %v4717
    %v4719 = vpop.xlane.xlu0 %4718
    %v4722 = vlaneseq
    %v4723 = vshrl.u32 %v4722, 7
    %v4724 = vsub.s32 %v585, %v4723
    %v4725 = vrot.slane %v4709, %v4724
    %v4726 = vlaneseq
    %v4727 = vshrl.u32 %v4726, 7
    %v4728 = vsub.s32 %v585, %v4727
    %v4729 = vrot.slane %v4719, %v4728
    %v4730 = vsel %vm594, %v4729, %v4725
    %v4732 = vsel %vm597, %v4730, 0.0
    %4733 = vadd.xlane.f32.xlu0 %v4732
    %v4734 = vpop.xlane.xlu0 %4733
    %v4735 = vadd.f32 %v4163, %v4734
    %vm4736 = vcmask 7168
    %v4737 = vsel %vm4736, %v4607, %v4671
    %vm4738 = vcmask 15360
    %v4739 = vsel %vm4738, %v4737, %v4735
    %v4740 = vld [vmem:[%s4] sm:$0x1]
    %v4742 = vlaneseq
    %v4743 = vshrl.u32 %v4742, 7
    %v4744 = vsub.s32 0, %v4743
    %v4745 = vrot.slane %v4740, %v4744
    %v4747 = vadd.f32 %v4739, %v4745
    %vm4748 = vcmask 17408
    %4749 = vst.msk [vmem:[#allocation5] sm:$0x3] %vm4748, %v4747
    // Predicated region
    $region26: #{simple_cnn_forward.1} parent=1 // pred_check
      _
    $region27: #{simple_cnn_forward.1} parent=1 // pred_check_branch
      %4751 = sbr.rel (0) target = $region29
    $region28: #{simple_cnn_forward.1} parent=1 // pred_region
      %s4753 = ssub.s32 32, 32
      %4754 = vsyncadd [#allocation4], %s4753
      %s4756 = sshll.u32 [#allocation5], 4
      %s4757 = int_to_ptr.vmem [resolvable:$true] %s4756
      %4759 = dma.vmem_to_hbm [thread:$0]  %s4757, 32, %s5, [#allocation4]
    $region29: #{simple_cnn_forward.1} parent=1 // pred_fallthru
      _
    // Predicated region
    $region30: #{simple_cnn_forward.1} parent=1 // pred_check
      _
    $region31: #{simple_cnn_forward.1} parent=1 // pred_check_branch
      %4761 = sbr.rel (0) target = $region33
    $region32: #{simple_cnn_forward.1} parent=1 // pred_region
      %4762 = dma.done [#allocation4], 32
    $region33: #{simple_cnn_forward.1} parent=1 // pred_fallthru
      _
    %4763 = vsyncpa [#allocation3], 1
    %4764 = vsyncpa [#allocation4], 1

</llo_original>
